<compile_context>
chip_gen: v7x
topology: tpu7x:2x2x1
jax: 0.10.0
libtpu: 0.0.40
codegen_flags: <defaults>
</compile_context>

<pallas_src>
import jax
import jax.numpy as jnp
import numpy as np
from jax import lax
from jax.experimental import pallas as pl
from jax.experimental.pallas import tpu as pltpu


def _encoder_bigru_kernel(ids_ref,    # (T,)        int32, SMEM (scalar prefetch)
                          emb_hbm,    # (V, E)      f32 embedding table (HBM / ANY)
                          h0_ref,     # (2, 1, H)   f32 initial hidden per direction
                          wih_ref,    # (E, 6H)     cols: [f_r b_r f_z b_z f_n b_n]
                          whh_ref,    # (3, 2H, 2H) block-diag per gate (r, z, n)
                          bi_ref,     # (1, 6H)     bih (+ bhh folded in for r,z)
                          bhhn_ref,   # (1, 2H)     bhh for the n gate [fwd | bwd]
                          out_ref,    # (1, T, 2H)  output trajectory
                          hn_ref,     # (2, 1, H)   final hidden per direction
                          x_vmem,     # scratch (T, E) gathered embeddings
                          dma_sem):   # DMA sems (T,)
    T = out_ref.shape[1]
    H = hn_ref.shape[-1]

    # ---- prologue: DMA-gather the T embedding rows (all copies in flight) ---
    def row_copy(t):
        return pltpu.make_async_copy(
            emb_hbm.at[pl.ds(ids_ref[t], 1), :],
            x_vmem.at[pl.ds(t, 1), :],
            dma_sem.at[t])

    for t in range(T):
        row_copy(t).start()
    for t in range(T):
        row_copy(t).wait()

    x = x_vmem[...]                                            # (T, E)

    # ---- hoisted input projection: single (T,E)x(E,6H) matmul ---------------
    gi = jnp.dot(x, wih_ref[...],
                 preferred_element_type=jnp.float32) + bi_ref[...]   # (T, 6H)

    whh_r = whh_ref[0]        # (2H, 2H) block-diagonal [fwd | bwd]
    whh_z = whh_ref[1]
    whh_n = whh_ref[2]
    bhh_n = bhhn_ref[...]     # (1, 2H)

    # Concatenated-lane state: [h_fwd | h_bwd].
    h = jnp.concatenate([h0_ref[0], h0_ref[1]], axis=-1)       # (1, 2H)

    states = []
    # Fully unrolled (T static, small).  Forward processes time t, backward
    # processes time T-1-t; both share the same fused step.
    for t in range(T):
        tb = T - 1 - t
        # gi slices are static-index / off the serial dependency chain.
        gi_r = jnp.concatenate([gi[t:t + 1, 0:H],
                                gi[tb:tb + 1, H:2 * H]], axis=-1)
        gi_z = jnp.concatenate([gi[t:t + 1, 2 * H:3 * H],
                                gi[tb:tb + 1, 3 * H:4 * H]], axis=-1)
        gi_n = jnp.concatenate([gi[t:t + 1, 4 * H:5 * H],
                                gi[tb:tb + 1, 5 * H:6 * H]], axis=-1)

        # Only these 3 fused dots remain on the serial chain.
        gh_r = jnp.dot(h, whh_r, preferred_element_type=jnp.float32)
        gh_z = jnp.dot(h, whh_z, preferred_element_type=jnp.float32)
        gh_n = jnp.dot(h, whh_n, preferred_element_type=jnp.float32) + bhh_n

        r = jax.nn.sigmoid(gi_r + gh_r)
        z = jax.nn.sigmoid(gi_z + gh_z)
        n = jnp.tanh(gi_n + r * gh_n)
        h = (1.0 - z) * n + z * h
        states.append(h)

    # Assemble time-ordered output rows: fwd half at step t, bwd half at step
    # T-1-t (already sitting in lanes H:2H -> pure lane select, no roll).
    rows = [jnp.concatenate([states[t][:, :H], states[T - 1 - t][:, H:]],
                            axis=-1) for t in range(T)]
    out_ref[0] = jnp.concatenate(rows, axis=0)                  # (T, 2H)
    hn_ref[0] = states[-1][:, :H]
    hn_ref[1] = states[-1][:, H:]


def encoder_forward(token_ids, hidden, embedding_table, packed):
    """Mirrors Encoder.forward: embedding lookup -> unsqueeze(0) -> biGRU.

    token_ids: (T,) int32; hidden: (2, 1, H) f32.
    Returns (output (1, T, 2H), hidden (2, 1, H))."""
    T = token_ids.shape[0]
    V, E = embedding_table.shape
    H = hidden.shape[-1]

    # Clamp ids: OOB reads from HBM/VMEM are silent, so guard in the wrapper.
    ids = jnp.clip(token_ids.astype(jnp.int32), 0, V - 1)

    out, hn = pl.pallas_call(
        _encoder_bigru_kernel,
        out_shape=(jax.ShapeDtypeStruct((1, T, 2 * H), jnp.float32),
                   jax.ShapeDtypeStruct((2, 1, H), jnp.float32)),
        grid_spec=pltpu.PrefetchScalarGridSpec(
            num_scalar_prefetch=1,          # token ids -> SMEM
            grid=(1,),
            in_specs=[
                pl.BlockSpec(memory_space=pl.ANY),                       # emb table (HBM)
                pl.BlockSpec((2, 1, H), lambda i, ids: (0, 0, 0)),       # h0
                pl.BlockSpec((E, 6 * H), lambda i, ids: (0, 0)),         # W_ih fused
                pl.BlockSpec((3, 2 * H, 2 * H),
                             lambda i, ids: (0, 0, 0)),                  # W_hh block-diag
                pl.BlockSpec((1, 6 * H), lambda i, ids: (0, 0)),         # fused bias
                pl.BlockSpec((1, 2 * H), lambda i, ids: (0, 0)),         # bhh_n
            ],
            out_specs=[
                pl.BlockSpec((1, T, 2 * H), lambda i, ids: (0, 0, 0)),
                pl.BlockSpec((2, 1, H), lambda i, ids: (0, 0, 0)),
            ],
            scratch_shapes=[
                pltpu.VMEM((T, E), jnp.float32),        # gathered embeddings
                pltpu.SemaphoreType.DMA((T,)),          # one sem per row DMA
            ],
        ),
        compiler_params=pltpu.CompilerParams(
            dimension_semantics=("arbitrary",)),
    )(ids, embedding_table, hidden,
      packed["wih"], packed["whh"], packed["bi"], packed["bhh_n"])
    return out, hn


def pack_encoder_params(weight_ih, weight_hh, bias_ih, bias_hh):
    """torch.nn.GRU layout -> fused kernel layout.

    weight_ih: (2, 3H, E); weight_hh: (2, 3H, H); bias_*: (2, 3H).
    Gate order along the 3H axis is [r, z, n] (torch convention).

    Returns:
      wih   (E, 6H)     columns [f_r b_r f_z b_z f_n b_n]
      whh   (3, 2H, 2H) per-gate block-diagonal [[Wf^T, 0], [0, Wb^T]]
      bi    (1, 6H)     bih (+ bhh folded in for r and z gates)
      bhh_n (1, 2H)     bhh for the n gate [fwd | bwd]
    """
    H = weight_hh.shape[-1]

    def gate_T(w, d, g):                      # (K, H): block transposed
        return w[d, g * H:(g + 1) * H, :].T

    wih_cat = jnp.concatenate(
        [gate_T(weight_ih, d, g) for g in range(3) for d in range(2)], axis=-1)

    def b_block(g, d):
        b = bias_ih[d, g * H:(g + 1) * H]
        if g < 2:                             # fold bhh into r, z biases
            b = b + bias_hh[d, g * H:(g + 1) * H]
        return b
    bi_cat = jnp.concatenate(
        [b_block(g, d) for g in range(3) for d in range(2)])[None, :]

    def block_diag(g):
        wf = gate_T(weight_hh, 0, g)
        wb = gate_T(weight_hh, 1, g)
        zz = jnp.zeros((H, H), weight_hh.dtype)
        return jnp.concatenate([jnp.concatenate([wf, zz], axis=1),
                                jnp.concatenate([zz, wb], axis=1)], axis=0)
    whh_bd = jnp.stack([block_diag(g) for g in range(3)])

    bhh_n = jnp.concatenate([bias_hh[0, 2 * H:3 * H],
                             bias_hh[1, 2 * H:3 * H]])[None, :]

    return {"wih": wih_cat, "whh": whh_bd, "bi": bi_cat, "bhh_n": bhh_n}


def _reference_forward(token_ids, hidden, embedding_table, torch_params):
    """Pure-JAX reference implementing torch.nn.GRU(bidirectional) semantics,
    consuming the original torch-style parameter layout."""
    x = jnp.take(embedding_table, token_ids, axis=0)
    H = hidden.shape[-1]

    def run_dir(d, xs):
        wih = torch_params["weight_ih"][d]   # (3H, E)
        whh = torch_params["weight_hh"][d]   # (3H, H)
        bih = torch_params["bias_ih"][d]     # (3H,)
        bhh = torch_params["bias_hh"][d]     # (3H,)

        def cell(h, x_t):
            gi = wih @ x_t + bih
            gh = whh @ h + bhh
            r = jax.nn.sigmoid(gi[0:H] + gh[0:H])
            z = jax.nn.sigmoid(gi[H:2 * H] + gh[H:2 * H])
            n = jnp.tanh(gi[2 * H:] + r * gh[2 * H:])
            h_new = (1 - z) * n + z * h
            return h_new, h_new

        h_last, outs = lax.scan(cell, hidden[d, 0], xs)
        return h_last, outs

    hf, of = run_dir(0, x)
    hb, ob = run_dir(1, x[::-1])
    ob = ob[::-1]
    output = jnp.concatenate([of, ob], axis=-1)[None]
    hn = jnp.stack([hf, hb])[:, None, :]
    return output, hn


if __name__ == "__main__":
    # Small shapes implied by Encoder: input_embedding_size=E,
    # hidden_unit_size=H, batch=1 (forward does unsqueeze(0)), seq=T tokens.
    VOCAB, E, H, T = 50, 32, 32, 8

    key = jax.random.PRNGKey(0)
    k_emb, k_tok, k1, k2, k3, k4 = jax.random.split(key, 6)

    embedding_table = jax.random.normal(k_emb, (VOCAB, E), jnp.float32) * 0.1
    token_ids = jax.random.randint(k_tok, (T,), 0, VOCAB, dtype=jnp.int32)

    # torch.nn.GRU-style parameters (gate order r, z, n along the 3H axis).
    scale = 1.0 / np.sqrt(H)
    torch_params = {
        "weight_ih": jax.random.uniform(k1, (2, 3 * H, E), jnp.float32, -scale, scale),
        "weight_hh": jax.random.uniform(k2, (2, 3 * H, H), jnp.float32, -scale, scale),
        "bias_ih": jax.random.uniform(k3, (2, 3 * H), jnp.float32, -scale, scale),
        "bias_hh": jax.random.uniform(k4, (2, 3 * H), jnp.float32, -scale, scale),
    }
    packed = pack_encoder_params(**torch_params)

    # initHidden(): zeros of shape (2, 1, H)
    hidden0 = jnp.zeros((2, 1, H), dtype=jnp.float32)

    output, hidden = jax.jit(encoder_forward)(
        token_ids, hidden0, embedding_table, packed)
    jax.block_until_ready((output, hidden))

    ref_out, ref_hidden = _reference_forward(
        token_ids, hidden0, embedding_table, torch_params)

    np.testing.assert_allclose(np.asarray(output), np.asarray(ref_out),
                               rtol=1e-4, atol=1e-5)
    np.testing.assert_allclose(np.asarray(hidden), np.asarray(ref_hidden),
                               rtol=1e-4, atol=1e-5)

    assert output.shape == (1, T, 2 * H)
    assert hidden.shape == (2, 1, H)
    print("KERNEL_OK")
</pallas_src>

<mosaic_0001>
module attributes {stable_mosaic.version = 11 : i64} {
  func.func @_encoder_bigru_kernel(%arg0: i32, %arg1: memref<8xi32, #tpu.memory_space<smem>>, %arg2: memref<50x32xf32, #tpu.memory_space<any>>, %arg3: memref<2x1x32xf32, #tpu.memory_space<vmem>>, %arg4: memref<32x192xf32, #tpu.memory_space<vmem>>, %arg5: memref<3x64x64xf32, #tpu.memory_space<vmem>>, %arg6: memref<1x192xf32, #tpu.memory_space<vmem>>, %arg7: memref<1x64xf32, #tpu.memory_space<vmem>>, %arg8: memref<1x8x64xf32, #tpu.memory_space<vmem>>, %arg9: memref<2x1x32xf32, #tpu.memory_space<vmem>>, %arg10: memref<8x32xf32, #tpu.memory_space<vmem>>, %arg11: memref<8x!tpu.dma_semaphore, #tpu.memory_space<semaphore_mem>>) attributes {dimension_semantics = [#tpu.dimension_semantics<arbitrary>], iteration_bounds = array<i64: 1>, scalar_prefetch = 1 : i64, scratch_operands = 2 : i64, tpu.core_type = #tpu.core_type<tc>, window_params = [{}, {pipeline_mode = #tpu.pipeline_mode<synchronous>, transform_indices = @transform_1, window_bounds = array<i64: 2, 1, 32>}, {pipeline_mode = #tpu.pipeline_mode<synchronous>, transform_indices = @transform_2, window_bounds = array<i64: 32, 192>}, {pipeline_mode = #tpu.pipeline_mode<synchronous>, transform_indices = @transform_3, window_bounds = array<i64: 3, 64, 64>}, {pipeline_mode = #tpu.pipeline_mode<synchronous>, transform_indices = @transform_4, window_bounds = array<i64: 1, 192>}, {pipeline_mode = #tpu.pipeline_mode<synchronous>, transform_indices = @transform_5, window_bounds = array<i64: 1, 64>}, {pipeline_mode = #tpu.pipeline_mode<synchronous>, transform_indices = @transform_6, window_bounds = array<i64: 1, 8, 64>}, {pipeline_mode = #tpu.pipeline_mode<synchronous>, transform_indices = @transform_7, window_bounds = array<i64: 2, 1, 32>}]} {
    %c0 = arith.constant 0 : index
    %0 = memref.load %arg1[%c0] : memref<8xi32, #tpu.memory_space<smem>>
    %c0_i32 = arith.constant 0 : i32
    %c0_i32_0 = arith.constant 0 : i32
    %1 = tpu.memref_slice %arg2[%0, %c0_i32_0] : memref<50x32xf32, #tpu.memory_space<any>> -> memref<1x32xf32, #tpu.memory_space<any>>
    %c0_i32_1 = arith.constant 0 : i32
    %c0_i32_2 = arith.constant 0 : i32
    %2 = tpu.memref_slice %arg10[%c0_i32_1, %c0_i32_2] : memref<8x32xf32, #tpu.memory_space<vmem>> -> memref<1x32xf32, #tpu.memory_space<vmem>>
    %3 = tpu.memref_slice %arg11[%c0_i32] : memref<8x!tpu.dma_semaphore, #tpu.memory_space<semaphore_mem>> -> memref<1x!tpu.dma_semaphore, #tpu.memory_space<semaphore_mem>>
    %4 = tpu.memref_squeeze %3 : memref<1x!tpu.dma_semaphore, #tpu.memory_space<semaphore_mem>> -> memref<!tpu.dma_semaphore, #tpu.memory_space<semaphore_mem>>
    tpu.enqueue_dma source(%1 : memref<1x32xf32, #tpu.memory_space<any>>) target(%2 : memref<1x32xf32, #tpu.memory_space<vmem>>) target_semaphore(%4 : memref<!tpu.dma_semaphore, #tpu.memory_space<semaphore_mem>>)
    %c1 = arith.constant 1 : index
    %5 = memref.load %arg1[%c1] : memref<8xi32, #tpu.memory_space<smem>>
    %c1_i32 = arith.constant 1 : i32
    %c0_i32_3 = arith.constant 0 : i32
    %6 = tpu.memref_slice %arg2[%5, %c0_i32_3] : memref<50x32xf32, #tpu.memory_space<any>> -> memref<1x32xf32, #tpu.memory_space<any>>
    %c1_i32_4 = arith.constant 1 : i32
    %c0_i32_5 = arith.constant 0 : i32
    %7 = tpu.memref_slice %arg10[%c1_i32_4, %c0_i32_5] : memref<8x32xf32, #tpu.memory_space<vmem>> -> memref<1x32xf32, #tpu.memory_space<vmem>>
    %8 = tpu.memref_slice %arg11[%c1_i32] : memref<8x!tpu.dma_semaphore, #tpu.memory_space<semaphore_mem>> -> memref<1x!tpu.dma_semaphore, #tpu.memory_space<semaphore_mem>>
    %9 = tpu.memref_squeeze %8 : memref<1x!tpu.dma_semaphore, #tpu.memory_space<semaphore_mem>> -> memref<!tpu.dma_semaphore, #tpu.memory_space<semaphore_mem>>
    tpu.enqueue_dma source(%6 : memref<1x32xf32, #tpu.memory_space<any>>) target(%7 : memref<1x32xf32, #tpu.memory_space<vmem>>) target_semaphore(%9 : memref<!tpu.dma_semaphore, #tpu.memory_space<semaphore_mem>>)
    %c2 = arith.constant 2 : index
    %10 = memref.load %arg1[%c2] : memref<8xi32, #tpu.memory_space<smem>>
    %c2_i32 = arith.constant 2 : i32
    %c0_i32_6 = arith.constant 0 : i32
    %11 = tpu.memref_slice %arg2[%10, %c0_i32_6] : memref<50x32xf32, #tpu.memory_space<any>> -> memref<1x32xf32, #tpu.memory_space<any>>
    %c2_i32_7 = arith.constant 2 : i32
    %c0_i32_8 = arith.constant 0 : i32
    %12 = tpu.memref_slice %arg10[%c2_i32_7, %c0_i32_8] : memref<8x32xf32, #tpu.memory_space<vmem>> -> memref<1x32xf32, #tpu.memory_space<vmem>>
    %13 = tpu.memref_slice %arg11[%c2_i32] : memref<8x!tpu.dma_semaphore, #tpu.memory_space<semaphore_mem>> -> memref<1x!tpu.dma_semaphore, #tpu.memory_space<semaphore_mem>>
    %14 = tpu.memref_squeeze %13 : memref<1x!tpu.dma_semaphore, #tpu.memory_space<semaphore_mem>> -> memref<!tpu.dma_semaphore, #tpu.memory_space<semaphore_mem>>
    tpu.enqueue_dma source(%11 : memref<1x32xf32, #tpu.memory_space<any>>) target(%12 : memref<1x32xf32, #tpu.memory_space<vmem>>) target_semaphore(%14 : memref<!tpu.dma_semaphore, #tpu.memory_space<semaphore_mem>>)
    %c3 = arith.constant 3 : index
    %15 = memref.load %arg1[%c3] : memref<8xi32, #tpu.memory_space<smem>>
    %c3_i32 = arith.constant 3 : i32
    %c0_i32_9 = arith.constant 0 : i32
    %16 = tpu.memref_slice %arg2[%15, %c0_i32_9] : memref<50x32xf32, #tpu.memory_space<any>> -> memref<1x32xf32, #tpu.memory_space<any>>
    %c3_i32_10 = arith.constant 3 : i32
    %c0_i32_11 = arith.constant 0 : i32
    %17 = tpu.memref_slice %arg10[%c3_i32_10, %c0_i32_11] : memref<8x32xf32, #tpu.memory_space<vmem>> -> memref<1x32xf32, #tpu.memory_space<vmem>>
    %18 = tpu.memref_slice %arg11[%c3_i32] : memref<8x!tpu.dma_semaphore, #tpu.memory_space<semaphore_mem>> -> memref<1x!tpu.dma_semaphore, #tpu.memory_space<semaphore_mem>>
    %19 = tpu.memref_squeeze %18 : memref<1x!tpu.dma_semaphore, #tpu.memory_space<semaphore_mem>> -> memref<!tpu.dma_semaphore, #tpu.memory_space<semaphore_mem>>
    tpu.enqueue_dma source(%16 : memref<1x32xf32, #tpu.memory_space<any>>) target(%17 : memref<1x32xf32, #tpu.memory_space<vmem>>) target_semaphore(%19 : memref<!tpu.dma_semaphore, #tpu.memory_space<semaphore_mem>>)
    %c4 = arith.constant 4 : index
    %20 = memref.load %arg1[%c4] : memref<8xi32, #tpu.memory_space<smem>>
    %c4_i32 = arith.constant 4 : i32
    %c0_i32_12 = arith.constant 0 : i32
    %21 = tpu.memref_slice %arg2[%20, %c0_i32_12] : memref<50x32xf32, #tpu.memory_space<any>> -> memref<1x32xf32, #tpu.memory_space<any>>
    %c4_i32_13 = arith.constant 4 : i32
    %c0_i32_14 = arith.constant 0 : i32
    %22 = tpu.memref_slice %arg10[%c4_i32_13, %c0_i32_14] : memref<8x32xf32, #tpu.memory_space<vmem>> -> memref<1x32xf32, #tpu.memory_space<vmem>>
    %23 = tpu.memref_slice %arg11[%c4_i32] : memref<8x!tpu.dma_semaphore, #tpu.memory_space<semaphore_mem>> -> memref<1x!tpu.dma_semaphore, #tpu.memory_space<semaphore_mem>>
    %24 = tpu.memref_squeeze %23 : memref<1x!tpu.dma_semaphore, #tpu.memory_space<semaphore_mem>> -> memref<!tpu.dma_semaphore, #tpu.memory_space<semaphore_mem>>
    tpu.enqueue_dma source(%21 : memref<1x32xf32, #tpu.memory_space<any>>) target(%22 : memref<1x32xf32, #tpu.memory_space<vmem>>) target_semaphore(%24 : memref<!tpu.dma_semaphore, #tpu.memory_space<semaphore_mem>>)
    %c5 = arith.constant 5 : index
    %25 = memref.load %arg1[%c5] : memref<8xi32, #tpu.memory_space<smem>>
    %c5_i32 = arith.constant 5 : i32
    %c0_i32_15 = arith.constant 0 : i32
    %26 = tpu.memref_slice %arg2[%25, %c0_i32_15] : memref<50x32xf32, #tpu.memory_space<any>> -> memref<1x32xf32, #tpu.memory_space<any>>
    %c5_i32_16 = arith.constant 5 : i32
    %c0_i32_17 = arith.constant 0 : i32
    %27 = tpu.memref_slice %arg10[%c5_i32_16, %c0_i32_17] : memref<8x32xf32, #tpu.memory_space<vmem>> -> memref<1x32xf32, #tpu.memory_space<vmem>>
    %28 = tpu.memref_slice %arg11[%c5_i32] : memref<8x!tpu.dma_semaphore, #tpu.memory_space<semaphore_mem>> -> memref<1x!tpu.dma_semaphore, #tpu.memory_space<semaphore_mem>>
    %29 = tpu.memref_squeeze %28 : memref<1x!tpu.dma_semaphore, #tpu.memory_space<semaphore_mem>> -> memref<!tpu.dma_semaphore, #tpu.memory_space<semaphore_mem>>
    tpu.enqueue_dma source(%26 : memref<1x32xf32, #tpu.memory_space<any>>) target(%27 : memref<1x32xf32, #tpu.memory_space<vmem>>) target_semaphore(%29 : memref<!tpu.dma_semaphore, #tpu.memory_space<semaphore_mem>>)
    %c6 = arith.constant 6 : index
    %30 = memref.load %arg1[%c6] : memref<8xi32, #tpu.memory_space<smem>>
    %c6_i32 = arith.constant 6 : i32
    %c0_i32_18 = arith.constant 0 : i32
    %31 = tpu.memref_slice %arg2[%30, %c0_i32_18] : memref<50x32xf32, #tpu.memory_space<any>> -> memref<1x32xf32, #tpu.memory_space<any>>
    %c6_i32_19 = arith.constant 6 : i32
    %c0_i32_20 = arith.constant 0 : i32
    %32 = tpu.memref_slice %arg10[%c6_i32_19, %c0_i32_20] : memref<8x32xf32, #tpu.memory_space<vmem>> -> memref<1x32xf32, #tpu.memory_space<vmem>>
    %33 = tpu.memref_slice %arg11[%c6_i32] : memref<8x!tpu.dma_semaphore, #tpu.memory_space<semaphore_mem>> -> memref<1x!tpu.dma_semaphore, #tpu.memory_space<semaphore_mem>>
    %34 = tpu.memref_squeeze %33 : memref<1x!tpu.dma_semaphore, #tpu.memory_space<semaphore_mem>> -> memref<!tpu.dma_semaphore, #tpu.memory_space<semaphore_mem>>
    tpu.enqueue_dma source(%31 : memref<1x32xf32, #tpu.memory_space<any>>) target(%32 : memref<1x32xf32, #tpu.memory_space<vmem>>) target_semaphore(%34 : memref<!tpu.dma_semaphore, #tpu.memory_space<semaphore_mem>>)
    %c7 = arith.constant 7 : index
    %35 = memref.load %arg1[%c7] : memref<8xi32, #tpu.memory_space<smem>>
    %c7_i32 = arith.constant 7 : i32
    %c0_i32_21 = arith.constant 0 : i32
    %36 = tpu.memref_slice %arg2[%35, %c0_i32_21] : memref<50x32xf32, #tpu.memory_space<any>> -> memref<1x32xf32, #tpu.memory_space<any>>
    %c7_i32_22 = arith.constant 7 : i32
    %c0_i32_23 = arith.constant 0 : i32
    %37 = tpu.memref_slice %arg10[%c7_i32_22, %c0_i32_23] : memref<8x32xf32, #tpu.memory_space<vmem>> -> memref<1x32xf32, #tpu.memory_space<vmem>>
    %38 = tpu.memref_slice %arg11[%c7_i32] : memref<8x!tpu.dma_semaphore, #tpu.memory_space<semaphore_mem>> -> memref<1x!tpu.dma_semaphore, #tpu.memory_space<semaphore_mem>>
    %39 = tpu.memref_squeeze %38 : memref<1x!tpu.dma_semaphore, #tpu.memory_space<semaphore_mem>> -> memref<!tpu.dma_semaphore, #tpu.memory_space<semaphore_mem>>
    tpu.enqueue_dma source(%36 : memref<1x32xf32, #tpu.memory_space<any>>) target(%37 : memref<1x32xf32, #tpu.memory_space<vmem>>) target_semaphore(%39 : memref<!tpu.dma_semaphore, #tpu.memory_space<semaphore_mem>>)
    %c0_24 = arith.constant 0 : index
    %40 = memref.load %arg1[%c0_24] : memref<8xi32, #tpu.memory_space<smem>>
    %c0_i32_25 = arith.constant 0 : i32
    %c0_i32_26 = arith.constant 0 : i32
    %41 = tpu.memref_slice %arg2[%40, %c0_i32_26] : memref<50x32xf32, #tpu.memory_space<any>> -> memref<1x32xf32, #tpu.memory_space<any>>
    %c0_i32_27 = arith.constant 0 : i32
    %c0_i32_28 = arith.constant 0 : i32
    %42 = tpu.memref_slice %arg10[%c0_i32_27, %c0_i32_28] : memref<8x32xf32, #tpu.memory_space<vmem>> -> memref<1x32xf32, #tpu.memory_space<vmem>>
    %43 = tpu.memref_slice %arg11[%c0_i32_25] : memref<8x!tpu.dma_semaphore, #tpu.memory_space<semaphore_mem>> -> memref<1x!tpu.dma_semaphore, #tpu.memory_space<semaphore_mem>>
    %44 = tpu.memref_squeeze %43 : memref<1x!tpu.dma_semaphore, #tpu.memory_space<semaphore_mem>> -> memref<!tpu.dma_semaphore, #tpu.memory_space<semaphore_mem>>
    tpu.wait_dma2 semaphore(%44 : memref<!tpu.dma_semaphore, #tpu.memory_space<semaphore_mem>>) src(%41 : memref<1x32xf32, #tpu.memory_space<any>>) dst(%42 : memref<1x32xf32, #tpu.memory_space<vmem>>)
    %c1_29 = arith.constant 1 : index
    %45 = memref.load %arg1[%c1_29] : memref<8xi32, #tpu.memory_space<smem>>
    %c1_i32_30 = arith.constant 1 : i32
    %c0_i32_31 = arith.constant 0 : i32
    %46 = tpu.memref_slice %arg2[%45, %c0_i32_31] : memref<50x32xf32, #tpu.memory_space<any>> -> memref<1x32xf32, #tpu.memory_space<any>>
    %c1_i32_32 = arith.constant 1 : i32
    %c0_i32_33 = arith.constant 0 : i32
    %47 = tpu.memref_slice %arg10[%c1_i32_32, %c0_i32_33] : memref<8x32xf32, #tpu.memory_space<vmem>> -> memref<1x32xf32, #tpu.memory_space<vmem>>
    %48 = tpu.memref_slice %arg11[%c1_i32_30] : memref<8x!tpu.dma_semaphore, #tpu.memory_space<semaphore_mem>> -> memref<1x!tpu.dma_semaphore, #tpu.memory_space<semaphore_mem>>
    %49 = tpu.memref_squeeze %48 : memref<1x!tpu.dma_semaphore, #tpu.memory_space<semaphore_mem>> -> memref<!tpu.dma_semaphore, #tpu.memory_space<semaphore_mem>>
    tpu.wait_dma2 semaphore(%49 : memref<!tpu.dma_semaphore, #tpu.memory_space<semaphore_mem>>) src(%46 : memref<1x32xf32, #tpu.memory_space<any>>) dst(%47 : memref<1x32xf32, #tpu.memory_space<vmem>>)
    %c2_34 = arith.constant 2 : index
    %50 = memref.load %arg1[%c2_34] : memref<8xi32, #tpu.memory_space<smem>>
    %c2_i32_35 = arith.constant 2 : i32
    %c0_i32_36 = arith.constant 0 : i32
    %51 = tpu.memref_slice %arg2[%50, %c0_i32_36] : memref<50x32xf32, #tpu.memory_space<any>> -> memref<1x32xf32, #tpu.memory_space<any>>
    %c2_i32_37 = arith.constant 2 : i32
    %c0_i32_38 = arith.constant 0 : i32
    %52 = tpu.memref_slice %arg10[%c2_i32_37, %c0_i32_38] : memref<8x32xf32, #tpu.memory_space<vmem>> -> memref<1x32xf32, #tpu.memory_space<vmem>>
    %53 = tpu.memref_slice %arg11[%c2_i32_35] : memref<8x!tpu.dma_semaphore, #tpu.memory_space<semaphore_mem>> -> memref<1x!tpu.dma_semaphore, #tpu.memory_space<semaphore_mem>>
    %54 = tpu.memref_squeeze %53 : memref<1x!tpu.dma_semaphore, #tpu.memory_space<semaphore_mem>> -> memref<!tpu.dma_semaphore, #tpu.memory_space<semaphore_mem>>
    tpu.wait_dma2 semaphore(%54 : memref<!tpu.dma_semaphore, #tpu.memory_space<semaphore_mem>>) src(%51 : memref<1x32xf32, #tpu.memory_space<any>>) dst(%52 : memref<1x32xf32, #tpu.memory_space<vmem>>)
    %c3_39 = arith.constant 3 : index
    %55 = memref.load %arg1[%c3_39] : memref<8xi32, #tpu.memory_space<smem>>
    %c3_i32_40 = arith.constant 3 : i32
    %c0_i32_41 = arith.constant 0 : i32
    %56 = tpu.memref_slice %arg2[%55, %c0_i32_41] : memref<50x32xf32, #tpu.memory_space<any>> -> memref<1x32xf32, #tpu.memory_space<any>>
    %c3_i32_42 = arith.constant 3 : i32
    %c0_i32_43 = arith.constant 0 : i32
    %57 = tpu.memref_slice %arg10[%c3_i32_42, %c0_i32_43] : memref<8x32xf32, #tpu.memory_space<vmem>> -> memref<1x32xf32, #tpu.memory_space<vmem>>
    %58 = tpu.memref_slice %arg11[%c3_i32_40] : memref<8x!tpu.dma_semaphore, #tpu.memory_space<semaphore_mem>> -> memref<1x!tpu.dma_semaphore, #tpu.memory_space<semaphore_mem>>
    %59 = tpu.memref_squeeze %58 : memref<1x!tpu.dma_semaphore, #tpu.memory_space<semaphore_mem>> -> memref<!tpu.dma_semaphore, #tpu.memory_space<semaphore_mem>>
    tpu.wait_dma2 semaphore(%59 : memref<!tpu.dma_semaphore, #tpu.memory_space<semaphore_mem>>) src(%56 : memref<1x32xf32, #tpu.memory_space<any>>) dst(%57 : memref<1x32xf32, #tpu.memory_space<vmem>>)
    %c4_44 = arith.constant 4 : index
    %60 = memref.load %arg1[%c4_44] : memref<8xi32, #tpu.memory_space<smem>>
    %c4_i32_45 = arith.constant 4 : i32
    %c0_i32_46 = arith.constant 0 : i32
    %61 = tpu.memref_slice %arg2[%60, %c0_i32_46] : memref<50x32xf32, #tpu.memory_space<any>> -> memref<1x32xf32, #tpu.memory_space<any>>
    %c4_i32_47 = arith.constant 4 : i32
    %c0_i32_48 = arith.constant 0 : i32
    %62 = tpu.memref_slice %arg10[%c4_i32_47, %c0_i32_48] : memref<8x32xf32, #tpu.memory_space<vmem>> -> memref<1x32xf32, #tpu.memory_space<vmem>>
    %63 = tpu.memref_slice %arg11[%c4_i32_45] : memref<8x!tpu.dma_semaphore, #tpu.memory_space<semaphore_mem>> -> memref<1x!tpu.dma_semaphore, #tpu.memory_space<semaphore_mem>>
    %64 = tpu.memref_squeeze %63 : memref<1x!tpu.dma_semaphore, #tpu.memory_space<semaphore_mem>> -> memref<!tpu.dma_semaphore, #tpu.memory_space<semaphore_mem>>
    tpu.wait_dma2 semaphore(%64 : memref<!tpu.dma_semaphore, #tpu.memory_space<semaphore_mem>>) src(%61 : memref<1x32xf32, #tpu.memory_space<any>>) dst(%62 : memref<1x32xf32, #tpu.memory_space<vmem>>)
    %c5_49 = arith.constant 5 : index
    %65 = memref.load %arg1[%c5_49] : memref<8xi32, #tpu.memory_space<smem>>
    %c5_i32_50 = arith.constant 5 : i32
    %c0_i32_51 = arith.constant 0 : i32
    %66 = tpu.memref_slice %arg2[%65, %c0_i32_51] : memref<50x32xf32, #tpu.memory_space<any>> -> memref<1x32xf32, #tpu.memory_space<any>>
    %c5_i32_52 = arith.constant 5 : i32
    %c0_i32_53 = arith.constant 0 : i32
    %67 = tpu.memref_slice %arg10[%c5_i32_52, %c0_i32_53] : memref<8x32xf32, #tpu.memory_space<vmem>> -> memref<1x32xf32, #tpu.memory_space<vmem>>
    %68 = tpu.memref_slice %arg11[%c5_i32_50] : memref<8x!tpu.dma_semaphore, #tpu.memory_space<semaphore_mem>> -> memref<1x!tpu.dma_semaphore, #tpu.memory_space<semaphore_mem>>
    %69 = tpu.memref_squeeze %68 : memref<1x!tpu.dma_semaphore, #tpu.memory_space<semaphore_mem>> -> memref<!tpu.dma_semaphore, #tpu.memory_space<semaphore_mem>>
    tpu.wait_dma2 semaphore(%69 : memref<!tpu.dma_semaphore, #tpu.memory_space<semaphore_mem>>) src(%66 : memref<1x32xf32, #tpu.memory_space<any>>) dst(%67 : memref<1x32xf32, #tpu.memory_space<vmem>>)
    %c6_54 = arith.constant 6 : index
    %70 = memref.load %arg1[%c6_54] : memref<8xi32, #tpu.memory_space<smem>>
    %c6_i32_55 = arith.constant 6 : i32
    %c0_i32_56 = arith.constant 0 : i32
    %71 = tpu.memref_slice %arg2[%70, %c0_i32_56] : memref<50x32xf32, #tpu.memory_space<any>> -> memref<1x32xf32, #tpu.memory_space<any>>
    %c6_i32_57 = arith.constant 6 : i32
    %c0_i32_58 = arith.constant 0 : i32
    %72 = tpu.memref_slice %arg10[%c6_i32_57, %c0_i32_58] : memref<8x32xf32, #tpu.memory_space<vmem>> -> memref<1x32xf32, #tpu.memory_space<vmem>>
    %73 = tpu.memref_slice %arg11[%c6_i32_55] : memref<8x!tpu.dma_semaphore, #tpu.memory_space<semaphore_mem>> -> memref<1x!tpu.dma_semaphore, #tpu.memory_space<semaphore_mem>>
    %74 = tpu.memref_squeeze %73 : memref<1x!tpu.dma_semaphore, #tpu.memory_space<semaphore_mem>> -> memref<!tpu.dma_semaphore, #tpu.memory_space<semaphore_mem>>
    tpu.wait_dma2 semaphore(%74 : memref<!tpu.dma_semaphore, #tpu.memory_space<semaphore_mem>>) src(%71 : memref<1x32xf32, #tpu.memory_space<any>>) dst(%72 : memref<1x32xf32, #tpu.memory_space<vmem>>)
    %c7_59 = arith.constant 7 : index
    %75 = memref.load %arg1[%c7_59] : memref<8xi32, #tpu.memory_space<smem>>
    %c7_i32_60 = arith.constant 7 : i32
    %c0_i32_61 = arith.constant 0 : i32
    %76 = tpu.memref_slice %arg2[%75, %c0_i32_61] : memref<50x32xf32, #tpu.memory_space<any>> -> memref<1x32xf32, #tpu.memory_space<any>>
    %c7_i32_62 = arith.constant 7 : i32
    %c0_i32_63 = arith.constant 0 : i32
    %77 = tpu.memref_slice %arg10[%c7_i32_62, %c0_i32_63] : memref<8x32xf32, #tpu.memory_space<vmem>> -> memref<1x32xf32, #tpu.memory_space<vmem>>
    %78 = tpu.memref_slice %arg11[%c7_i32_60] : memref<8x!tpu.dma_semaphore, #tpu.memory_space<semaphore_mem>> -> memref<1x!tpu.dma_semaphore, #tpu.memory_space<semaphore_mem>>
    %79 = tpu.memref_squeeze %78 : memref<1x!tpu.dma_semaphore, #tpu.memory_space<semaphore_mem>> -> memref<!tpu.dma_semaphore, #tpu.memory_space<semaphore_mem>>
    tpu.wait_dma2 semaphore(%79 : memref<!tpu.dma_semaphore, #tpu.memory_space<semaphore_mem>>) src(%76 : memref<1x32xf32, #tpu.memory_space<any>>) dst(%77 : memref<1x32xf32, #tpu.memory_space<vmem>>)
    %c0_64 = arith.constant 0 : index
    %c0_65 = arith.constant 0 : index
    %80 = vector.load %arg10[%c0_64, %c0_65] : memref<8x32xf32, #tpu.memory_space<vmem>>, vector<8x32xf32>
    %c0_66 = arith.constant 0 : index
    %c0_67 = arith.constant 0 : index
    %81 = vector.load %arg4[%c0_66, %c0_67] : memref<32x192xf32, #tpu.memory_space<vmem>>, vector<32x192xf32>
    %cst = arith.constant dense<0.000000e+00> : vector<8x192xf32>
    %82 = tpu.matmul %80, %81, %cst {dimension_numbers = #tpu.dot_dimension_numbers<[1], [0], [0], [1], [0, 0, 1, 1], [], []>} : vector<8x32xf32>, vector<32x192xf32>, vector<8x192xf32> -> vector<8x192xf32>
    %c0_68 = arith.constant 0 : index
    %c0_69 = arith.constant 0 : index
    %83 = vector.load %arg6[%c0_68, %c0_69] : memref<1x192xf32, #tpu.memory_space<vmem>>, vector<1x192xf32>
    %84 = vector.broadcast %83 : vector<1x192xf32> to vector<8x192xf32>
    %85 = arith.addf %82, %84 : vector<8x192xf32>
    %c0_70 = arith.constant 0 : index
    %c0_71 = arith.constant 0 : index
    %c0_72 = arith.constant 0 : index
    %86 = vector.load %arg5[%c0_70, %c0_71, %c0_72] : memref<3x64x64xf32, #tpu.memory_space<vmem>>, vector<1x64x64xf32>
    %87 = vector.shape_cast %86 : vector<1x64x64xf32> to vector<64x64xf32>
    %c1_73 = arith.constant 1 : index
    %c0_74 = arith.constant 0 : index
    %c0_75 = arith.constant 0 : index
    %88 = vector.load %arg5[%c1_73, %c0_74, %c0_75] : memref<3x64x64xf32, #tpu.memory_space<vmem>>, vector<1x64x64xf32>
    %89 = vector.shape_cast %88 : vector<1x64x64xf32> to vector<64x64xf32>
    %c2_76 = arith.constant 2 : index
    %c0_77 = arith.constant 0 : index
    %c0_78 = arith.constant 0 : index
    %90 = vector.load %arg5[%c2_76, %c0_77, %c0_78] : memref<3x64x64xf32, #tpu.memory_space<vmem>>, vector<1x64x64xf32>
    %91 = vector.shape_cast %90 : vector<1x64x64xf32> to vector<64x64xf32>
    %c0_79 = arith.constant 0 : index
    %c0_80 = arith.constant 0 : index
    %92 = vector.load %arg7[%c0_79, %c0_80] : memref<1x64xf32, #tpu.memory_space<vmem>>, vector<1x64xf32>
    %c0_81 = arith.constant 0 : index
    %c0_82 = arith.constant 0 : index
    %c0_83 = arith.constant 0 : index
    %93 = vector.load %arg3[%c0_81, %c0_82, %c0_83] : memref<2x1x32xf32, #tpu.memory_space<vmem>>, vector<1x1x32xf32>
    %94 = vector.shape_cast %93 : vector<1x1x32xf32> to vector<1x32xf32>
    %c1_84 = arith.constant 1 : index
    %c0_85 = arith.constant 0 : index
    %c0_86 = arith.constant 0 : index
    %95 = vector.load %arg3[%c1_84, %c0_85, %c0_86] : memref<2x1x32xf32, #tpu.memory_space<vmem>>, vector<1x1x32xf32>
    %96 = vector.shape_cast %95 : vector<1x1x32xf32> to vector<1x32xf32>
    %97 = tpu.concatenate %94, %96 in 1 : vector<1x32xf32>, vector<1x32xf32> -> vector<1x64xf32>
    %98 = vector.extract_strided_slice %85 {offsets = [0, 0], sizes = [1, 32], strides = [1, 1]} : vector<8x192xf32> to vector<1x32xf32>
    %99 = vector.extract_strided_slice %85 {offsets = [7, 32], sizes = [1, 32], strides = [1, 1]} : vector<8x192xf32> to vector<1x32xf32>
    %100 = tpu.concatenate %98, %99 in 1 : vector<1x32xf32>, vector<1x32xf32> -> vector<1x64xf32>
    %101 = vector.extract_strided_slice %85 {offsets = [0, 64], sizes = [1, 32], strides = [1, 1]} : vector<8x192xf32> to vector<1x32xf32>
    %102 = vector.extract_strided_slice %85 {offsets = [7, 96], sizes = [1, 32], strides = [1, 1]} : vector<8x192xf32> to vector<1x32xf32>
    %103 = tpu.concatenate %101, %102 in 1 : vector<1x32xf32>, vector<1x32xf32> -> vector<1x64xf32>
    %104 = vector.extract_strided_slice %85 {offsets = [0, 128], sizes = [1, 32], strides = [1, 1]} : vector<8x192xf32> to vector<1x32xf32>
    %105 = vector.extract_strided_slice %85 {offsets = [7, 160], sizes = [1, 32], strides = [1, 1]} : vector<8x192xf32> to vector<1x32xf32>
    %106 = tpu.concatenate %104, %105 in 1 : vector<1x32xf32>, vector<1x32xf32> -> vector<1x64xf32>
    %cst_87 = arith.constant dense<0.000000e+00> : vector<1x64xf32>
    %107 = tpu.matmul %97, %87, %cst_87 {dimension_numbers = #tpu.dot_dimension_numbers<[1], [0], [0], [1], [0, 0, 1, 1], [], []>} : vector<1x64xf32>, vector<64x64xf32>, vector<1x64xf32> -> vector<1x64xf32>
    %cst_88 = arith.constant dense<0.000000e+00> : vector<1x64xf32>
    %108 = tpu.matmul %97, %89, %cst_88 {dimension_numbers = #tpu.dot_dimension_numbers<[1], [0], [0], [1], [0, 0, 1, 1], [], []>} : vector<1x64xf32>, vector<64x64xf32>, vector<1x64xf32> -> vector<1x64xf32>
    %cst_89 = arith.constant dense<0.000000e+00> : vector<1x64xf32>
    %109 = tpu.matmul %97, %91, %cst_89 {dimension_numbers = #tpu.dot_dimension_numbers<[1], [0], [0], [1], [0, 0, 1, 1], [], []>} : vector<1x64xf32>, vector<64x64xf32>, vector<1x64xf32> -> vector<1x64xf32>
    %110 = arith.addf %109, %92 : vector<1x64xf32>
    %111 = arith.addf %100, %107 : vector<1x64xf32>
    %112 = arith.negf %111 : vector<1x64xf32>
    %113 = math.exp %112 : vector<1x64xf32>
    %cst_90 = arith.constant 1.000000e+00 : f32
    %114 = vector.broadcast %cst_90 : f32 to vector<1x64xf32>
    %115 = arith.addf %114, %113 : vector<1x64xf32>
    %116 = arith.divf %114, %115 : vector<1x64xf32>
    %117 = arith.addf %103, %108 : vector<1x64xf32>
    %118 = arith.negf %117 : vector<1x64xf32>
    %119 = math.exp %118 : vector<1x64xf32>
    %cst_91 = arith.constant 1.000000e+00 : f32
    %120 = vector.broadcast %cst_91 : f32 to vector<1x64xf32>
    %121 = arith.addf %120, %119 : vector<1x64xf32>
    %122 = arith.divf %120, %121 : vector<1x64xf32>
    %123 = arith.mulf %116, %110 : vector<1x64xf32>
    %124 = arith.addf %106, %123 : vector<1x64xf32>
    %125 = math.tanh %124 : vector<1x64xf32>
    %cst_92 = arith.constant 1.000000e+00 : f32
    %126 = vector.broadcast %cst_92 : f32 to vector<1x64xf32>
    %127 = arith.subf %126, %122 : vector<1x64xf32>
    %128 = arith.mulf %127, %125 : vector<1x64xf32>
    %129 = arith.mulf %122, %97 : vector<1x64xf32>
    %130 = arith.addf %128, %129 : vector<1x64xf32>
    %131 = vector.extract_strided_slice %85 {offsets = [1, 0], sizes = [1, 32], strides = [1, 1]} : vector<8x192xf32> to vector<1x32xf32>
    %132 = vector.extract_strided_slice %85 {offsets = [6, 32], sizes = [1, 32], strides = [1, 1]} : vector<8x192xf32> to vector<1x32xf32>
    %133 = tpu.concatenate %131, %132 in 1 : vector<1x32xf32>, vector<1x32xf32> -> vector<1x64xf32>
    %134 = vector.extract_strided_slice %85 {offsets = [1, 64], sizes = [1, 32], strides = [1, 1]} : vector<8x192xf32> to vector<1x32xf32>
    %135 = vector.extract_strided_slice %85 {offsets = [6, 96], sizes = [1, 32], strides = [1, 1]} : vector<8x192xf32> to vector<1x32xf32>
    %136 = tpu.concatenate %134, %135 in 1 : vector<1x32xf32>, vector<1x32xf32> -> vector<1x64xf32>
    %137 = vector.extract_strided_slice %85 {offsets = [1, 128], sizes = [1, 32], strides = [1, 1]} : vector<8x192xf32> to vector<1x32xf32>
    %138 = vector.extract_strided_slice %85 {offsets = [6, 160], sizes = [1, 32], strides = [1, 1]} : vector<8x192xf32> to vector<1x32xf32>
    %139 = tpu.concatenate %137, %138 in 1 : vector<1x32xf32>, vector<1x32xf32> -> vector<1x64xf32>
    %cst_93 = arith.constant dense<0.000000e+00> : vector<1x64xf32>
    %140 = tpu.matmul %130, %87, %cst_93 {dimension_numbers = #tpu.dot_dimension_numbers<[1], [0], [0], [1], [0, 0, 1, 1], [], []>} : vector<1x64xf32>, vector<64x64xf32>, vector<1x64xf32> -> vector<1x64xf32>
    %cst_94 = arith.constant dense<0.000000e+00> : vector<1x64xf32>
    %141 = tpu.matmul %130, %89, %cst_94 {dimension_numbers = #tpu.dot_dimension_numbers<[1], [0], [0], [1], [0, 0, 1, 1], [], []>} : vector<1x64xf32>, vector<64x64xf32>, vector<1x64xf32> -> vector<1x64xf32>
    %cst_95 = arith.constant dense<0.000000e+00> : vector<1x64xf32>
    %142 = tpu.matmul %130, %91, %cst_95 {dimension_numbers = #tpu.dot_dimension_numbers<[1], [0], [0], [1], [0, 0, 1, 1], [], []>} : vector<1x64xf32>, vector<64x64xf32>, vector<1x64xf32> -> vector<1x64xf32>
    %143 = arith.addf %142, %92 : vector<1x64xf32>
    %144 = arith.addf %133, %140 : vector<1x64xf32>
    %145 = arith.negf %144 : vector<1x64xf32>
    %146 = math.exp %145 : vector<1x64xf32>
    %cst_96 = arith.constant 1.000000e+00 : f32
    %147 = vector.broadcast %cst_96 : f32 to vector<1x64xf32>
    %148 = arith.addf %147, %146 : vector<1x64xf32>
    %149 = arith.divf %147, %148 : vector<1x64xf32>
    %150 = arith.addf %136, %141 : vector<1x64xf32>
    %151 = arith.negf %150 : vector<1x64xf32>
    %152 = math.exp %151 : vector<1x64xf32>
    %cst_97 = arith.constant 1.000000e+00 : f32
    %153 = vector.broadcast %cst_97 : f32 to vector<1x64xf32>
    %154 = arith.addf %153, %152 : vector<1x64xf32>
    %155 = arith.divf %153, %154 : vector<1x64xf32>
    %156 = arith.mulf %149, %143 : vector<1x64xf32>
    %157 = arith.addf %139, %156 : vector<1x64xf32>
    %158 = math.tanh %157 : vector<1x64xf32>
    %cst_98 = arith.constant 1.000000e+00 : f32
    %159 = vector.broadcast %cst_98 : f32 to vector<1x64xf32>
    %160 = arith.subf %159, %155 : vector<1x64xf32>
    %161 = arith.mulf %160, %158 : vector<1x64xf32>
    %162 = arith.mulf %155, %130 : vector<1x64xf32>
    %163 = arith.addf %161, %162 : vector<1x64xf32>
    %164 = vector.extract_strided_slice %85 {offsets = [2, 0], sizes = [1, 32], strides = [1, 1]} : vector<8x192xf32> to vector<1x32xf32>
    %165 = vector.extract_strided_slice %85 {offsets = [5, 32], sizes = [1, 32], strides = [1, 1]} : vector<8x192xf32> to vector<1x32xf32>
    %166 = tpu.concatenate %164, %165 in 1 : vector<1x32xf32>, vector<1x32xf32> -> vector<1x64xf32>
    %167 = vector.extract_strided_slice %85 {offsets = [2, 64], sizes = [1, 32], strides = [1, 1]} : vector<8x192xf32> to vector<1x32xf32>
    %168 = vector.extract_strided_slice %85 {offsets = [5, 96], sizes = [1, 32], strides = [1, 1]} : vector<8x192xf32> to vector<1x32xf32>
    %169 = tpu.concatenate %167, %168 in 1 : vector<1x32xf32>, vector<1x32xf32> -> vector<1x64xf32>
    %170 = vector.extract_strided_slice %85 {offsets = [2, 128], sizes = [1, 32], strides = [1, 1]} : vector<8x192xf32> to vector<1x32xf32>
    %171 = vector.extract_strided_slice %85 {offsets = [5, 160], sizes = [1, 32], strides = [1, 1]} : vector<8x192xf32> to vector<1x32xf32>
    %172 = tpu.concatenate %170, %171 in 1 : vector<1x32xf32>, vector<1x32xf32> -> vector<1x64xf32>
    %cst_99 = arith.constant dense<0.000000e+00> : vector<1x64xf32>
    %173 = tpu.matmul %163, %87, %cst_99 {dimension_numbers = #tpu.dot_dimension_numbers<[1], [0], [0], [1], [0, 0, 1, 1], [], []>} : vector<1x64xf32>, vector<64x64xf32>, vector<1x64xf32> -> vector<1x64xf32>
    %cst_100 = arith.constant dense<0.000000e+00> : vector<1x64xf32>
    %174 = tpu.matmul %163, %89, %cst_100 {dimension_numbers = #tpu.dot_dimension_numbers<[1], [0], [0], [1], [0, 0, 1, 1], [], []>} : vector<1x64xf32>, vector<64x64xf32>, vector<1x64xf32> -> vector<1x64xf32>
    %cst_101 = arith.constant dense<0.000000e+00> : vector<1x64xf32>
    %175 = tpu.matmul %163, %91, %cst_101 {dimension_numbers = #tpu.dot_dimension_numbers<[1], [0], [0], [1], [0, 0, 1, 1], [], []>} : vector<1x64xf32>, vector<64x64xf32>, vector<1x64xf32> -> vector<1x64xf32>
    %176 = arith.addf %175, %92 : vector<1x64xf32>
    %177 = arith.addf %166, %173 : vector<1x64xf32>
    %178 = arith.negf %177 : vector<1x64xf32>
    %179 = math.exp %178 : vector<1x64xf32>
    %cst_102 = arith.constant 1.000000e+00 : f32
    %180 = vector.broadcast %cst_102 : f32 to vector<1x64xf32>
    %181 = arith.addf %180, %179 : vector<1x64xf32>
    %182 = arith.divf %180, %181 : vector<1x64xf32>
    %183 = arith.addf %169, %174 : vector<1x64xf32>
    %184 = arith.negf %183 : vector<1x64xf32>
    %185 = math.exp %184 : vector<1x64xf32>
    %cst_103 = arith.constant 1.000000e+00 : f32
    %186 = vector.broadcast %cst_103 : f32 to vector<1x64xf32>
    %187 = arith.addf %186, %185 : vector<1x64xf32>
    %188 = arith.divf %186, %187 : vector<1x64xf32>
    %189 = arith.mulf %182, %176 : vector<1x64xf32>
    %190 = arith.addf %172, %189 : vector<1x64xf32>
    %191 = math.tanh %190 : vector<1x64xf32>
    %cst_104 = arith.constant 1.000000e+00 : f32
    %192 = vector.broadcast %cst_104 : f32 to vector<1x64xf32>
    %193 = arith.subf %192, %188 : vector<1x64xf32>
    %194 = arith.mulf %193, %191 : vector<1x64xf32>
    %195 = arith.mulf %188, %163 : vector<1x64xf32>
    %196 = arith.addf %194, %195 : vector<1x64xf32>
    %197 = vector.extract_strided_slice %85 {offsets = [3, 0], sizes = [1, 32], strides = [1, 1]} : vector<8x192xf32> to vector<1x32xf32>
    %198 = vector.extract_strided_slice %85 {offsets = [4, 32], sizes = [1, 32], strides = [1, 1]} : vector<8x192xf32> to vector<1x32xf32>
    %199 = tpu.concatenate %197, %198 in 1 : vector<1x32xf32>, vector<1x32xf32> -> vector<1x64xf32>
    %200 = vector.extract_strided_slice %85 {offsets = [3, 64], sizes = [1, 32], strides = [1, 1]} : vector<8x192xf32> to vector<1x32xf32>
    %201 = vector.extract_strided_slice %85 {offsets = [4, 96], sizes = [1, 32], strides = [1, 1]} : vector<8x192xf32> to vector<1x32xf32>
    %202 = tpu.concatenate %200, %201 in 1 : vector<1x32xf32>, vector<1x32xf32> -> vector<1x64xf32>
    %203 = vector.extract_strided_slice %85 {offsets = [3, 128], sizes = [1, 32], strides = [1, 1]} : vector<8x192xf32> to vector<1x32xf32>
    %204 = vector.extract_strided_slice %85 {offsets = [4, 160], sizes = [1, 32], strides = [1, 1]} : vector<8x192xf32> to vector<1x32xf32>
    %205 = tpu.concatenate %203, %204 in 1 : vector<1x32xf32>, vector<1x32xf32> -> vector<1x64xf32>
    %cst_105 = arith.constant dense<0.000000e+00> : vector<1x64xf32>
    %206 = tpu.matmul %196, %87, %cst_105 {dimension_numbers = #tpu.dot_dimension_numbers<[1], [0], [0], [1], [0, 0, 1, 1], [], []>} : vector<1x64xf32>, vector<64x64xf32>, vector<1x64xf32> -> vector<1x64xf32>
    %cst_106 = arith.constant dense<0.000000e+00> : vector<1x64xf32>
    %207 = tpu.matmul %196, %89, %cst_106 {dimension_numbers = #tpu.dot_dimension_numbers<[1], [0], [0], [1], [0, 0, 1, 1], [], []>} : vector<1x64xf32>, vector<64x64xf32>, vector<1x64xf32> -> vector<1x64xf32>
    %cst_107 = arith.constant dense<0.000000e+00> : vector<1x64xf32>
    %208 = tpu.matmul %196, %91, %cst_107 {dimension_numbers = #tpu.dot_dimension_numbers<[1], [0], [0], [1], [0, 0, 1, 1], [], []>} : vector<1x64xf32>, vector<64x64xf32>, vector<1x64xf32> -> vector<1x64xf32>
    %209 = arith.addf %208, %92 : vector<1x64xf32>
    %210 = arith.addf %199, %206 : vector<1x64xf32>
    %211 = arith.negf %210 : vector<1x64xf32>
    %212 = math.exp %211 : vector<1x64xf32>
    %cst_108 = arith.constant 1.000000e+00 : f32
    %213 = vector.broadcast %cst_108 : f32 to vector<1x64xf32>
    %214 = arith.addf %213, %212 : vector<1x64xf32>
    %215 = arith.divf %213, %214 : vector<1x64xf32>
    %216 = arith.addf %202, %207 : vector<1x64xf32>
    %217 = arith.negf %216 : vector<1x64xf32>
    %218 = math.exp %217 : vector<1x64xf32>
    %cst_109 = arith.constant 1.000000e+00 : f32
    %219 = vector.broadcast %cst_109 : f32 to vector<1x64xf32>
    %220 = arith.addf %219, %218 : vector<1x64xf32>
    %221 = arith.divf %219, %220 : vector<1x64xf32>
    %222 = arith.mulf %215, %209 : vector<1x64xf32>
    %223 = arith.addf %205, %222 : vector<1x64xf32>
    %224 = math.tanh %223 : vector<1x64xf32>
    %cst_110 = arith.constant 1.000000e+00 : f32
    %225 = vector.broadcast %cst_110 : f32 to vector<1x64xf32>
    %226 = arith.subf %225, %221 : vector<1x64xf32>
    %227 = arith.mulf %226, %224 : vector<1x64xf32>
    %228 = arith.mulf %221, %196 : vector<1x64xf32>
    %229 = arith.addf %227, %228 : vector<1x64xf32>
    %230 = vector.extract_strided_slice %85 {offsets = [4, 0], sizes = [1, 32], strides = [1, 1]} : vector<8x192xf32> to vector<1x32xf32>
    %231 = vector.extract_strided_slice %85 {offsets = [3, 32], sizes = [1, 32], strides = [1, 1]} : vector<8x192xf32> to vector<1x32xf32>
    %232 = tpu.concatenate %230, %231 in 1 : vector<1x32xf32>, vector<1x32xf32> -> vector<1x64xf32>
    %233 = vector.extract_strided_slice %85 {offsets = [4, 64], sizes = [1, 32], strides = [1, 1]} : vector<8x192xf32> to vector<1x32xf32>
    %234 = vector.extract_strided_slice %85 {offsets = [3, 96], sizes = [1, 32], strides = [1, 1]} : vector<8x192xf32> to vector<1x32xf32>
    %235 = tpu.concatenate %233, %234 in 1 : vector<1x32xf32>, vector<1x32xf32> -> vector<1x64xf32>
    %236 = vector.extract_strided_slice %85 {offsets = [4, 128], sizes = [1, 32], strides = [1, 1]} : vector<8x192xf32> to vector<1x32xf32>
    %237 = vector.extract_strided_slice %85 {offsets = [3, 160], sizes = [1, 32], strides = [1, 1]} : vector<8x192xf32> to vector<1x32xf32>
    %238 = tpu.concatenate %236, %237 in 1 : vector<1x32xf32>, vector<1x32xf32> -> vector<1x64xf32>
    %cst_111 = arith.constant dense<0.000000e+00> : vector<1x64xf32>
    %239 = tpu.matmul %229, %87, %cst_111 {dimension_numbers = #tpu.dot_dimension_numbers<[1], [0], [0], [1], [0, 0, 1, 1], [], []>} : vector<1x64xf32>, vector<64x64xf32>, vector<1x64xf32> -> vector<1x64xf32>
    %cst_112 = arith.constant dense<0.000000e+00> : vector<1x64xf32>
    %240 = tpu.matmul %229, %89, %cst_112 {dimension_numbers = #tpu.dot_dimension_numbers<[1], [0], [0], [1], [0, 0, 1, 1], [], []>} : vector<1x64xf32>, vector<64x64xf32>, vector<1x64xf32> -> vector<1x64xf32>
    %cst_113 = arith.constant dense<0.000000e+00> : vector<1x64xf32>
    %241 = tpu.matmul %229, %91, %cst_113 {dimension_numbers = #tpu.dot_dimension_numbers<[1], [0], [0], [1], [0, 0, 1, 1], [], []>} : vector<1x64xf32>, vector<64x64xf32>, vector<1x64xf32> -> vector<1x64xf32>
    %242 = arith.addf %241, %92 : vector<1x64xf32>
    %243 = arith.addf %232, %239 : vector<1x64xf32>
    %244 = arith.negf %243 : vector<1x64xf32>
    %245 = math.exp %244 : vector<1x64xf32>
    %cst_114 = arith.constant 1.000000e+00 : f32
    %246 = vector.broadcast %cst_114 : f32 to vector<1x64xf32>
    %247 = arith.addf %246, %245 : vector<1x64xf32>
    %248 = arith.divf %246, %247 : vector<1x64xf32>
    %249 = arith.addf %235, %240 : vector<1x64xf32>
    %250 = arith.negf %249 : vector<1x64xf32>
    %251 = math.exp %250 : vector<1x64xf32>
    %cst_115 = arith.constant 1.000000e+00 : f32
    %252 = vector.broadcast %cst_115 : f32 to vector<1x64xf32>
    %253 = arith.addf %252, %251 : vector<1x64xf32>
    %254 = arith.divf %252, %253 : vector<1x64xf32>
    %255 = arith.mulf %248, %242 : vector<1x64xf32>
    %256 = arith.addf %238, %255 : vector<1x64xf32>
    %257 = math.tanh %256 : vector<1x64xf32>
    %cst_116 = arith.constant 1.000000e+00 : f32
    %258 = vector.broadcast %cst_116 : f32 to vector<1x64xf32>
    %259 = arith.subf %258, %254 : vector<1x64xf32>
    %260 = arith.mulf %259, %257 : vector<1x64xf32>
    %261 = arith.mulf %254, %229 : vector<1x64xf32>
    %262 = arith.addf %260, %261 : vector<1x64xf32>
    %263 = vector.extract_strided_slice %85 {offsets = [5, 0], sizes = [1, 32], strides = [1, 1]} : vector<8x192xf32> to vector<1x32xf32>
    %264 = vector.extract_strided_slice %85 {offsets = [2, 32], sizes = [1, 32], strides = [1, 1]} : vector<8x192xf32> to vector<1x32xf32>
    %265 = tpu.concatenate %263, %264 in 1 : vector<1x32xf32>, vector<1x32xf32> -> vector<1x64xf32>
    %266 = vector.extract_strided_slice %85 {offsets = [5, 64], sizes = [1, 32], strides = [1, 1]} : vector<8x192xf32> to vector<1x32xf32>
    %267 = vector.extract_strided_slice %85 {offsets = [2, 96], sizes = [1, 32], strides = [1, 1]} : vector<8x192xf32> to vector<1x32xf32>
    %268 = tpu.concatenate %266, %267 in 1 : vector<1x32xf32>, vector<1x32xf32> -> vector<1x64xf32>
    %269 = vector.extract_strided_slice %85 {offsets = [5, 128], sizes = [1, 32], strides = [1, 1]} : vector<8x192xf32> to vector<1x32xf32>
    %270 = vector.extract_strided_slice %85 {offsets = [2, 160], sizes = [1, 32], strides = [1, 1]} : vector<8x192xf32> to vector<1x32xf32>
    %271 = tpu.concatenate %269, %270 in 1 : vector<1x32xf32>, vector<1x32xf32> -> vector<1x64xf32>
    %cst_117 = arith.constant dense<0.000000e+00> : vector<1x64xf32>
    %272 = tpu.matmul %262, %87, %cst_117 {dimension_numbers = #tpu.dot_dimension_numbers<[1], [0], [0], [1], [0, 0, 1, 1], [], []>} : vector<1x64xf32>, vector<64x64xf32>, vector<1x64xf32> -> vector<1x64xf32>
    %cst_118 = arith.constant dense<0.000000e+00> : vector<1x64xf32>
    %273 = tpu.matmul %262, %89, %cst_118 {dimension_numbers = #tpu.dot_dimension_numbers<[1], [0], [0], [1], [0, 0, 1, 1], [], []>} : vector<1x64xf32>, vector<64x64xf32>, vector<1x64xf32> -> vector<1x64xf32>
    %cst_119 = arith.constant dense<0.000000e+00> : vector<1x64xf32>
    %274 = tpu.matmul %262, %91, %cst_119 {dimension_numbers = #tpu.dot_dimension_numbers<[1], [0], [0], [1], [0, 0, 1, 1], [], []>} : vector<1x64xf32>, vector<64x64xf32>, vector<1x64xf32> -> vector<1x64xf32>
    %275 = arith.addf %274, %92 : vector<1x64xf32>
    %276 = arith.addf %265, %272 : vector<1x64xf32>
    %277 = arith.negf %276 : vector<1x64xf32>
    %278 = math.exp %277 : vector<1x64xf32>
    %cst_120 = arith.constant 1.000000e+00 : f32
    %279 = vector.broadcast %cst_120 : f32 to vector<1x64xf32>
    %280 = arith.addf %279, %278 : vector<1x64xf32>
    %281 = arith.divf %279, %280 : vector<1x64xf32>
    %282 = arith.addf %268, %273 : vector<1x64xf32>
    %283 = arith.negf %282 : vector<1x64xf32>
    %284 = math.exp %283 : vector<1x64xf32>
    %cst_121 = arith.constant 1.000000e+00 : f32
    %285 = vector.broadcast %cst_121 : f32 to vector<1x64xf32>
    %286 = arith.addf %285, %284 : vector<1x64xf32>
    %287 = arith.divf %285, %286 : vector<1x64xf32>
    %288 = arith.mulf %281, %275 : vector<1x64xf32>
    %289 = arith.addf %271, %288 : vector<1x64xf32>
    %290 = math.tanh %289 : vector<1x64xf32>
    %cst_122 = arith.constant 1.000000e+00 : f32
    %291 = vector.broadcast %cst_122 : f32 to vector<1x64xf32>
    %292 = arith.subf %291, %287 : vector<1x64xf32>
    %293 = arith.mulf %292, %290 : vector<1x64xf32>
    %294 = arith.mulf %287, %262 : vector<1x64xf32>
    %295 = arith.addf %293, %294 : vector<1x64xf32>
    %296 = vector.extract_strided_slice %85 {offsets = [6, 0], sizes = [1, 32], strides = [1, 1]} : vector<8x192xf32> to vector<1x32xf32>
    %297 = vector.extract_strided_slice %85 {offsets = [1, 32], sizes = [1, 32], strides = [1, 1]} : vector<8x192xf32> to vector<1x32xf32>
    %298 = tpu.concatenate %296, %297 in 1 : vector<1x32xf32>, vector<1x32xf32> -> vector<1x64xf32>
    %299 = vector.extract_strided_slice %85 {offsets = [6, 64], sizes = [1, 32], strides = [1, 1]} : vector<8x192xf32> to vector<1x32xf32>
    %300 = vector.extract_strided_slice %85 {offsets = [1, 96], sizes = [1, 32], strides = [1, 1]} : vector<8x192xf32> to vector<1x32xf32>
    %301 = tpu.concatenate %299, %300 in 1 : vector<1x32xf32>, vector<1x32xf32> -> vector<1x64xf32>
    %302 = vector.extract_strided_slice %85 {offsets = [6, 128], sizes = [1, 32], strides = [1, 1]} : vector<8x192xf32> to vector<1x32xf32>
    %303 = vector.extract_strided_slice %85 {offsets = [1, 160], sizes = [1, 32], strides = [1, 1]} : vector<8x192xf32> to vector<1x32xf32>
    %304 = tpu.concatenate %302, %303 in 1 : vector<1x32xf32>, vector<1x32xf32> -> vector<1x64xf32>
    %cst_123 = arith.constant dense<0.000000e+00> : vector<1x64xf32>
    %305 = tpu.matmul %295, %87, %cst_123 {dimension_numbers = #tpu.dot_dimension_numbers<[1], [0], [0], [1], [0, 0, 1, 1], [], []>} : vector<1x64xf32>, vector<64x64xf32>, vector<1x64xf32> -> vector<1x64xf32>
    %cst_124 = arith.constant dense<0.000000e+00> : vector<1x64xf32>
    %306 = tpu.matmul %295, %89, %cst_124 {dimension_numbers = #tpu.dot_dimension_numbers<[1], [0], [0], [1], [0, 0, 1, 1], [], []>} : vector<1x64xf32>, vector<64x64xf32>, vector<1x64xf32> -> vector<1x64xf32>
    %cst_125 = arith.constant dense<0.000000e+00> : vector<1x64xf32>
    %307 = tpu.matmul %295, %91, %cst_125 {dimension_numbers = #tpu.dot_dimension_numbers<[1], [0], [0], [1], [0, 0, 1, 1], [], []>} : vector<1x64xf32>, vector<64x64xf32>, vector<1x64xf32> -> vector<1x64xf32>
    %308 = arith.addf %307, %92 : vector<1x64xf32>
    %309 = arith.addf %298, %305 : vector<1x64xf32>
    %310 = arith.negf %309 : vector<1x64xf32>
    %311 = math.exp %310 : vector<1x64xf32>
    %cst_126 = arith.constant 1.000000e+00 : f32
    %312 = vector.broadcast %cst_126 : f32 to vector<1x64xf32>
    %313 = arith.addf %312, %311 : vector<1x64xf32>
    %314 = arith.divf %312, %313 : vector<1x64xf32>
    %315 = arith.addf %301, %306 : vector<1x64xf32>
    %316 = arith.negf %315 : vector<1x64xf32>
    %317 = math.exp %316 : vector<1x64xf32>
    %cst_127 = arith.constant 1.000000e+00 : f32
    %318 = vector.broadcast %cst_127 : f32 to vector<1x64xf32>
    %319 = arith.addf %318, %317 : vector<1x64xf32>
    %320 = arith.divf %318, %319 : vector<1x64xf32>
    %321 = arith.mulf %314, %308 : vector<1x64xf32>
    %322 = arith.addf %304, %321 : vector<1x64xf32>
    %323 = math.tanh %322 : vector<1x64xf32>
    %cst_128 = arith.constant 1.000000e+00 : f32
    %324 = vector.broadcast %cst_128 : f32 to vector<1x64xf32>
    %325 = arith.subf %324, %320 : vector<1x64xf32>
    %326 = arith.mulf %325, %323 : vector<1x64xf32>
    %327 = arith.mulf %320, %295 : vector<1x64xf32>
    %328 = arith.addf %326, %327 : vector<1x64xf32>
    %329 = vector.extract_strided_slice %85 {offsets = [7, 0], sizes = [1, 32], strides = [1, 1]} : vector<8x192xf32> to vector<1x32xf32>
    %330 = vector.extract_strided_slice %85 {offsets = [0, 32], sizes = [1, 32], strides = [1, 1]} : vector<8x192xf32> to vector<1x32xf32>
    %331 = tpu.concatenate %329, %330 in 1 : vector<1x32xf32>, vector<1x32xf32> -> vector<1x64xf32>
    %332 = vector.extract_strided_slice %85 {offsets = [7, 64], sizes = [1, 32], strides = [1, 1]} : vector<8x192xf32> to vector<1x32xf32>
    %333 = vector.extract_strided_slice %85 {offsets = [0, 96], sizes = [1, 32], strides = [1, 1]} : vector<8x192xf32> to vector<1x32xf32>
    %334 = tpu.concatenate %332, %333 in 1 : vector<1x32xf32>, vector<1x32xf32> -> vector<1x64xf32>
    %335 = vector.extract_strided_slice %85 {offsets = [7, 128], sizes = [1, 32], strides = [1, 1]} : vector<8x192xf32> to vector<1x32xf32>
    %336 = vector.extract_strided_slice %85 {offsets = [0, 160], sizes = [1, 32], strides = [1, 1]} : vector<8x192xf32> to vector<1x32xf32>
    %337 = tpu.concatenate %335, %336 in 1 : vector<1x32xf32>, vector<1x32xf32> -> vector<1x64xf32>
    %cst_129 = arith.constant dense<0.000000e+00> : vector<1x64xf32>
    %338 = tpu.matmul %328, %87, %cst_129 {dimension_numbers = #tpu.dot_dimension_numbers<[1], [0], [0], [1], [0, 0, 1, 1], [], []>} : vector<1x64xf32>, vector<64x64xf32>, vector<1x64xf32> -> vector<1x64xf32>
    %cst_130 = arith.constant dense<0.000000e+00> : vector<1x64xf32>
    %339 = tpu.matmul %328, %89, %cst_130 {dimension_numbers = #tpu.dot_dimension_numbers<[1], [0], [0], [1], [0, 0, 1, 1], [], []>} : vector<1x64xf32>, vector<64x64xf32>, vector<1x64xf32> -> vector<1x64xf32>
    %cst_131 = arith.constant dense<0.000000e+00> : vector<1x64xf32>
    %340 = tpu.matmul %328, %91, %cst_131 {dimension_numbers = #tpu.dot_dimension_numbers<[1], [0], [0], [1], [0, 0, 1, 1], [], []>} : vector<1x64xf32>, vector<64x64xf32>, vector<1x64xf32> -> vector<1x64xf32>
    %341 = arith.addf %340, %92 : vector<1x64xf32>
    %342 = arith.addf %331, %338 : vector<1x64xf32>
    %343 = arith.negf %342 : vector<1x64xf32>
    %344 = math.exp %343 : vector<1x64xf32>
    %cst_132 = arith.constant 1.000000e+00 : f32
    %345 = vector.broadcast %cst_132 : f32 to vector<1x64xf32>
    %346 = arith.addf %345, %344 : vector<1x64xf32>
    %347 = arith.divf %345, %346 : vector<1x64xf32>
    %348 = arith.addf %334, %339 : vector<1x64xf32>
    %349 = arith.negf %348 : vector<1x64xf32>
    %350 = math.exp %349 : vector<1x64xf32>
    %cst_133 = arith.constant 1.000000e+00 : f32
    %351 = vector.broadcast %cst_133 : f32 to vector<1x64xf32>
    %352 = arith.addf %351, %350 : vector<1x64xf32>
    %353 = arith.divf %351, %352 : vector<1x64xf32>
    %354 = arith.mulf %347, %341 : vector<1x64xf32>
    %355 = arith.addf %337, %354 : vector<1x64xf32>
    %356 = math.tanh %355 : vector<1x64xf32>
    %cst_134 = arith.constant 1.000000e+00 : f32
    %357 = vector.broadcast %cst_134 : f32 to vector<1x64xf32>
    %358 = arith.subf %357, %353 : vector<1x64xf32>
    %359 = arith.mulf %358, %356 : vector<1x64xf32>
    %360 = arith.mulf %353, %328 : vector<1x64xf32>
    %361 = arith.addf %359, %360 : vector<1x64xf32>
    %362 = vector.extract_strided_slice %130 {offsets = [0, 0], sizes = [1, 32], strides = [1, 1]} : vector<1x64xf32> to vector<1x32xf32>
    %363 = vector.extract_strided_slice %361 {offsets = [0, 32], sizes = [1, 32], strides = [1, 1]} : vector<1x64xf32> to vector<1x32xf32>
    %364 = tpu.concatenate %362, %363 in 1 : vector<1x32xf32>, vector<1x32xf32> -> vector<1x64xf32>
    %365 = vector.extract_strided_slice %163 {offsets = [0, 0], sizes = [1, 32], strides = [1, 1]} : vector<1x64xf32> to vector<1x32xf32>
    %366 = vector.extract_strided_slice %328 {offsets = [0, 32], sizes = [1, 32], strides = [1, 1]} : vector<1x64xf32> to vector<1x32xf32>
    %367 = tpu.concatenate %365, %366 in 1 : vector<1x32xf32>, vector<1x32xf32> -> vector<1x64xf32>
    %368 = vector.extract_strided_slice %196 {offsets = [0, 0], sizes = [1, 32], strides = [1, 1]} : vector<1x64xf32> to vector<1x32xf32>
    %369 = vector.extract_strided_slice %295 {offsets = [0, 32], sizes = [1, 32], strides = [1, 1]} : vector<1x64xf32> to vector<1x32xf32>
    %370 = tpu.concatenate %368, %369 in 1 : vector<1x32xf32>, vector<1x32xf32> -> vector<1x64xf32>
    %371 = vector.extract_strided_slice %229 {offsets = [0, 0], sizes = [1, 32], strides = [1, 1]} : vector<1x64xf32> to vector<1x32xf32>
    %372 = vector.extract_strided_slice %262 {offsets = [0, 32], sizes = [1, 32], strides = [1, 1]} : vector<1x64xf32> to vector<1x32xf32>
    %373 = tpu.concatenate %371, %372 in 1 : vector<1x32xf32>, vector<1x32xf32> -> vector<1x64xf32>
    %374 = vector.extract_strided_slice %262 {offsets = [0, 0], sizes = [1, 32], strides = [1, 1]} : vector<1x64xf32> to vector<1x32xf32>
    %375 = vector.extract_strided_slice %229 {offsets = [0, 32], sizes = [1, 32], strides = [1, 1]} : vector<1x64xf32> to vector<1x32xf32>
    %376 = tpu.concatenate %374, %375 in 1 : vector<1x32xf32>, vector<1x32xf32> -> vector<1x64xf32>
    %377 = vector.extract_strided_slice %295 {offsets = [0, 0], sizes = [1, 32], strides = [1, 1]} : vector<1x64xf32> to vector<1x32xf32>
    %378 = vector.extract_strided_slice %196 {offsets = [0, 32], sizes = [1, 32], strides = [1, 1]} : vector<1x64xf32> to vector<1x32xf32>
    %379 = tpu.concatenate %377, %378 in 1 : vector<1x32xf32>, vector<1x32xf32> -> vector<1x64xf32>
    %380 = vector.extract_strided_slice %328 {offsets = [0, 0], sizes = [1, 32], strides = [1, 1]} : vector<1x64xf32> to vector<1x32xf32>
    %381 = vector.extract_strided_slice %163 {offsets = [0, 32], sizes = [1, 32], strides = [1, 1]} : vector<1x64xf32> to vector<1x32xf32>
    %382 = tpu.concatenate %380, %381 in 1 : vector<1x32xf32>, vector<1x32xf32> -> vector<1x64xf32>
    %383 = vector.extract_strided_slice %361 {offsets = [0, 0], sizes = [1, 32], strides = [1, 1]} : vector<1x64xf32> to vector<1x32xf32>
    %384 = vector.extract_strided_slice %130 {offsets = [0, 32], sizes = [1, 32], strides = [1, 1]} : vector<1x64xf32> to vector<1x32xf32>
    %385 = tpu.concatenate %383, %384 in 1 : vector<1x32xf32>, vector<1x32xf32> -> vector<1x64xf32>
    %386 = tpu.concatenate %364, %367, %370, %373, %376, %379, %382, %385 in 0 : vector<1x64xf32>, vector<1x64xf32>, vector<1x64xf32>, vector<1x64xf32>, vector<1x64xf32>, vector<1x64xf32>, vector<1x64xf32>, vector<1x64xf32> -> vector<8x64xf32>
    %c0_135 = arith.constant 0 : index
    %c0_136 = arith.constant 0 : index
    %c0_137 = arith.constant 0 : index
    %387 = vector.load %arg8[%c0_135, %c0_136, %c0_137] : memref<1x8x64xf32, #tpu.memory_space<vmem>>, vector<1x8x64xf32>
    %388 = vector.shape_cast %387 : vector<1x8x64xf32> to vector<8x64xf32>
    %389 = vector.shape_cast %386 : vector<8x64xf32> to vector<1x8x64xf32>
    tpu.vector_store %arg8[%c0_135, %c0_136, %c0_137], %389 {strides = array<i32>} : memref<1x8x64xf32, #tpu.memory_space<vmem>>, vector<1x8x64xf32>,
    %390 = vector.extract_strided_slice %361 {offsets = [0, 0], sizes = [1, 32], strides = [1, 1]} : vector<1x64xf32> to vector<1x32xf32>
    %c0_138 = arith.constant 0 : index
    %c0_139 = arith.constant 0 : index
    %c0_140 = arith.constant 0 : index
    %391 = vector.load %arg9[%c0_138, %c0_139, %c0_140] : memref<2x1x32xf32, #tpu.memory_space<vmem>>, vector<1x1x32xf32>
    %392 = vector.shape_cast %391 : vector<1x1x32xf32> to vector<1x32xf32>
    %393 = vector.shape_cast %390 : vector<1x32xf32> to vector<1x1x32xf32>
    tpu.vector_store %arg9[%c0_138, %c0_139, %c0_140], %393 {strides = array<i32>} : memref<2x1x32xf32, #tpu.memory_space<vmem>>, vector<1x1x32xf32>,
    %394 = vector.extract_strided_slice %361 {offsets = [0, 32], sizes = [1, 32], strides = [1, 1]} : vector<1x64xf32> to vector<1x32xf32>
    %c1_141 = arith.constant 1 : index
    %c0_142 = arith.constant 0 : index
    %c0_143 = arith.constant 0 : index
    %395 = vector.load %arg9[%c1_141, %c0_142, %c0_143] : memref<2x1x32xf32, #tpu.memory_space<vmem>>, vector<1x1x32xf32>
    %396 = vector.shape_cast %395 : vector<1x1x32xf32> to vector<1x32xf32>
    %397 = vector.shape_cast %394 : vector<1x32xf32> to vector<1x1x32xf32>
    tpu.vector_store %arg9[%c1_141, %c0_142, %c0_143], %397 {strides = array<i32>} : memref<2x1x32xf32, #tpu.memory_space<vmem>>, vector<1x1x32xf32>,
    return
  }
  func.func @transform_1(%arg0: i32, %arg1: memref<8xi32, #tpu.memory_space<smem>>) -> (i32, i32, i32) {
    %c0_i32 = arith.constant 0 : i32
    %c0_i32_0 = arith.constant 0 : i32
    %c0_i32_1 = arith.constant 0 : i32
    %c0_i32_2 = arith.constant 0 : i32
    return %c0_i32, %c0_i32_0, %c0_i32_1 : i32, i32, i32
  }
  func.func @transform_2(%arg0: i32, %arg1: memref<8xi32, #tpu.memory_space<smem>>) -> (i32, i32) {
    %c0_i32 = arith.constant 0 : i32
    %c0_i32_0 = arith.constant 0 : i32
    %c0_i32_1 = arith.constant 0 : i32
    return %c0_i32, %c0_i32_0 : i32, i32
  }
  func.func @transform_3(%arg0: i32, %arg1: memref<8xi32, #tpu.memory_space<smem>>) -> (i32, i32, i32) {
    %c0_i32 = arith.constant 0 : i32
    %c0_i32_0 = arith.constant 0 : i32
    %c0_i32_1 = arith.constant 0 : i32
    %c0_i32_2 = arith.constant 0 : i32
    return %c0_i32, %c0_i32_0, %c0_i32_1 : i32, i32, i32
  }
  func.func @transform_4(%arg0: i32, %arg1: memref<8xi32, #tpu.memory_space<smem>>) -> (i32, i32) {
    %c0_i32 = arith.constant 0 : i32
    %c0_i32_0 = arith.constant 0 : i32
    %c0_i32_1 = arith.constant 0 : i32
    return %c0_i32, %c0_i32_0 : i32, i32
  }
  func.func @transform_5(%arg0: i32, %arg1: memref<8xi32, #tpu.memory_space<smem>>) -> (i32, i32) {
    %c0_i32 = arith.constant 0 : i32
    %c0_i32_0 = arith.constant 0 : i32
    %c0_i32_1 = arith.constant 0 : i32
    return %c0_i32, %c0_i32_0 : i32, i32
  }
  func.func @transform_6(%arg0: i32, %arg1: memref<8xi32, #tpu.memory_space<smem>>) -> (i32, i32, i32) {
    %c0_i32 = arith.constant 0 : i32
    %c0_i32_0 = arith.constant 0 : i32
    %c0_i32_1 = arith.constant 0 : i32
    %c0_i32_2 = arith.constant 0 : i32
    return %c0_i32, %c0_i32_0, %c0_i32_1 : i32, i32, i32
  }
  func.func @transform_7(%arg0: i32, %arg1: memref<8xi32, #tpu.memory_space<smem>>) -> (i32, i32, i32) {
    %c0_i32 = arith.constant 0 : i32
    %c0_i32_0 = arith.constant 0 : i32
    %c0_i32_1 = arith.constant 0 : i32
    %c0_i32_2 = arith.constant 0 : i32
    return %c0_i32, %c0_i32_0, %c0_i32_1 : i32, i32, i32
  }
}

</mosaic_0001>

<llo_original>
// kernel: encoder_forward.1
$region0: #{encoder_forward.1}
  #allocation0 [shape = 'u32[]', space=smem, size = 0x4, offset = 0x4, fixed_abs, tag = 'smem constant byte address 0x4 - core index']
  #allocation1 [shape = 'u32[144,128]{1,0:T(1,128)}', space=vmem, size = 0x12000, scoped, tag = 'internal scratch']
  #allocation2 [shape = 'f32[8,32]{1,0:T(8,128)}', space=vmem, size = 0x1000, scoped, tag = 'scratch operand']
  #allocation3 [shape = 's32[8]{0}', space=sflag, size = 0x20, scoped, tag = 'scratch operand']
  #allocation4 [shape = 's32[1]{0}', space=sflag, size = 0x4, scoped, tag = 'scoped memory for encoder_forward.1']
  #allocation5 [shape = 'u8[512]{0}', space=smem, size = 0x200, scoped, tag = 'prefetched SMEM operand 0']
  #allocation12 [shape = 's32[]', space=sflag, size = 0x4, offset = 0, fixed_abs, tag = 'sflag constant byte address 0x0 - dummy sync flag']
  #allocation13 [shape = 's32[]', space=sflag, size = 0x4, offset = 0, fixed_abs, tag = 'sflag constant byte address 0x0 - dummy sync flag']
  #allocation14 [shape = 's32[]', space=sflag, size = 0x4, offset = 0, fixed_abs, tag = 'sflag constant byte address 0x0 - dummy sync flag']
  #allocation15 [shape = 's32[]', space=sflag, size = 0x4, offset = 0, fixed_abs, tag = 'sflag constant byte address 0x0 - dummy sync flag']
  #allocation16 [shape = 's32[]', space=sflag, size = 0x4, offset = 0, fixed_abs, tag = 'sflag constant byte address 0x0 - dummy sync flag']
  #allocation17 [shape = 's32[]', space=sflag, size = 0x4, offset = 0, fixed_abs, tag = 'sflag constant byte address 0x0 - dummy sync flag']
  #allocation18 [shape = 's32[]', space=sflag, size = 0x4, offset = 0, fixed_abs, tag = 'sflag constant byte address 0x0 - dummy sync flag']
  #allocation19 [shape = 's32[]', space=sflag, size = 0x4, offset = 0, fixed_abs, tag = 'sflag constant byte address 0x0 - dummy sync flag']
  %s0 = inlined_call_operand.vmem [shape: s32[8], index: 0, kind: input, shape index: {}]
  %s1 = inlined_call_operand.vmem [shape: f32[50,32], index: 1, kind: input, shape index: {}]
  %s2 = inlined_call_operand.vmem [shape: f32[2,1,32], index: 2, kind: input, shape index: {}]
  %s3 = inlined_call_operand.vmem [shape: f32[32,192], index: 3, kind: input, shape index: {}]
  %s4 = inlined_call_operand.hbm [shape: f32[3,64,64], index: 4, kind: input, shape index: {}]
  %s5 = inlined_call_operand.vmem [shape: f32[1,192], index: 5, kind: input, shape index: {}]
  %s6 = inlined_call_operand.vmem [shape: f32[1,64], index: 6, kind: input, shape index: {}]
  %s7 = inlined_call_operand.hbm [shape: f32[1,8,64], index: 7, kind: output, shape index: {0}]
  %s8 = inlined_call_operand.hbm [shape: f32[2,1,32], index: 8, kind: output, shape index: {1}]
  %9 = xla_tuple %s7, %s8
  %s10 = sld [smem:[#allocation0]]
  $region282: #{encoder_forward.1} parent=0
    _
  %s12 = ssub.s32 1, %s10
  %s13 = scalar_select 0, %s12, %s10
  %s14 = sshll.u32 %s0, 4
  %s15 = int_to_ptr.vmem [resolvable:$true] %s14
  %17 = dma.vmem_to_smem %s15, 16, [#allocation5], [#allocation4]
  %18 = dma.done [#allocation4], 16
  %19 = sfence
  $region1: #{encoder_forward.1} parent=0
    #allocation6 [shape = 'u8[98304]{0}', space=vmem, size = 0x18000, scoped, tag = 'input window, operand 4, single buffered']
    #allocation7 [shape = 's32[1]{0}', space=sflag, size = 0x4, scoped, tag = 'scoped memory for encoder_forward.1']
    #allocation8 [shape = 's32[1]{0}', space=sflag, size = 0x4, scoped, tag = 'scoped memory for encoder_forward.1']
    #allocation9 [shape = 'u8[4096]{0}', space=vmem, size = 0x1000, scoped, tag = 'output window, operand 0, single buffered']
    #allocation10 [shape = 'u8[1024]{0}', space=vmem, size = 0x400, scoped, tag = 'output window, operand 1, single buffered']
    #allocation11 [shape = 's32[1]{0}', space=sflag, size = 0x4, scoped, tag = 'scoped memory for encoder_forward.1']
    %20 = vsyncpa [#allocation7], 0
    %21 = vsyncpa [#allocation8], 0
    %22 = vsyncpa [#allocation11], 0
    // Predicated region
    $region2: #{encoder_forward.1} parent=1 // pred_check
      _
    $region3: #{encoder_forward.1} parent=1 // pred_check_branch
      %24 = sbr.rel (0) target = $region5
    $region4: #{encoder_forward.1} parent=1 // pred_region
      _
    $region5: #{encoder_forward.1} parent=1 // pred_fallthru
      _
    // Predicated region
    $region6: #{encoder_forward.1} parent=1 // pred_check
      _
    $region7: #{encoder_forward.1} parent=1 // pred_check_branch
      %26 = sbr.rel (0) target = $region9
    $region8: #{encoder_forward.1} parent=1 // pred_region
      _
    $region9: #{encoder_forward.1} parent=1 // pred_fallthru
      _
    // Predicated region
    $region10: #{encoder_forward.1} parent=1 // pred_check
      _
    $region11: #{encoder_forward.1} parent=1 // pred_check_branch
      %28 = sbr.rel (0) target = $region13
    $region12: #{encoder_forward.1} parent=1 // pred_region
      %s30 = ssub.s32 3072, 3072
      %31 = vsyncadd [#allocation7], %s30
      %s32 = sshll.u32 [#allocation6], 4
      %s33 = int_to_ptr.vmem [resolvable:$true] %s32
      %38 = dma.hbm_to_vmem [thread:$0]  %s4, 3072, %s33, [#allocation7], 128, 128, 8
    $region13: #{encoder_forward.1} parent=1 // pred_fallthru
      _
    // Predicated region
    $region14: #{encoder_forward.1} parent=1 // pred_check
      _
    $region15: #{encoder_forward.1} parent=1 // pred_check_branch
      %40 = sbr.rel (0) target = $region17
    $region16: #{encoder_forward.1} parent=1 // pred_region
      _
    $region17: #{encoder_forward.1} parent=1 // pred_fallthru
      _
    // Predicated region
    $region18: #{encoder_forward.1} parent=1 // pred_check
      _
    $region19: #{encoder_forward.1} parent=1 // pred_check_branch
      %42 = sbr.rel (0) target = $region21
    $region20: #{encoder_forward.1} parent=1 // pred_region
      _
    $region21: #{encoder_forward.1} parent=1 // pred_fallthru
      _
    // Predicated region
    $region22: #{encoder_forward.1} parent=1 // pred_check
      _
    $region23: #{encoder_forward.1} parent=1 // pred_check_branch
      %44 = sbr.rel (0) target = $region25
    $region24: #{encoder_forward.1} parent=1 // pred_region
      %45 = dma.done [#allocation7], 3072
    $region25: #{encoder_forward.1} parent=1 // pred_fallthru
      _
    %s46 = sld [smem:[#allocation5]]
    %s47 = scalar_lea.vmem %s1, %s46
    %p49 = scmp.lt.u32.totalorder 1, 8
    %p50 = pneg %p49
    // Predicated region
    $region26: #{encoder_forward.1} parent=1 // pred_check
      _
    $region27: #{encoder_forward.1} parent=1 // pred_check_branch
      %52 = sbr.rel (%p49) target = $region29
    $region28: #{encoder_forward.1} parent=1 // pred_region
      %s67 = sand.u32 1, 7
      %p68 = scmp.eq.s32.totalorder %s67, 0
      %p69 = pneg %p68
      // Predicated region
      $region41: #{encoder_forward.1} parent=28 // pred_check
        _
      $region42: #{encoder_forward.1} parent=28 // pred_check_branch
        %71 = sbr.rel (%p68) target = $region44
      $region43: #{encoder_forward.1} parent=28 // pred_region
        %s72 = sand.u32 1, 7
        %s73 = ssub.s32 1, %s72
        %s74 = scalar_lea.vmem %s47, %s73
        %s75 = ssub.s32 1, %s72
        %s76 = scalar_lea.vmem [#allocation2], %s75
        %s77 = sshllo.u32 0, %s72
        loop: start=0, step=1, limit=1
        $region45: #{encoder_forward.1} parent=43 // loop_pre_header
          _
        $region46: #{encoder_forward.1} parent=43 // loop_header
          %s79 = sphi 0, %s83
          %p80 = scmp.ge.s32.totalorder %s79, 1
          %s84 = sphi %s74, %s74
          %s85 = sphi %s76, %s76
        $region47: #{encoder_forward.1} parent=43 // loop_header_branch
          %82 = sbr.rel (%p80) target = $region51
        $region48: #{encoder_forward.1} parent=43 // loop_body
          %v86 = vld [vmem:[%s84] sm:%s77]
          %87 = vst [vmem:[%s85] sm:%s77] %v86
        $region49: #{encoder_forward.1} parent=43 // loop_footer
          %s83 = sadd.s32 1, %s79
        $region50: #{encoder_forward.1} parent=43 // loop_footer_branch
          %78 = sbr.rel target = $region46
        $region51: #{encoder_forward.1} parent=43 // loop_exit
          _
      $region44: #{encoder_forward.1} parent=28 // pred_fallthru
        _
    $region29: #{encoder_forward.1} parent=1 // pred_fallthru
      _
    // Predicated region
    $region30: #{encoder_forward.1} parent=1 // pred_check
      %p53 = pneg %p49
    $region31: #{encoder_forward.1} parent=1 // pred_check_branch
      %55 = sbr.rel (%p53) target = $region33
    $region32: #{encoder_forward.1} parent=1 // pred_region
      %s56 = sshllo.u32 0, 1
      loop: start=0, step=1, limit=1
      $region34: #{encoder_forward.1} parent=32 // loop_pre_header
        _
      $region35: #{encoder_forward.1} parent=32 // loop_header
        %s58 = sphi 0, %s62
        %p59 = scmp.ge.s32.totalorder %s58, 1
        %s63 = sphi %s47, %s47
        %s64 = sphi [#allocation2], [#allocation2]
      $region36: #{encoder_forward.1} parent=32 // loop_header_branch
        %61 = sbr.rel (%p59) target = $region40
      $region37: #{encoder_forward.1} parent=32 // loop_body
        %v65 = vld [vmem:[%s63] sm:%s56]
        %66 = vst [vmem:[%s64] sm:%s56] %v65
      $region38: #{encoder_forward.1} parent=32 // loop_footer
        %s62 = sadd.s32 1, %s58
      $region39: #{encoder_forward.1} parent=32 // loop_footer_branch
        %57 = sbr.rel target = $region35
      $region40: #{encoder_forward.1} parent=32 // loop_exit
        _
    $region33: #{encoder_forward.1} parent=1 // pred_fallthru
      _
    // Predicated region
    $region52: #{encoder_forward.1} parent=1 // pred_check
      _
    $region53: #{encoder_forward.1} parent=1 // pred_check_branch
      %90 = sbr.rel (0) target = $region55
    $region54: #{encoder_forward.1} parent=1 // pred_region
      %91 = vsyncadd [#allocation3], 16
    $region55: #{encoder_forward.1} parent=1 // pred_fallthru
      _
    %s92 = sld [smem:[#allocation5 + $0x1]]
    %s93 = scalar_lea.vmem %s1, %s92
    %s94 = scalar_lea.vmem [#allocation2], 1
    %s95 = scalar_lea.sflag [#allocation3], 1
    %p97 = scmp.lt.u32.totalorder 1, 8
    %p98 = pneg %p97
    // Predicated region
    $region56: #{encoder_forward.1} parent=1 // pred_check
      _
    $region57: #{encoder_forward.1} parent=1 // pred_check_branch
      %100 = sbr.rel (%p97) target = $region59
    $region58: #{encoder_forward.1} parent=1 // pred_region
      %s115 = sand.u32 1, 7
      %p116 = scmp.eq.s32.totalorder %s115, 0
      %p117 = pneg %p116
      // Predicated region
      $region71: #{encoder_forward.1} parent=58 // pred_check
        _
      $region72: #{encoder_forward.1} parent=58 // pred_check_branch
        %119 = sbr.rel (%p116) target = $region74
      $region73: #{encoder_forward.1} parent=58 // pred_region
        %s120 = sand.u32 1, 7
        %s121 = ssub.s32 1, %s120
        %s122 = scalar_lea.vmem %s93, %s121
        %s123 = ssub.s32 1, %s120
        %s124 = scalar_lea.vmem %s94, %s123 [#allocation2]
        %s125 = sshllo.u32 0, %s120
        loop: start=0, step=1, limit=1
        $region75: #{encoder_forward.1} parent=73 // loop_pre_header
          _
        $region76: #{encoder_forward.1} parent=73 // loop_header
          %s127 = sphi 0, %s131
          %p128 = scmp.ge.s32.totalorder %s127, 1
          %s132 = sphi %s122, %s122
          %s133 = sphi %s124, %s124
        $region77: #{encoder_forward.1} parent=73 // loop_header_branch
          %130 = sbr.rel (%p128) target = $region81
        $region78: #{encoder_forward.1} parent=73 // loop_body
          %v134 = vld [vmem:[%s132] sm:%s125]
          %135 = vst [vmem:[%s133] sm:%s125] %v134
        $region79: #{encoder_forward.1} parent=73 // loop_footer
          %s131 = sadd.s32 1, %s127
        $region80: #{encoder_forward.1} parent=73 // loop_footer_branch
          %126 = sbr.rel target = $region76
        $region81: #{encoder_forward.1} parent=73 // loop_exit
          _
      $region74: #{encoder_forward.1} parent=58 // pred_fallthru
        _
    $region59: #{encoder_forward.1} parent=1 // pred_fallthru
      _
    // Predicated region
    $region60: #{encoder_forward.1} parent=1 // pred_check
      %p101 = pneg %p97
    $region61: #{encoder_forward.1} parent=1 // pred_check_branch
      %103 = sbr.rel (%p101) target = $region63
    $region62: #{encoder_forward.1} parent=1 // pred_region
      %s104 = sshllo.u32 0, 1
      loop: start=0, step=1, limit=1
      $region64: #{encoder_forward.1} parent=62 // loop_pre_header
        _
      $region65: #{encoder_forward.1} parent=62 // loop_header
        %s106 = sphi 0, %s110
        %p107 = scmp.ge.s32.totalorder %s106, 1
        %s111 = sphi %s93, %s93
        %s112 = sphi %s94, %s94
      $region66: #{encoder_forward.1} parent=62 // loop_header_branch
        %109 = sbr.rel (%p107) target = $region70
      $region67: #{encoder_forward.1} parent=62 // loop_body
        %v113 = vld [vmem:[%s111] sm:%s104]
        %114 = vst [vmem:[%s112] sm:%s104] %v113
      $region68: #{encoder_forward.1} parent=62 // loop_footer
        %s110 = sadd.s32 1, %s106
      $region69: #{encoder_forward.1} parent=62 // loop_footer_branch
        %105 = sbr.rel target = $region65
      $region70: #{encoder_forward.1} parent=62 // loop_exit
        _
    $region63: #{encoder_forward.1} parent=1 // pred_fallthru
      _
    // Predicated region
    $region82: #{encoder_forward.1} parent=1 // pred_check
      _
    $region83: #{encoder_forward.1} parent=1 // pred_check_branch
      %138 = sbr.rel (0) target = $region85
    $region84: #{encoder_forward.1} parent=1 // pred_region
      %139 = vsyncadd %s95, 16
    $region85: #{encoder_forward.1} parent=1 // pred_fallthru
      _
    %s140 = sld [smem:[#allocation5 + $0x2]]
    %s141 = scalar_lea.vmem %s1, %s140
    %s142 = scalar_lea.vmem [#allocation2], 2
    %s143 = scalar_lea.sflag [#allocation3], 2
    %p145 = scmp.lt.u32.totalorder 1, 8
    %p146 = pneg %p145
    // Predicated region
    $region86: #{encoder_forward.1} parent=1 // pred_check
      _
    $region87: #{encoder_forward.1} parent=1 // pred_check_branch
      %148 = sbr.rel (%p145) target = $region89
    $region88: #{encoder_forward.1} parent=1 // pred_region
      %s163 = sand.u32 1, 7
      %p164 = scmp.eq.s32.totalorder %s163, 0
      %p165 = pneg %p164
      // Predicated region
      $region101: #{encoder_forward.1} parent=88 // pred_check
        _
      $region102: #{encoder_forward.1} parent=88 // pred_check_branch
        %167 = sbr.rel (%p164) target = $region104
      $region103: #{encoder_forward.1} parent=88 // pred_region
        %s168 = sand.u32 1, 7
        %s169 = ssub.s32 1, %s168
        %s170 = scalar_lea.vmem %s141, %s169
        %s171 = ssub.s32 1, %s168
        %s172 = scalar_lea.vmem %s142, %s171 [#allocation2]
        %s173 = sshllo.u32 0, %s168
        loop: start=0, step=1, limit=1
        $region105: #{encoder_forward.1} parent=103 // loop_pre_header
          _
        $region106: #{encoder_forward.1} parent=103 // loop_header
          %s175 = sphi 0, %s179
          %p176 = scmp.ge.s32.totalorder %s175, 1
          %s180 = sphi %s170, %s170
          %s181 = sphi %s172, %s172
        $region107: #{encoder_forward.1} parent=103 // loop_header_branch
          %178 = sbr.rel (%p176) target = $region111
        $region108: #{encoder_forward.1} parent=103 // loop_body
          %v182 = vld [vmem:[%s180] sm:%s173]
          %183 = vst [vmem:[%s181] sm:%s173] %v182
        $region109: #{encoder_forward.1} parent=103 // loop_footer
          %s179 = sadd.s32 1, %s175
        $region110: #{encoder_forward.1} parent=103 // loop_footer_branch
          %174 = sbr.rel target = $region106
        $region111: #{encoder_forward.1} parent=103 // loop_exit
          _
      $region104: #{encoder_forward.1} parent=88 // pred_fallthru
        _
    $region89: #{encoder_forward.1} parent=1 // pred_fallthru
      _
    // Predicated region
    $region90: #{encoder_forward.1} parent=1 // pred_check
      %p149 = pneg %p145
    $region91: #{encoder_forward.1} parent=1 // pred_check_branch
      %151 = sbr.rel (%p149) target = $region93
    $region92: #{encoder_forward.1} parent=1 // pred_region
      %s152 = sshllo.u32 0, 1
      loop: start=0, step=1, limit=1
      $region94: #{encoder_forward.1} parent=92 // loop_pre_header
        _
      $region95: #{encoder_forward.1} parent=92 // loop_header
        %s154 = sphi 0, %s158
        %p155 = scmp.ge.s32.totalorder %s154, 1
        %s159 = sphi %s141, %s141
        %s160 = sphi %s142, %s142
      $region96: #{encoder_forward.1} parent=92 // loop_header_branch
        %157 = sbr.rel (%p155) target = $region100
      $region97: #{encoder_forward.1} parent=92 // loop_body
        %v161 = vld [vmem:[%s159] sm:%s152]
        %162 = vst [vmem:[%s160] sm:%s152] %v161
      $region98: #{encoder_forward.1} parent=92 // loop_footer
        %s158 = sadd.s32 1, %s154
      $region99: #{encoder_forward.1} parent=92 // loop_footer_branch
        %153 = sbr.rel target = $region95
      $region100: #{encoder_forward.1} parent=92 // loop_exit
        _
    $region93: #{encoder_forward.1} parent=1 // pred_fallthru
      _
    // Predicated region
    $region112: #{encoder_forward.1} parent=1 // pred_check
      _
    $region113: #{encoder_forward.1} parent=1 // pred_check_branch
      %186 = sbr.rel (0) target = $region115
    $region114: #{encoder_forward.1} parent=1 // pred_region
      %187 = vsyncadd %s143, 16
    $region115: #{encoder_forward.1} parent=1 // pred_fallthru
      _
    %s188 = sld [smem:[#allocation5 + $0x3]]
    %s189 = scalar_lea.vmem %s1, %s188
    %s190 = scalar_lea.vmem [#allocation2], 3
    %s191 = scalar_lea.sflag [#allocation3], 3
    %p193 = scmp.lt.u32.totalorder 1, 8
    %p194 = pneg %p193
    // Predicated region
    $region116: #{encoder_forward.1} parent=1 // pred_check
      _
    $region117: #{encoder_forward.1} parent=1 // pred_check_branch
      %196 = sbr.rel (%p193) target = $region119
    $region118: #{encoder_forward.1} parent=1 // pred_region
      %s211 = sand.u32 1, 7
      %p212 = scmp.eq.s32.totalorder %s211, 0
      %p213 = pneg %p212
      // Predicated region
      $region131: #{encoder_forward.1} parent=118 // pred_check
        _
      $region132: #{encoder_forward.1} parent=118 // pred_check_branch
        %215 = sbr.rel (%p212) target = $region134
      $region133: #{encoder_forward.1} parent=118 // pred_region
        %s216 = sand.u32 1, 7
        %s217 = ssub.s32 1, %s216
        %s218 = scalar_lea.vmem %s189, %s217
        %s219 = ssub.s32 1, %s216
        %s220 = scalar_lea.vmem %s190, %s219 [#allocation2]
        %s221 = sshllo.u32 0, %s216
        loop: start=0, step=1, limit=1
        $region135: #{encoder_forward.1} parent=133 // loop_pre_header
          _
        $region136: #{encoder_forward.1} parent=133 // loop_header
          %s223 = sphi 0, %s227
          %p224 = scmp.ge.s32.totalorder %s223, 1
          %s228 = sphi %s218, %s218
          %s229 = sphi %s220, %s220
        $region137: #{encoder_forward.1} parent=133 // loop_header_branch
          %226 = sbr.rel (%p224) target = $region141
        $region138: #{encoder_forward.1} parent=133 // loop_body
          %v230 = vld [vmem:[%s228] sm:%s221]
          %231 = vst [vmem:[%s229] sm:%s221] %v230
        $region139: #{encoder_forward.1} parent=133 // loop_footer
          %s227 = sadd.s32 1, %s223
        $region140: #{encoder_forward.1} parent=133 // loop_footer_branch
          %222 = sbr.rel target = $region136
        $region141: #{encoder_forward.1} parent=133 // loop_exit
          _
      $region134: #{encoder_forward.1} parent=118 // pred_fallthru
        _
    $region119: #{encoder_forward.1} parent=1 // pred_fallthru
      _
    // Predicated region
    $region120: #{encoder_forward.1} parent=1 // pred_check
      %p197 = pneg %p193
    $region121: #{encoder_forward.1} parent=1 // pred_check_branch
      %199 = sbr.rel (%p197) target = $region123
    $region122: #{encoder_forward.1} parent=1 // pred_region
      %s200 = sshllo.u32 0, 1
      loop: start=0, step=1, limit=1
      $region124: #{encoder_forward.1} parent=122 // loop_pre_header
        _
      $region125: #{encoder_forward.1} parent=122 // loop_header
        %s202 = sphi 0, %s206
        %p203 = scmp.ge.s32.totalorder %s202, 1
        %s207 = sphi %s189, %s189
        %s208 = sphi %s190, %s190
      $region126: #{encoder_forward.1} parent=122 // loop_header_branch
        %205 = sbr.rel (%p203) target = $region130
      $region127: #{encoder_forward.1} parent=122 // loop_body
        %v209 = vld [vmem:[%s207] sm:%s200]
        %210 = vst [vmem:[%s208] sm:%s200] %v209
      $region128: #{encoder_forward.1} parent=122 // loop_footer
        %s206 = sadd.s32 1, %s202
      $region129: #{encoder_forward.1} parent=122 // loop_footer_branch
        %201 = sbr.rel target = $region125
      $region130: #{encoder_forward.1} parent=122 // loop_exit
        _
    $region123: #{encoder_forward.1} parent=1 // pred_fallthru
      _
    // Predicated region
    $region142: #{encoder_forward.1} parent=1 // pred_check
      _
    $region143: #{encoder_forward.1} parent=1 // pred_check_branch
      %234 = sbr.rel (0) target = $region145
    $region144: #{encoder_forward.1} parent=1 // pred_region
      %235 = vsyncadd %s191, 16
    $region145: #{encoder_forward.1} parent=1 // pred_fallthru
      _
    %s236 = sld [smem:[#allocation5 + $0x4]]
    %s237 = scalar_lea.vmem %s1, %s236
    %s238 = scalar_lea.vmem [#allocation2], 4
    %s239 = scalar_lea.sflag [#allocation3], 4
    %p241 = scmp.lt.u32.totalorder 1, 8
    %p242 = pneg %p241
    // Predicated region
    $region146: #{encoder_forward.1} parent=1 // pred_check
      _
    $region147: #{encoder_forward.1} parent=1 // pred_check_branch
      %244 = sbr.rel (%p241) target = $region149
    $region148: #{encoder_forward.1} parent=1 // pred_region
      %s259 = sand.u32 1, 7
      %p260 = scmp.eq.s32.totalorder %s259, 0
      %p261 = pneg %p260
      // Predicated region
      $region161: #{encoder_forward.1} parent=148 // pred_check
        _
      $region162: #{encoder_forward.1} parent=148 // pred_check_branch
        %263 = sbr.rel (%p260) target = $region164
      $region163: #{encoder_forward.1} parent=148 // pred_region
        %s264 = sand.u32 1, 7
        %s265 = ssub.s32 1, %s264
        %s266 = scalar_lea.vmem %s237, %s265
        %s267 = ssub.s32 1, %s264
        %s268 = scalar_lea.vmem %s238, %s267 [#allocation2]
        %s269 = sshllo.u32 0, %s264
        loop: start=0, step=1, limit=1
        $region165: #{encoder_forward.1} parent=163 // loop_pre_header
          _
        $region166: #{encoder_forward.1} parent=163 // loop_header
          %s271 = sphi 0, %s275
          %p272 = scmp.ge.s32.totalorder %s271, 1
          %s276 = sphi %s266, %s266
          %s277 = sphi %s268, %s268
        $region167: #{encoder_forward.1} parent=163 // loop_header_branch
          %274 = sbr.rel (%p272) target = $region171
        $region168: #{encoder_forward.1} parent=163 // loop_body
          %v278 = vld [vmem:[%s276] sm:%s269]
          %279 = vst [vmem:[%s277] sm:%s269] %v278
        $region169: #{encoder_forward.1} parent=163 // loop_footer
          %s275 = sadd.s32 1, %s271
        $region170: #{encoder_forward.1} parent=163 // loop_footer_branch
          %270 = sbr.rel target = $region166
        $region171: #{encoder_forward.1} parent=163 // loop_exit
          _
      $region164: #{encoder_forward.1} parent=148 // pred_fallthru
        _
    $region149: #{encoder_forward.1} parent=1 // pred_fallthru
      _
    // Predicated region
    $region150: #{encoder_forward.1} parent=1 // pred_check
      %p245 = pneg %p241
    $region151: #{encoder_forward.1} parent=1 // pred_check_branch
      %247 = sbr.rel (%p245) target = $region153
    $region152: #{encoder_forward.1} parent=1 // pred_region
      %s248 = sshllo.u32 0, 1
      loop: start=0, step=1, limit=1
      $region154: #{encoder_forward.1} parent=152 // loop_pre_header
        _
      $region155: #{encoder_forward.1} parent=152 // loop_header
        %s250 = sphi 0, %s254
        %p251 = scmp.ge.s32.totalorder %s250, 1
        %s255 = sphi %s237, %s237
        %s256 = sphi %s238, %s238
      $region156: #{encoder_forward.1} parent=152 // loop_header_branch
        %253 = sbr.rel (%p251) target = $region160
      $region157: #{encoder_forward.1} parent=152 // loop_body
        %v257 = vld [vmem:[%s255] sm:%s248]
        %258 = vst [vmem:[%s256] sm:%s248] %v257
      $region158: #{encoder_forward.1} parent=152 // loop_footer
        %s254 = sadd.s32 1, %s250
      $region159: #{encoder_forward.1} parent=152 // loop_footer_branch
        %249 = sbr.rel target = $region155
      $region160: #{encoder_forward.1} parent=152 // loop_exit
        _
    $region153: #{encoder_forward.1} parent=1 // pred_fallthru
      _
    // Predicated region
    $region172: #{encoder_forward.1} parent=1 // pred_check
      _
    $region173: #{encoder_forward.1} parent=1 // pred_check_branch
      %282 = sbr.rel (0) target = $region175
    $region174: #{encoder_forward.1} parent=1 // pred_region
      %283 = vsyncadd %s239, 16
    $region175: #{encoder_forward.1} parent=1 // pred_fallthru
      _
    %s284 = sld [smem:[#allocation5 + $0x5]]
    %s285 = scalar_lea.vmem %s1, %s284
    %s286 = scalar_lea.vmem [#allocation2], 5
    %s287 = scalar_lea.sflag [#allocation3], 5
    %p289 = scmp.lt.u32.totalorder 1, 8
    %p290 = pneg %p289
    // Predicated region
    $region176: #{encoder_forward.1} parent=1 // pred_check
      _
    $region177: #{encoder_forward.1} parent=1 // pred_check_branch
      %292 = sbr.rel (%p289) target = $region179
    $region178: #{encoder_forward.1} parent=1 // pred_region
      %s307 = sand.u32 1, 7
      %p308 = scmp.eq.s32.totalorder %s307, 0
      %p309 = pneg %p308
      // Predicated region
      $region191: #{encoder_forward.1} parent=178 // pred_check
        _
      $region192: #{encoder_forward.1} parent=178 // pred_check_branch
        %311 = sbr.rel (%p308) target = $region194
      $region193: #{encoder_forward.1} parent=178 // pred_region
        %s312 = sand.u32 1, 7
        %s313 = ssub.s32 1, %s312
        %s314 = scalar_lea.vmem %s285, %s313
        %s315 = ssub.s32 1, %s312
        %s316 = scalar_lea.vmem %s286, %s315 [#allocation2]
        %s317 = sshllo.u32 0, %s312
        loop: start=0, step=1, limit=1
        $region195: #{encoder_forward.1} parent=193 // loop_pre_header
          _
        $region196: #{encoder_forward.1} parent=193 // loop_header
          %s319 = sphi 0, %s323
          %p320 = scmp.ge.s32.totalorder %s319, 1
          %s324 = sphi %s314, %s314
          %s325 = sphi %s316, %s316
        $region197: #{encoder_forward.1} parent=193 // loop_header_branch
          %322 = sbr.rel (%p320) target = $region201
        $region198: #{encoder_forward.1} parent=193 // loop_body
          %v326 = vld [vmem:[%s324] sm:%s317]
          %327 = vst [vmem:[%s325] sm:%s317] %v326
        $region199: #{encoder_forward.1} parent=193 // loop_footer
          %s323 = sadd.s32 1, %s319
        $region200: #{encoder_forward.1} parent=193 // loop_footer_branch
          %318 = sbr.rel target = $region196
        $region201: #{encoder_forward.1} parent=193 // loop_exit
          _
      $region194: #{encoder_forward.1} parent=178 // pred_fallthru
        _
    $region179: #{encoder_forward.1} parent=1 // pred_fallthru
      _
    // Predicated region
    $region180: #{encoder_forward.1} parent=1 // pred_check
      %p293 = pneg %p289
    $region181: #{encoder_forward.1} parent=1 // pred_check_branch
      %295 = sbr.rel (%p293) target = $region183
    $region182: #{encoder_forward.1} parent=1 // pred_region
      %s296 = sshllo.u32 0, 1
      loop: start=0, step=1, limit=1
      $region184: #{encoder_forward.1} parent=182 // loop_pre_header
        _
      $region185: #{encoder_forward.1} parent=182 // loop_header
        %s298 = sphi 0, %s302
        %p299 = scmp.ge.s32.totalorder %s298, 1
        %s303 = sphi %s285, %s285
        %s304 = sphi %s286, %s286
      $region186: #{encoder_forward.1} parent=182 // loop_header_branch
        %301 = sbr.rel (%p299) target = $region190
      $region187: #{encoder_forward.1} parent=182 // loop_body
        %v305 = vld [vmem:[%s303] sm:%s296]
        %306 = vst [vmem:[%s304] sm:%s296] %v305
      $region188: #{encoder_forward.1} parent=182 // loop_footer
        %s302 = sadd.s32 1, %s298
      $region189: #{encoder_forward.1} parent=182 // loop_footer_branch
        %297 = sbr.rel target = $region185
      $region190: #{encoder_forward.1} parent=182 // loop_exit
        _
    $region183: #{encoder_forward.1} parent=1 // pred_fallthru
      _
    // Predicated region
    $region202: #{encoder_forward.1} parent=1 // pred_check
      _
    $region203: #{encoder_forward.1} parent=1 // pred_check_branch
      %330 = sbr.rel (0) target = $region205
    $region204: #{encoder_forward.1} parent=1 // pred_region
      %331 = vsyncadd %s287, 16
    $region205: #{encoder_forward.1} parent=1 // pred_fallthru
      _
    %s332 = sld [smem:[#allocation5 + $0x6]]
    %s333 = scalar_lea.vmem %s1, %s332
    %s334 = scalar_lea.vmem [#allocation2], 6
    %s335 = scalar_lea.sflag [#allocation3], 6
    %p337 = scmp.lt.u32.totalorder 1, 8
    %p338 = pneg %p337
    // Predicated region
    $region206: #{encoder_forward.1} parent=1 // pred_check
      _
    $region207: #{encoder_forward.1} parent=1 // pred_check_branch
      %340 = sbr.rel (%p337) target = $region209
    $region208: #{encoder_forward.1} parent=1 // pred_region
      %s355 = sand.u32 1, 7
      %p356 = scmp.eq.s32.totalorder %s355, 0
      %p357 = pneg %p356
      // Predicated region
      $region221: #{encoder_forward.1} parent=208 // pred_check
        _
      $region222: #{encoder_forward.1} parent=208 // pred_check_branch
        %359 = sbr.rel (%p356) target = $region224
      $region223: #{encoder_forward.1} parent=208 // pred_region
        %s360 = sand.u32 1, 7
        %s361 = ssub.s32 1, %s360
        %s362 = scalar_lea.vmem %s333, %s361
        %s363 = ssub.s32 1, %s360
        %s364 = scalar_lea.vmem %s334, %s363 [#allocation2]
        %s365 = sshllo.u32 0, %s360
        loop: start=0, step=1, limit=1
        $region225: #{encoder_forward.1} parent=223 // loop_pre_header
          _
        $region226: #{encoder_forward.1} parent=223 // loop_header
          %s367 = sphi 0, %s371
          %p368 = scmp.ge.s32.totalorder %s367, 1
          %s372 = sphi %s362, %s362
          %s373 = sphi %s364, %s364
        $region227: #{encoder_forward.1} parent=223 // loop_header_branch
          %370 = sbr.rel (%p368) target = $region231
        $region228: #{encoder_forward.1} parent=223 // loop_body
          %v374 = vld [vmem:[%s372] sm:%s365]
          %375 = vst [vmem:[%s373] sm:%s365] %v374
        $region229: #{encoder_forward.1} parent=223 // loop_footer
          %s371 = sadd.s32 1, %s367
        $region230: #{encoder_forward.1} parent=223 // loop_footer_branch
          %366 = sbr.rel target = $region226
        $region231: #{encoder_forward.1} parent=223 // loop_exit
          _
      $region224: #{encoder_forward.1} parent=208 // pred_fallthru
        _
    $region209: #{encoder_forward.1} parent=1 // pred_fallthru
      _
    // Predicated region
    $region210: #{encoder_forward.1} parent=1 // pred_check
      %p341 = pneg %p337
    $region211: #{encoder_forward.1} parent=1 // pred_check_branch
      %343 = sbr.rel (%p341) target = $region213
    $region212: #{encoder_forward.1} parent=1 // pred_region
      %s344 = sshllo.u32 0, 1
      loop: start=0, step=1, limit=1
      $region214: #{encoder_forward.1} parent=212 // loop_pre_header
        _
      $region215: #{encoder_forward.1} parent=212 // loop_header
        %s346 = sphi 0, %s350
        %p347 = scmp.ge.s32.totalorder %s346, 1
        %s351 = sphi %s333, %s333
        %s352 = sphi %s334, %s334
      $region216: #{encoder_forward.1} parent=212 // loop_header_branch
        %349 = sbr.rel (%p347) target = $region220
      $region217: #{encoder_forward.1} parent=212 // loop_body
        %v353 = vld [vmem:[%s351] sm:%s344]
        %354 = vst [vmem:[%s352] sm:%s344] %v353
      $region218: #{encoder_forward.1} parent=212 // loop_footer
        %s350 = sadd.s32 1, %s346
      $region219: #{encoder_forward.1} parent=212 // loop_footer_branch
        %345 = sbr.rel target = $region215
      $region220: #{encoder_forward.1} parent=212 // loop_exit
        _
    $region213: #{encoder_forward.1} parent=1 // pred_fallthru
      _
    // Predicated region
    $region232: #{encoder_forward.1} parent=1 // pred_check
      _
    $region233: #{encoder_forward.1} parent=1 // pred_check_branch
      %378 = sbr.rel (0) target = $region235
    $region234: #{encoder_forward.1} parent=1 // pred_region
      %379 = vsyncadd %s335, 16
    $region235: #{encoder_forward.1} parent=1 // pred_fallthru
      _
    %s380 = sld [smem:[#allocation5 + $0x7]]
    %s381 = scalar_lea.vmem %s1, %s380
    %s382 = scalar_lea.vmem [#allocation2], 7
    %s383 = scalar_lea.sflag [#allocation3], 7
    %p385 = scmp.lt.u32.totalorder 1, 8
    %p386 = pneg %p385
    // Predicated region
    $region236: #{encoder_forward.1} parent=1 // pred_check
      _
    $region237: #{encoder_forward.1} parent=1 // pred_check_branch
      %388 = sbr.rel (%p385) target = $region239
    $region238: #{encoder_forward.1} parent=1 // pred_region
      %s403 = sand.u32 1, 7
      %p404 = scmp.eq.s32.totalorder %s403, 0
      %p405 = pneg %p404
      // Predicated region
      $region251: #{encoder_forward.1} parent=238 // pred_check
        _
      $region252: #{encoder_forward.1} parent=238 // pred_check_branch
        %407 = sbr.rel (%p404) target = $region254
      $region253: #{encoder_forward.1} parent=238 // pred_region
        %s408 = sand.u32 1, 7
        %s409 = ssub.s32 1, %s408
        %s410 = scalar_lea.vmem %s381, %s409
        %s411 = ssub.s32 1, %s408
        %s412 = scalar_lea.vmem %s382, %s411 [#allocation2]
        %s413 = sshllo.u32 0, %s408
        loop: start=0, step=1, limit=1
        $region255: #{encoder_forward.1} parent=253 // loop_pre_header
          _
        $region256: #{encoder_forward.1} parent=253 // loop_header
          %s415 = sphi 0, %s419
          %p416 = scmp.ge.s32.totalorder %s415, 1
          %s420 = sphi %s410, %s410
          %s421 = sphi %s412, %s412
        $region257: #{encoder_forward.1} parent=253 // loop_header_branch
          %418 = sbr.rel (%p416) target = $region261
        $region258: #{encoder_forward.1} parent=253 // loop_body
          %v422 = vld [vmem:[%s420] sm:%s413]
          %423 = vst [vmem:[%s421] sm:%s413] %v422
        $region259: #{encoder_forward.1} parent=253 // loop_footer
          %s419 = sadd.s32 1, %s415
        $region260: #{encoder_forward.1} parent=253 // loop_footer_branch
          %414 = sbr.rel target = $region256
        $region261: #{encoder_forward.1} parent=253 // loop_exit
          _
      $region254: #{encoder_forward.1} parent=238 // pred_fallthru
        _
    $region239: #{encoder_forward.1} parent=1 // pred_fallthru
      _
    // Predicated region
    $region240: #{encoder_forward.1} parent=1 // pred_check
      %p389 = pneg %p385
    $region241: #{encoder_forward.1} parent=1 // pred_check_branch
      %391 = sbr.rel (%p389) target = $region243
    $region242: #{encoder_forward.1} parent=1 // pred_region
      %s392 = sshllo.u32 0, 1
      loop: start=0, step=1, limit=1
      $region244: #{encoder_forward.1} parent=242 // loop_pre_header
        _
      $region245: #{encoder_forward.1} parent=242 // loop_header
        %s394 = sphi 0, %s398
        %p395 = scmp.ge.s32.totalorder %s394, 1
        %s399 = sphi %s381, %s381
        %s400 = sphi %s382, %s382
      $region246: #{encoder_forward.1} parent=242 // loop_header_branch
        %397 = sbr.rel (%p395) target = $region250
      $region247: #{encoder_forward.1} parent=242 // loop_body
        %v401 = vld [vmem:[%s399] sm:%s392]
        %402 = vst [vmem:[%s400] sm:%s392] %v401
      $region248: #{encoder_forward.1} parent=242 // loop_footer
        %s398 = sadd.s32 1, %s394
      $region249: #{encoder_forward.1} parent=242 // loop_footer_branch
        %393 = sbr.rel target = $region245
      $region250: #{encoder_forward.1} parent=242 // loop_exit
        _
    $region243: #{encoder_forward.1} parent=1 // pred_fallthru
      _
    // Predicated region
    $region262: #{encoder_forward.1} parent=1 // pred_check
      _
    $region263: #{encoder_forward.1} parent=1 // pred_check_branch
      %426 = sbr.rel (0) target = $region265
    $region264: #{encoder_forward.1} parent=1 // pred_region
      %427 = vsyncadd %s383, 16
    $region265: #{encoder_forward.1} parent=1 // pred_fallthru
      _
    %s428 = sld [smem:[#allocation5]]
    %s429 = smul.u32 1, 1
    %s430 = sshll.u32 %s429, 4
    %431 = dma.done [#allocation3], %s430
    %s432 = sld [smem:[#allocation5 + $0x1]]
    %s433 = sshll.u32 %s429, 4
    %434 = dma.done %s95, %s433
    %s435 = sld [smem:[#allocation5 + $0x2]]
    %s436 = sshll.u32 %s429, 4
    %437 = dma.done %s143, %s436
    %s438 = sld [smem:[#allocation5 + $0x3]]
    %s439 = sshll.u32 %s429, 4
    %440 = dma.done %s191, %s439
    %s441 = sld [smem:[#allocation5 + $0x4]]
    %s442 = sshll.u32 %s429, 4
    %443 = dma.done %s239, %s442
    %s444 = sld [smem:[#allocation5 + $0x5]]
    %s445 = sshll.u32 %s429, 4
    %446 = dma.done %s287, %s445
    %s447 = sld [smem:[#allocation5 + $0x6]]
    %s448 = sshll.u32 %s429, 4
    %449 = dma.done %s335, %s448
    %s450 = sld [smem:[#allocation5 + $0x7]]
    %s451 = sshll.u32 %s429, 4
    %452 = dma.done %s383, %s451
    %v453 = vld [vmem:[#allocation2] sm:$0xff]
    %v454 = vld [vmem:[%s3] sm:$0xff]
    %v455 = vld [vmem:[%s3 + $0x8] sm:$0xff]
    %v456 = vld [vmem:[%s3 + $0x10] sm:$0xff]
    %v457 = vld [vmem:[%s3 + $0x18] sm:$0xff]
    %v458 = vld [vmem:[%s3 + $0x20] sm:$0xff]
    %v459 = vld [vmem:[%s3 + $0x28] sm:$0xff]
    %v460 = vld [vmem:[%s3 + $0x30] sm:$0xff]
    %v461 = vld [vmem:[%s3 + $0x38] sm:$0xff]
    %v462 = vld [vmem:[%s5] sm:$0x3]
    %v464 = vlaneseq
    %v465 = vshrl.u32 %v464, 7
    %v466 = vsub.s32 0, %v465
    %v467 = vrot.slane %v462, %v466
    %v468 = vlaneseq
    %v469 = vshrl.u32 %v468, 7
    %v470 = vsub.s32 1, %v469
    %v471 = vrot.slane %v462, %v470
    %vm474 = vcmask 261120
    %v476 = vsel %vm474, %v453, 0
    %478 = vmatprep.subr.mxu0 %v455
    %479 = vmatpush1.msra.mxu0 %v454
    %480 = vmatprep.subr.mxu0 %v457
    %481 = vmatpush1.msra.mxu0 %v456
    %482 = vmatprep.subr.mxu0 %v459
    %483 = vmatpush1.msra.mxu0 %v458
    %484 = vmatprep.subr.mxu0 %v461
    %485 = vmatpush1.msra.mxu0 %v460
    %486 = vmatprep.subr.mxu0 0.0
    %487 = vmatpush1.msra.mxu0 0.0
    %488 = vmatprep.subr.mxu0 0.0
    %489 = vmatpush1.msra.mxu0 0.0
    %490 = vmatprep.subr.mxu0 0.0
    %491 = vmatpush1.msra.mxu0 0.0
    %492 = vmatprep.subr.mxu0 0.0
    %493 = vmatpush1.msra.mxu0 0.0
    %494 = vmatprep.subr.mxu0 0.0
    %495 = vmatpush1.msra.mxu0 0.0
    %496 = vmatprep.subr.mxu0 0.0
    %497 = vmatpush1.msra.mxu0 0.0
    %498 = vmatprep.subr.mxu0 0.0
    %499 = vmatpush1.msra.mxu0 0.0
    %500 = vmatprep.subr.mxu0 0.0
    %501 = vmatpush1.msra.mxu0 0.0
    %502 = vmatprep.subr.mxu0 0.0
    %503 = vmatpush1.msra.mxu0 0.0
    %504 = vmatprep.subr.mxu0 0.0
    %505 = vmatpush1.msra.mxu0 0.0
    %506 = vmatprep.subr.mxu0 0.0
    %507 = vmatpush1.msra.mxu0 0.0
    %508 = vmatprep.subr.mxu0 0.0
    %509 = vmatpush1.msra.mxu0 0.0
    %510 = vmatprep.subr.mxu0 0.0
    %511 = vmatpush1.msra.mxu0 0.0
    %512 = vmatprep.subr.mxu0 0.0
    %513 = vmatpush1.msra.mxu0 0.0
    %514 = vmatprep.subr.mxu0 0.0
    %515 = vmatpush1.msra.mxu0 0.0
    %516 = vmatprep.subr.mxu0 0.0
    %517 = vmatpush1.msra.mxu0 0.0
    %518 = vmatprep.subr.mxu0 0.0
    %519 = vmatpush1.msra.mxu0 0.0
    %520 = vmatprep.subr.mxu0 0.0
    %521 = vmatpush1.msra.mxu0 0.0
    %522 = vmatprep.subr.mxu0 0.0
    %523 = vmatpush1.msra.mxu0 0.0
    %524 = vmatprep.subr.mxu0 0.0
    %525 = vmatpush1.msra.mxu0 0.0
    %526 = vmatprep.subr.mxu0 0.0
    %527 = vmatpush1.msra.mxu0 0.0
    %528 = vmatprep.subr.mxu0 0.0
    %529 = vmatpush1.msra.mxu0 0.0
    %530 = vmatprep.subr.mxu0 0.0
    %531 = vmatpush1.msra.mxu0 0.0
    %532 = vmatprep.subr.mxu0 0.0
    %533 = vmatpush1.msra.mxu0 0.0
    %534 = vmatprep.subr.mxu0 0.0
    %535 = vmatpush1.msra.mxu0 0.0
    %536 = vmatprep.subr.mxu0 0.0
    %537 = vmatpush1.msra.mxu0 0.0
    %538 = vmatprep.subr.mxu0 0.0
    %539 = vmatpush1.msra.mxu0 0.0
    %540 = vmatprep.subr.mxu0 0.0
    %541 = vmatpush1.msra.mxu0 0.0
    %542 = vmatprep.mubr.f32.mxu0 0.0
    %543 = vmatmul.mubr.f32.gmra.mrb[0].mxu0 %v476
    %v544 = vpop.f32.mrb[0].mxu0
    %v545 = vadd.f32 %v467, %v544
    %v546 = vpop.f32.mrb[0].mxu0
    %v547 = vadd.f32 %v471, %v546
    %548 = vdwg.mxu0
    %v549 = vld [vmem:[#allocation6] sm:$0xff]
    %v550 = vld [vmem:[#allocation6 + $0x8] sm:$0xff]
    %v551 = vld [vmem:[#allocation6 + $0x10] sm:$0xff]
    %v552 = vld [vmem:[#allocation6 + $0x18] sm:$0xff]
    %v553 = vld [vmem:[#allocation6 + $0x20] sm:$0xff]
    %v554 = vld [vmem:[#allocation6 + $0x28] sm:$0xff]
    %v555 = vld [vmem:[#allocation6 + $0x30] sm:$0xff]
    %v556 = vld [vmem:[#allocation6 + $0x38] sm:$0xff]
    %s557 = scalar_lea.vmem [#allocation6], 64
    %v558 = vld [vmem:[%s557] sm:$0xff]
    %v559 = vld [vmem:[%s557 + $0x8] sm:$0xff]
    %v560 = vld [vmem:[%s557 + $0x10] sm:$0xff]
    %v561 = vld [vmem:[%s557 + $0x18] sm:$0xff]
    %v562 = vld [vmem:[%s557 + $0x20] sm:$0xff]
    %v563 = vld [vmem:[%s557 + $0x28] sm:$0xff]
    %v564 = vld [vmem:[%s557 + $0x30] sm:$0xff]
    %v565 = vld [vmem:[%s557 + $0x38] sm:$0xff]
    %s566 = scalar_lea.vmem [#allocation6], 128
    %v567 = vld [vmem:[%s566] sm:$0xff]
    %v568 = vld [vmem:[%s566 + $0x8] sm:$0xff]
    %v569 = vld [vmem:[%s566 + $0x10] sm:$0xff]
    %v570 = vld [vmem:[%s566 + $0x18] sm:$0xff]
    %v571 = vld [vmem:[%s566 + $0x20] sm:$0xff]
    %v572 = vld [vmem:[%s566 + $0x28] sm:$0xff]
    %v573 = vld [vmem:[%s566 + $0x30] sm:$0xff]
    %v574 = vld [vmem:[%s566 + $0x38] sm:$0xff]
    %v575 = vld [vmem:[%s6] sm:$0x1]
    %v576 = vld [vmem:[%s2] sm:$0x1]
    %s577 = scalar_lea.vmem %s2, 1
    %v578 = vld [vmem:[%s577] sm:$0x1]
    %v580 = vlaneseq
    %v581 = vshrl.u32 %v580, 7
    %v582 = vsub.s32 0, %v581
    %v583 = vrot.slane %v578, %v582
    %584 = vrot.lane.b32.xlu0 %v583, 32
    %v585 = vpop.permute.xlu0 %584
    %v587 = vsel %vm474, %v576, %v585
    %v589 = vrot.slane %v545, 7
    %v591 = vsel %vm474, %v545, %v589
    %592 = vrot.lane.b32.xlu0 %v545, 64
    %v593 = vpop.permute.xlu0 %592
    %595 = vrot.lane.b32.xlu0 %v589, 64
    %v596 = vpop.permute.xlu0 %595
    %v598 = vsel %vm474, %v593, %v596
    %v600 = vrot.slane %v547, 7
    %v602 = vsel %vm474, %v547, %v600
    %vm603 = vcmask 523264
    %v605 = vsel %vm603, %v587, 0
    %607 = vmatprep.subr.mxu0 0.0
    %608 = vmatpush1.msra.mxu0 %v549
    %609 = vmatprep.subr.mxu0 0.0
    %610 = vmatpush1.msra.mxu0 %v550
    %611 = vmatprep.subr.mxu0 0.0
    %612 = vmatpush1.msra.mxu0 %v551
    %613 = vmatprep.subr.mxu0 0.0
    %614 = vmatpush1.msra.mxu0 %v552
    %615 = vmatprep.subr.mxu0 0.0
    %616 = vmatpush1.msra.mxu0 %v553
    %617 = vmatprep.subr.mxu0 0.0
    %618 = vmatpush1.msra.mxu0 %v554
    %619 = vmatprep.subr.mxu0 0.0
    %620 = vmatpush1.msra.mxu0 %v555
    %621 = vmatprep.subr.mxu0 0.0
    %622 = vmatpush1.msra.mxu0 %v556
    %623 = vmatprep.subr.mxu0 0.0
    %624 = vmatpush1.msra.mxu0 0.0
    %625 = vmatprep.subr.mxu0 0.0
    %626 = vmatpush1.msra.mxu0 0.0
    %627 = vmatprep.subr.mxu0 0.0
    %628 = vmatpush1.msra.mxu0 0.0
    %629 = vmatprep.subr.mxu0 0.0
    %630 = vmatpush1.msra.mxu0 0.0
    %631 = vmatprep.subr.mxu0 0.0
    %632 = vmatpush1.msra.mxu0 0.0
    %633 = vmatprep.subr.mxu0 0.0
    %634 = vmatpush1.msra.mxu0 0.0
    %635 = vmatprep.subr.mxu0 0.0
    %636 = vmatpush1.msra.mxu0 0.0
    %637 = vmatprep.subr.mxu0 0.0
    %638 = vmatpush1.msra.mxu0 0.0
    %639 = vmatprep.subr.mxu0 0.0
    %640 = vmatpush1.msra.mxu0 0.0
    %641 = vmatprep.subr.mxu0 0.0
    %642 = vmatpush1.msra.mxu0 0.0
    %643 = vmatprep.subr.mxu0 0.0
    %644 = vmatpush1.msra.mxu0 0.0
    %645 = vmatprep.subr.mxu0 0.0
    %646 = vmatpush1.msra.mxu0 0.0
    %647 = vmatprep.subr.mxu0 0.0
    %648 = vmatpush1.msra.mxu0 0.0
    %649 = vmatprep.subr.mxu0 0.0
    %650 = vmatpush1.msra.mxu0 0.0
    %651 = vmatprep.subr.mxu0 0.0
    %652 = vmatpush1.msra.mxu0 0.0
    %653 = vmatprep.subr.mxu0 0.0
    %654 = vmatpush1.msra.mxu0 0.0
    %655 = vmatprep.subr.mxu0 0.0
    %656 = vmatpush1.msra.mxu0 0.0
    %657 = vmatprep.subr.mxu0 0.0
    %658 = vmatpush1.msra.mxu0 0.0
    %659 = vmatprep.subr.mxu0 0.0
    %660 = vmatpush1.msra.mxu0 0.0
    %661 = vmatprep.subr.mxu0 0.0
    %662 = vmatpush1.msra.mxu0 0.0
    %663 = vmatprep.subr.mxu0 0.0
    %664 = vmatpush1.msra.mxu0 0.0
    %665 = vmatprep.subr.mxu0 0.0
    %666 = vmatpush1.msra.mxu0 0.0
    %667 = vmatprep.subr.mxu0 0.0
    %668 = vmatpush1.msra.mxu0 0.0
    %669 = vmatprep.subr.mxu0 0.0
    %670 = vmatpush1.msra.mxu0 0.0
    %671 = vmatprep.mubr.f32.mxu0 0.0
    %672 = vmatmul.mubr.f32.gmra.mrb[0].mxu0 %v605
    %v673 = vpop.f32.mrb[0].mxu0
    %v674 = vadd.f32 0.0, %v673
    %v675 = vpop.f32.mrb[0].mxu0
    %676 = vdwg.mxu0
    %677 = vmatprep.subr.mxu0 0.0
    %678 = vmatpush1.msra.mxu0 %v558
    %679 = vmatprep.subr.mxu0 0.0
    %680 = vmatpush1.msra.mxu0 %v559
    %681 = vmatprep.subr.mxu0 0.0
    %682 = vmatpush1.msra.mxu0 %v560
    %683 = vmatprep.subr.mxu0 0.0
    %684 = vmatpush1.msra.mxu0 %v561
    %685 = vmatprep.subr.mxu0 0.0
    %686 = vmatpush1.msra.mxu0 %v562
    %687 = vmatprep.subr.mxu0 0.0
    %688 = vmatpush1.msra.mxu0 %v563
    %689 = vmatprep.subr.mxu0 0.0
    %690 = vmatpush1.msra.mxu0 %v564
    %691 = vmatprep.subr.mxu0 0.0
    %692 = vmatpush1.msra.mxu0 %v565
    %693 = vmatprep.subr.mxu0 0.0
    %694 = vmatpush1.msra.mxu0 0.0
    %695 = vmatprep.subr.mxu0 0.0
    %696 = vmatpush1.msra.mxu0 0.0
    %697 = vmatprep.subr.mxu0 0.0
    %698 = vmatpush1.msra.mxu0 0.0
    %699 = vmatprep.subr.mxu0 0.0
    %700 = vmatpush1.msra.mxu0 0.0
    %701 = vmatprep.subr.mxu0 0.0
    %702 = vmatpush1.msra.mxu0 0.0
    %703 = vmatprep.subr.mxu0 0.0
    %704 = vmatpush1.msra.mxu0 0.0
    %705 = vmatprep.subr.mxu0 0.0
    %706 = vmatpush1.msra.mxu0 0.0
    %707 = vmatprep.subr.mxu0 0.0
    %708 = vmatpush1.msra.mxu0 0.0
    %709 = vmatprep.subr.mxu0 0.0
    %710 = vmatpush1.msra.mxu0 0.0
    %711 = vmatprep.subr.mxu0 0.0
    %712 = vmatpush1.msra.mxu0 0.0
    %713 = vmatprep.subr.mxu0 0.0
    %714 = vmatpush1.msra.mxu0 0.0
    %715 = vmatprep.subr.mxu0 0.0
    %716 = vmatpush1.msra.mxu0 0.0
    %717 = vmatprep.subr.mxu0 0.0
    %718 = vmatpush1.msra.mxu0 0.0
    %719 = vmatprep.subr.mxu0 0.0
    %720 = vmatpush1.msra.mxu0 0.0
    %721 = vmatprep.subr.mxu0 0.0
    %722 = vmatpush1.msra.mxu0 0.0
    %723 = vmatprep.subr.mxu0 0.0
    %724 = vmatpush1.msra.mxu0 0.0
    %725 = vmatprep.subr.mxu0 0.0
    %726 = vmatpush1.msra.mxu0 0.0
    %727 = vmatprep.subr.mxu0 0.0
    %728 = vmatpush1.msra.mxu0 0.0
    %729 = vmatprep.subr.mxu0 0.0
    %730 = vmatpush1.msra.mxu0 0.0
    %731 = vmatprep.subr.mxu0 0.0
    %732 = vmatpush1.msra.mxu0 0.0
    %733 = vmatprep.subr.mxu0 0.0
    %734 = vmatpush1.msra.mxu0 0.0
    %735 = vmatprep.subr.mxu0 0.0
    %736 = vmatpush1.msra.mxu0 0.0
    %737 = vmatprep.subr.mxu0 0.0
    %738 = vmatpush1.msra.mxu0 0.0
    %739 = vmatprep.subr.mxu0 0.0
    %740 = vmatpush1.msra.mxu0 0.0
    %741 = vmatprep.mubr.f32.mxu0 0.0
    %742 = vmatmul.mubr.f32.gmra.mrb[0].mxu0 %v605
    %v743 = vpop.f32.mrb[0].mxu0
    %v744 = vadd.f32 0.0, %v743
    %v745 = vpop.f32.mrb[0].mxu0
    %746 = vdwg.mxu0
    %747 = vmatprep.subr.mxu0 0.0
    %748 = vmatpush1.msra.mxu0 %v567
    %749 = vmatprep.subr.mxu0 0.0
    %750 = vmatpush1.msra.mxu0 %v568
    %751 = vmatprep.subr.mxu0 0.0
    %752 = vmatpush1.msra.mxu0 %v569
    %753 = vmatprep.subr.mxu0 0.0
    %754 = vmatpush1.msra.mxu0 %v570
    %755 = vmatprep.subr.mxu0 0.0
    %756 = vmatpush1.msra.mxu0 %v571
    %757 = vmatprep.subr.mxu0 0.0
    %758 = vmatpush1.msra.mxu0 %v572
    %759 = vmatprep.subr.mxu0 0.0
    %760 = vmatpush1.msra.mxu0 %v573
    %761 = vmatprep.subr.mxu0 0.0
    %762 = vmatpush1.msra.mxu0 %v574
    %763 = vmatprep.subr.mxu0 0.0
    %764 = vmatpush1.msra.mxu0 0.0
    %765 = vmatprep.subr.mxu0 0.0
    %766 = vmatpush1.msra.mxu0 0.0
    %767 = vmatprep.subr.mxu0 0.0
    %768 = vmatpush1.msra.mxu0 0.0
    %769 = vmatprep.subr.mxu0 0.0
    %770 = vmatpush1.msra.mxu0 0.0
    %771 = vmatprep.subr.mxu0 0.0
    %772 = vmatpush1.msra.mxu0 0.0
    %773 = vmatprep.subr.mxu0 0.0
    %774 = vmatpush1.msra.mxu0 0.0
    %775 = vmatprep.subr.mxu0 0.0
    %776 = vmatpush1.msra.mxu0 0.0
    %777 = vmatprep.subr.mxu0 0.0
    %778 = vmatpush1.msra.mxu0 0.0
    %779 = vmatprep.subr.mxu0 0.0
    %780 = vmatpush1.msra.mxu0 0.0
    %781 = vmatprep.subr.mxu0 0.0
    %782 = vmatpush1.msra.mxu0 0.0
    %783 = vmatprep.subr.mxu0 0.0
    %784 = vmatpush1.msra.mxu0 0.0
    %785 = vmatprep.subr.mxu0 0.0
    %786 = vmatpush1.msra.mxu0 0.0
    %787 = vmatprep.subr.mxu0 0.0
    %788 = vmatpush1.msra.mxu0 0.0
    %789 = vmatprep.subr.mxu0 0.0
    %790 = vmatpush1.msra.mxu0 0.0
    %791 = vmatprep.subr.mxu0 0.0
    %792 = vmatpush1.msra.mxu0 0.0
    %793 = vmatprep.subr.mxu0 0.0
    %794 = vmatpush1.msra.mxu0 0.0
    %795 = vmatprep.subr.mxu0 0.0
    %796 = vmatpush1.msra.mxu0 0.0
    %797 = vmatprep.subr.mxu0 0.0
    %798 = vmatpush1.msra.mxu0 0.0
    %799 = vmatprep.subr.mxu0 0.0
    %800 = vmatpush1.msra.mxu0 0.0
    %801 = vmatprep.subr.mxu0 0.0
    %802 = vmatpush1.msra.mxu0 0.0
    %803 = vmatprep.subr.mxu0 0.0
    %804 = vmatpush1.msra.mxu0 0.0
    %805 = vmatprep.subr.mxu0 0.0
    %806 = vmatpush1.msra.mxu0 0.0
    %807 = vmatprep.subr.mxu0 0.0
    %808 = vmatpush1.msra.mxu0 0.0
    %809 = vmatprep.subr.mxu0 0.0
    %810 = vmatpush1.msra.mxu0 0.0
    %811 = vmatprep.mubr.f32.mxu0 0.0
    %812 = vmatmul.mubr.f32.gmra.mrb[0].mxu0 %v605
    %v813 = vpop.f32.mrb[0].mxu0
    %v814 = vadd.f32 %v575, %v813
    %v815 = vpop.f32.mrb[0].mxu0
    %816 = vdwg.mxu0
    %v817 = vadd.f32 %v591, %v674
    %v818 = vxor.u32 %v817, 2147483648
    %v819 = vmul.f32 %v818, 1.442695
    %v820 = vpow.pop %v819
    %v821 = vadd.f32 %v820, 1.0
    %v822 = vrcp.pop %v821
    %v823 = vmul.f32 1.0, %v822
    %v824 = vadd.f32 %v598, %v744
    %v825 = vxor.u32 %v824, 2147483648
    %v826 = vmul.f32 %v825, 1.442695
    %v827 = vpow.pop %v826
    %v828 = vadd.f32 %v827, 1.0
    %v829 = vrcp.pop %v828
    %v830 = vmul.f32 1.0, %v829
    %v831 = vmul.f32 %v823, %v814
    %v832 = vadd.f32 %v602, %v831
    %v833 = vtanh.pop %v832
    %v834 = vsub.f32 1.0, %v830
    %v835 = vmul.f32 %v834, %v833
    %v836 = vmul.f32 %v830, %v587
    %v837 = vadd.f32 %v835, %v836
    %v838 = vrot.slane %v545, 5
    %v840 = vsel %vm474, %v545, %v838
    %841 = vrot.lane.b32.xlu0 %v838, 64
    %v842 = vpop.permute.xlu0 %841
    %v844 = vsel %vm474, %v593, %v842
    %v845 = vrot.slane %v547, 5
    %v847 = vsel %vm474, %v547, %v845
    %v849 = vsel %vm603, %v837, 0
    %851 = vmatprep.subr.mxu0 0.0
    %852 = vmatpush1.msra.mxu0 %v549
    %853 = vmatprep.subr.mxu0 0.0
    %854 = vmatpush1.msra.mxu0 %v550
    %855 = vmatprep.subr.mxu0 0.0
    %856 = vmatpush1.msra.mxu0 %v551
    %857 = vmatprep.subr.mxu0 0.0
    %858 = vmatpush1.msra.mxu0 %v552
    %859 = vmatprep.subr.mxu0 0.0
    %860 = vmatpush1.msra.mxu0 %v553
    %861 = vmatprep.subr.mxu0 0.0
    %862 = vmatpush1.msra.mxu0 %v554
    %863 = vmatprep.subr.mxu0 0.0
    %864 = vmatpush1.msra.mxu0 %v555
    %865 = vmatprep.subr.mxu0 0.0
    %866 = vmatpush1.msra.mxu0 %v556
    %867 = vmatprep.subr.mxu0 0.0
    %868 = vmatpush1.msra.mxu0 0.0
    %869 = vmatprep.subr.mxu0 0.0
    %870 = vmatpush1.msra.mxu0 0.0
    %871 = vmatprep.subr.mxu0 0.0
    %872 = vmatpush1.msra.mxu0 0.0
    %873 = vmatprep.subr.mxu0 0.0
    %874 = vmatpush1.msra.mxu0 0.0
    %875 = vmatprep.subr.mxu0 0.0
    %876 = vmatpush1.msra.mxu0 0.0
    %877 = vmatprep.subr.mxu0 0.0
    %878 = vmatpush1.msra.mxu0 0.0
    %879 = vmatprep.subr.mxu0 0.0
    %880 = vmatpush1.msra.mxu0 0.0
    %881 = vmatprep.subr.mxu0 0.0
    %882 = vmatpush1.msra.mxu0 0.0
    %883 = vmatprep.subr.mxu0 0.0
    %884 = vmatpush1.msra.mxu0 0.0
    %885 = vmatprep.subr.mxu0 0.0
    %886 = vmatpush1.msra.mxu0 0.0
    %887 = vmatprep.subr.mxu0 0.0
    %888 = vmatpush1.msra.mxu0 0.0
    %889 = vmatprep.subr.mxu0 0.0
    %890 = vmatpush1.msra.mxu0 0.0
    %891 = vmatprep.subr.mxu0 0.0
    %892 = vmatpush1.msra.mxu0 0.0
    %893 = vmatprep.subr.mxu0 0.0
    %894 = vmatpush1.msra.mxu0 0.0
    %895 = vmatprep.subr.mxu0 0.0
    %896 = vmatpush1.msra.mxu0 0.0
    %897 = vmatprep.subr.mxu0 0.0
    %898 = vmatpush1.msra.mxu0 0.0
    %899 = vmatprep.subr.mxu0 0.0
    %900 = vmatpush1.msra.mxu0 0.0
    %901 = vmatprep.subr.mxu0 0.0
    %902 = vmatpush1.msra.mxu0 0.0
    %903 = vmatprep.subr.mxu0 0.0
    %904 = vmatpush1.msra.mxu0 0.0
    %905 = vmatprep.subr.mxu0 0.0
    %906 = vmatpush1.msra.mxu0 0.0
    %907 = vmatprep.subr.mxu0 0.0
    %908 = vmatpush1.msra.mxu0 0.0
    %909 = vmatprep.subr.mxu0 0.0
    %910 = vmatpush1.msra.mxu0 0.0
    %911 = vmatprep.subr.mxu0 0.0
    %912 = vmatpush1.msra.mxu0 0.0
    %913 = vmatprep.subr.mxu0 0.0
    %914 = vmatpush1.msra.mxu0 0.0
    %915 = vmatprep.mubr.f32.mxu0 0.0
    %916 = vmatmul.mubr.f32.gmra.mrb[0].mxu0 %v849
    %v917 = vpop.f32.mrb[0].mxu0
    %v918 = vadd.f32 0.0, %v917
    %v919 = vpop.f32.mrb[0].mxu0
    %920 = vdwg.mxu0
    %921 = vmatprep.subr.mxu0 0.0
    %922 = vmatpush1.msra.mxu0 %v558
    %923 = vmatprep.subr.mxu0 0.0
    %924 = vmatpush1.msra.mxu0 %v559
    %925 = vmatprep.subr.mxu0 0.0
    %926 = vmatpush1.msra.mxu0 %v560
    %927 = vmatprep.subr.mxu0 0.0
    %928 = vmatpush1.msra.mxu0 %v561
    %929 = vmatprep.subr.mxu0 0.0
    %930 = vmatpush1.msra.mxu0 %v562
    %931 = vmatprep.subr.mxu0 0.0
    %932 = vmatpush1.msra.mxu0 %v563
    %933 = vmatprep.subr.mxu0 0.0
    %934 = vmatpush1.msra.mxu0 %v564
    %935 = vmatprep.subr.mxu0 0.0
    %936 = vmatpush1.msra.mxu0 %v565
    %937 = vmatprep.subr.mxu0 0.0
    %938 = vmatpush1.msra.mxu0 0.0
    %939 = vmatprep.subr.mxu0 0.0
    %940 = vmatpush1.msra.mxu0 0.0
    %941 = vmatprep.subr.mxu0 0.0
    %942 = vmatpush1.msra.mxu0 0.0
    %943 = vmatprep.subr.mxu0 0.0
    %944 = vmatpush1.msra.mxu0 0.0
    %945 = vmatprep.subr.mxu0 0.0
    %946 = vmatpush1.msra.mxu0 0.0
    %947 = vmatprep.subr.mxu0 0.0
    %948 = vmatpush1.msra.mxu0 0.0
    %949 = vmatprep.subr.mxu0 0.0
    %950 = vmatpush1.msra.mxu0 0.0
    %951 = vmatprep.subr.mxu0 0.0
    %952 = vmatpush1.msra.mxu0 0.0
    %953 = vmatprep.subr.mxu0 0.0
    %954 = vmatpush1.msra.mxu0 0.0
    %955 = vmatprep.subr.mxu0 0.0
    %956 = vmatpush1.msra.mxu0 0.0
    %957 = vmatprep.subr.mxu0 0.0
    %958 = vmatpush1.msra.mxu0 0.0
    %959 = vmatprep.subr.mxu0 0.0
    %960 = vmatpush1.msra.mxu0 0.0
    %961 = vmatprep.subr.mxu0 0.0
    %962 = vmatpush1.msra.mxu0 0.0
    %963 = vmatprep.subr.mxu0 0.0
    %964 = vmatpush1.msra.mxu0 0.0
    %965 = vmatprep.subr.mxu0 0.0
    %966 = vmatpush1.msra.mxu0 0.0
    %967 = vmatprep.subr.mxu0 0.0
    %968 = vmatpush1.msra.mxu0 0.0
    %969 = vmatprep.subr.mxu0 0.0
    %970 = vmatpush1.msra.mxu0 0.0
    %971 = vmatprep.subr.mxu0 0.0
    %972 = vmatpush1.msra.mxu0 0.0
    %973 = vmatprep.subr.mxu0 0.0
    %974 = vmatpush1.msra.mxu0 0.0
    %975 = vmatprep.subr.mxu0 0.0
    %976 = vmatpush1.msra.mxu0 0.0
    %977 = vmatprep.subr.mxu0 0.0
    %978 = vmatpush1.msra.mxu0 0.0
    %979 = vmatprep.subr.mxu0 0.0
    %980 = vmatpush1.msra.mxu0 0.0
    %981 = vmatprep.subr.mxu0 0.0
    %982 = vmatpush1.msra.mxu0 0.0
    %983 = vmatprep.subr.mxu0 0.0
    %984 = vmatpush1.msra.mxu0 0.0
    %985 = vmatprep.mubr.f32.mxu0 0.0
    %986 = vmatmul.mubr.f32.gmra.mrb[0].mxu0 %v849
    %v987 = vpop.f32.mrb[0].mxu0
    %v988 = vadd.f32 0.0, %v987
    %v989 = vpop.f32.mrb[0].mxu0
    %990 = vdwg.mxu0
    %991 = vmatprep.subr.mxu0 0.0
    %992 = vmatpush1.msra.mxu0 %v567
    %993 = vmatprep.subr.mxu0 0.0
    %994 = vmatpush1.msra.mxu0 %v568
    %995 = vmatprep.subr.mxu0 0.0
    %996 = vmatpush1.msra.mxu0 %v569
    %997 = vmatprep.subr.mxu0 0.0
    %998 = vmatpush1.msra.mxu0 %v570
    %999 = vmatprep.subr.mxu0 0.0
    %1000 = vmatpush1.msra.mxu0 %v571
    %1001 = vmatprep.subr.mxu0 0.0
    %1002 = vmatpush1.msra.mxu0 %v572
    %1003 = vmatprep.subr.mxu0 0.0
    %1004 = vmatpush1.msra.mxu0 %v573
    %1005 = vmatprep.subr.mxu0 0.0
    %1006 = vmatpush1.msra.mxu0 %v574
    %1007 = vmatprep.subr.mxu0 0.0
    %1008 = vmatpush1.msra.mxu0 0.0
    %1009 = vmatprep.subr.mxu0 0.0
    %1010 = vmatpush1.msra.mxu0 0.0
    %1011 = vmatprep.subr.mxu0 0.0
    %1012 = vmatpush1.msra.mxu0 0.0
    %1013 = vmatprep.subr.mxu0 0.0
    %1014 = vmatpush1.msra.mxu0 0.0
    %1015 = vmatprep.subr.mxu0 0.0
    %1016 = vmatpush1.msra.mxu0 0.0
    %1017 = vmatprep.subr.mxu0 0.0
    %1018 = vmatpush1.msra.mxu0 0.0
    %1019 = vmatprep.subr.mxu0 0.0
    %1020 = vmatpush1.msra.mxu0 0.0
    %1021 = vmatprep.subr.mxu0 0.0
    %1022 = vmatpush1.msra.mxu0 0.0
    %1023 = vmatprep.subr.mxu0 0.0
    %1024 = vmatpush1.msra.mxu0 0.0
    %1025 = vmatprep.subr.mxu0 0.0
    %1026 = vmatpush1.msra.mxu0 0.0
    %1027 = vmatprep.subr.mxu0 0.0
    %1028 = vmatpush1.msra.mxu0 0.0
    %1029 = vmatprep.subr.mxu0 0.0
    %1030 = vmatpush1.msra.mxu0 0.0
    %1031 = vmatprep.subr.mxu0 0.0
    %1032 = vmatpush1.msra.mxu0 0.0
    %1033 = vmatprep.subr.mxu0 0.0
    %1034 = vmatpush1.msra.mxu0 0.0
    %1035 = vmatprep.subr.mxu0 0.0
    %1036 = vmatpush1.msra.mxu0 0.0
    %1037 = vmatprep.subr.mxu0 0.0
    %1038 = vmatpush1.msra.mxu0 0.0
    %1039 = vmatprep.subr.mxu0 0.0
    %1040 = vmatpush1.msra.mxu0 0.0
    %1041 = vmatprep.subr.mxu0 0.0
    %1042 = vmatpush1.msra.mxu0 0.0
    %1043 = vmatprep.subr.mxu0 0.0
    %1044 = vmatpush1.msra.mxu0 0.0
    %1045 = vmatprep.subr.mxu0 0.0
    %1046 = vmatpush1.msra.mxu0 0.0
    %1047 = vmatprep.subr.mxu0 0.0
    %1048 = vmatpush1.msra.mxu0 0.0
    %1049 = vmatprep.subr.mxu0 0.0
    %1050 = vmatpush1.msra.mxu0 0.0
    %1051 = vmatprep.subr.mxu0 0.0
    %1052 = vmatpush1.msra.mxu0 0.0
    %1053 = vmatprep.subr.mxu0 0.0
    %1054 = vmatpush1.msra.mxu0 0.0
    %1055 = vmatprep.mubr.f32.mxu0 0.0
    %1056 = vmatmul.mubr.f32.gmra.mrb[0].mxu0 %v849
    %v1057 = vpop.f32.mrb[0].mxu0
    %v1058 = vadd.f32 %v575, %v1057
    %v1059 = vpop.f32.mrb[0].mxu0
    %1060 = vdwg.mxu0
    %v1062 = vrot.slane %v918, 7
    %v1064 = vadd.f32 %v840, %v1062
    %v1065 = vxor.u32 %v1064, 2147483648
    %v1066 = vmul.f32 %v1065, 1.442695
    %v1067 = vpow.pop %v1066
    %v1068 = vadd.f32 %v1067, 1.0
    %v1069 = vrcp.pop %v1068
    %v1070 = vmul.f32 1.0, %v1069
    %v1072 = vrot.slane %v988, 7
    %v1074 = vadd.f32 %v844, %v1072
    %v1075 = vxor.u32 %v1074, 2147483648
    %v1076 = vmul.f32 %v1075, 1.442695
    %v1077 = vpow.pop %v1076
    %v1078 = vadd.f32 %v1077, 1.0
    %v1079 = vrcp.pop %v1078
    %v1080 = vmul.f32 1.0, %v1079
    %v1082 = vrot.slane %v1058, 7
    %v1084 = vmul.f32 %v1070, %v1082
    %v1085 = vadd.f32 %v847, %v1084
    %v1086 = vtanh.pop %v1085
    %v1087 = vsub.f32 1.0, %v1080
    %v1088 = vmul.f32 %v1087, %v1086
    %v1089 = vrot.slane %v837, 7
    %v1091 = vmul.f32 %v1080, %v1089
    %v1092 = vadd.f32 %v1088, %v1091
    %v1093 = vrot.slane %v545, 3
    %v1095 = vsel %vm474, %v545, %v1093
    %1096 = vrot.lane.b32.xlu0 %v1093, 64
    %v1097 = vpop.permute.xlu0 %1096
    %v1099 = vsel %vm474, %v593, %v1097
    %v1100 = vrot.slane %v547, 3
    %v1102 = vsel %vm474, %v547, %v1100
    %v1104 = vrot.slane %v1092, 1
    %v1105 = vsel %vm603, %v1104, 0
    %1107 = vmatprep.subr.mxu0 0.0
    %1108 = vmatpush1.msra.mxu0 %v549
    %1109 = vmatprep.subr.mxu0 0.0
    %1110 = vmatpush1.msra.mxu0 %v550
    %1111 = vmatprep.subr.mxu0 0.0
    %1112 = vmatpush1.msra.mxu0 %v551
    %1113 = vmatprep.subr.mxu0 0.0
    %1114 = vmatpush1.msra.mxu0 %v552
    %1115 = vmatprep.subr.mxu0 0.0
    %1116 = vmatpush1.msra.mxu0 %v553
    %1117 = vmatprep.subr.mxu0 0.0
    %1118 = vmatpush1.msra.mxu0 %v554
    %1119 = vmatprep.subr.mxu0 0.0
    %1120 = vmatpush1.msra.mxu0 %v555
    %1121 = vmatprep.subr.mxu0 0.0
    %1122 = vmatpush1.msra.mxu0 %v556
    %1123 = vmatprep.subr.mxu0 0.0
    %1124 = vmatpush1.msra.mxu0 0.0
    %1125 = vmatprep.subr.mxu0 0.0
    %1126 = vmatpush1.msra.mxu0 0.0
    %1127 = vmatprep.subr.mxu0 0.0
    %1128 = vmatpush1.msra.mxu0 0.0
    %1129 = vmatprep.subr.mxu0 0.0
    %1130 = vmatpush1.msra.mxu0 0.0
    %1131 = vmatprep.subr.mxu0 0.0
    %1132 = vmatpush1.msra.mxu0 0.0
    %1133 = vmatprep.subr.mxu0 0.0
    %1134 = vmatpush1.msra.mxu0 0.0
    %1135 = vmatprep.subr.mxu0 0.0
    %1136 = vmatpush1.msra.mxu0 0.0
    %1137 = vmatprep.subr.mxu0 0.0
    %1138 = vmatpush1.msra.mxu0 0.0
    %1139 = vmatprep.subr.mxu0 0.0
    %1140 = vmatpush1.msra.mxu0 0.0
    %1141 = vmatprep.subr.mxu0 0.0
    %1142 = vmatpush1.msra.mxu0 0.0
    %1143 = vmatprep.subr.mxu0 0.0
    %1144 = vmatpush1.msra.mxu0 0.0
    %1145 = vmatprep.subr.mxu0 0.0
    %1146 = vmatpush1.msra.mxu0 0.0
    %1147 = vmatprep.subr.mxu0 0.0
    %1148 = vmatpush1.msra.mxu0 0.0
    %1149 = vmatprep.subr.mxu0 0.0
    %1150 = vmatpush1.msra.mxu0 0.0
    %1151 = vmatprep.subr.mxu0 0.0
    %1152 = vmatpush1.msra.mxu0 0.0
    %1153 = vmatprep.subr.mxu0 0.0
    %1154 = vmatpush1.msra.mxu0 0.0
    %1155 = vmatprep.subr.mxu0 0.0
    %1156 = vmatpush1.msra.mxu0 0.0
    %1157 = vmatprep.subr.mxu0 0.0
    %1158 = vmatpush1.msra.mxu0 0.0
    %1159 = vmatprep.subr.mxu0 0.0
    %1160 = vmatpush1.msra.mxu0 0.0
    %1161 = vmatprep.subr.mxu0 0.0
    %1162 = vmatpush1.msra.mxu0 0.0
    %1163 = vmatprep.subr.mxu0 0.0
    %1164 = vmatpush1.msra.mxu0 0.0
    %1165 = vmatprep.subr.mxu0 0.0
    %1166 = vmatpush1.msra.mxu0 0.0
    %1167 = vmatprep.subr.mxu0 0.0
    %1168 = vmatpush1.msra.mxu0 0.0
    %1169 = vmatprep.subr.mxu0 0.0
    %1170 = vmatpush1.msra.mxu0 0.0
    %1171 = vmatprep.mubr.f32.mxu0 0.0
    %1172 = vmatmul.mubr.f32.gmra.mrb[0].mxu0 %v1105
    %v1173 = vpop.f32.mrb[0].mxu0
    %v1174 = vadd.f32 0.0, %v1173
    %v1175 = vpop.f32.mrb[0].mxu0
    %1176 = vdwg.mxu0
    %1177 = vmatprep.subr.mxu0 0.0
    %1178 = vmatpush1.msra.mxu0 %v558
    %1179 = vmatprep.subr.mxu0 0.0
    %1180 = vmatpush1.msra.mxu0 %v559
    %1181 = vmatprep.subr.mxu0 0.0
    %1182 = vmatpush1.msra.mxu0 %v560
    %1183 = vmatprep.subr.mxu0 0.0
    %1184 = vmatpush1.msra.mxu0 %v561
    %1185 = vmatprep.subr.mxu0 0.0
    %1186 = vmatpush1.msra.mxu0 %v562
    %1187 = vmatprep.subr.mxu0 0.0
    %1188 = vmatpush1.msra.mxu0 %v563
    %1189 = vmatprep.subr.mxu0 0.0
    %1190 = vmatpush1.msra.mxu0 %v564
    %1191 = vmatprep.subr.mxu0 0.0
    %1192 = vmatpush1.msra.mxu0 %v565
    %1193 = vmatprep.subr.mxu0 0.0
    %1194 = vmatpush1.msra.mxu0 0.0
    %1195 = vmatprep.subr.mxu0 0.0
    %1196 = vmatpush1.msra.mxu0 0.0
    %1197 = vmatprep.subr.mxu0 0.0
    %1198 = vmatpush1.msra.mxu0 0.0
    %1199 = vmatprep.subr.mxu0 0.0
    %1200 = vmatpush1.msra.mxu0 0.0
    %1201 = vmatprep.subr.mxu0 0.0
    %1202 = vmatpush1.msra.mxu0 0.0
    %1203 = vmatprep.subr.mxu0 0.0
    %1204 = vmatpush1.msra.mxu0 0.0
    %1205 = vmatprep.subr.mxu0 0.0
    %1206 = vmatpush1.msra.mxu0 0.0
    %1207 = vmatprep.subr.mxu0 0.0
    %1208 = vmatpush1.msra.mxu0 0.0
    %1209 = vmatprep.subr.mxu0 0.0
    %1210 = vmatpush1.msra.mxu0 0.0
    %1211 = vmatprep.subr.mxu0 0.0
    %1212 = vmatpush1.msra.mxu0 0.0
    %1213 = vmatprep.subr.mxu0 0.0
    %1214 = vmatpush1.msra.mxu0 0.0
    %1215 = vmatprep.subr.mxu0 0.0
    %1216 = vmatpush1.msra.mxu0 0.0
    %1217 = vmatprep.subr.mxu0 0.0
    %1218 = vmatpush1.msra.mxu0 0.0
    %1219 = vmatprep.subr.mxu0 0.0
    %1220 = vmatpush1.msra.mxu0 0.0
    %1221 = vmatprep.subr.mxu0 0.0
    %1222 = vmatpush1.msra.mxu0 0.0
    %1223 = vmatprep.subr.mxu0 0.0
    %1224 = vmatpush1.msra.mxu0 0.0
    %1225 = vmatprep.subr.mxu0 0.0
    %1226 = vmatpush1.msra.mxu0 0.0
    %1227 = vmatprep.subr.mxu0 0.0
    %1228 = vmatpush1.msra.mxu0 0.0
    %1229 = vmatprep.subr.mxu0 0.0
    %1230 = vmatpush1.msra.mxu0 0.0
    %1231 = vmatprep.subr.mxu0 0.0
    %1232 = vmatpush1.msra.mxu0 0.0
    %1233 = vmatprep.subr.mxu0 0.0
    %1234 = vmatpush1.msra.mxu0 0.0
    %1235 = vmatprep.subr.mxu0 0.0
    %1236 = vmatpush1.msra.mxu0 0.0
    %1237 = vmatprep.subr.mxu0 0.0
    %1238 = vmatpush1.msra.mxu0 0.0
    %1239 = vmatprep.subr.mxu0 0.0
    %1240 = vmatpush1.msra.mxu0 0.0
    %1241 = vmatprep.mubr.f32.mxu0 0.0
    %1242 = vmatmul.mubr.f32.gmra.mrb[0].mxu0 %v1105
    %v1243 = vpop.f32.mrb[0].mxu0
    %v1244 = vadd.f32 0.0, %v1243
    %v1245 = vpop.f32.mrb[0].mxu0
    %1246 = vdwg.mxu0
    %1247 = vmatprep.subr.mxu0 0.0
    %1248 = vmatpush1.msra.mxu0 %v567
    %1249 = vmatprep.subr.mxu0 0.0
    %1250 = vmatpush1.msra.mxu0 %v568
    %1251 = vmatprep.subr.mxu0 0.0
    %1252 = vmatpush1.msra.mxu0 %v569
    %1253 = vmatprep.subr.mxu0 0.0
    %1254 = vmatpush1.msra.mxu0 %v570
    %1255 = vmatprep.subr.mxu0 0.0
    %1256 = vmatpush1.msra.mxu0 %v571
    %1257 = vmatprep.subr.mxu0 0.0
    %1258 = vmatpush1.msra.mxu0 %v572
    %1259 = vmatprep.subr.mxu0 0.0
    %1260 = vmatpush1.msra.mxu0 %v573
    %1261 = vmatprep.subr.mxu0 0.0
    %1262 = vmatpush1.msra.mxu0 %v574
    %1263 = vmatprep.subr.mxu0 0.0
    %1264 = vmatpush1.msra.mxu0 0.0
    %1265 = vmatprep.subr.mxu0 0.0
    %1266 = vmatpush1.msra.mxu0 0.0
    %1267 = vmatprep.subr.mxu0 0.0
    %1268 = vmatpush1.msra.mxu0 0.0
    %1269 = vmatprep.subr.mxu0 0.0
    %1270 = vmatpush1.msra.mxu0 0.0
    %1271 = vmatprep.subr.mxu0 0.0
    %1272 = vmatpush1.msra.mxu0 0.0
    %1273 = vmatprep.subr.mxu0 0.0
    %1274 = vmatpush1.msra.mxu0 0.0
    %1275 = vmatprep.subr.mxu0 0.0
    %1276 = vmatpush1.msra.mxu0 0.0
    %1277 = vmatprep.subr.mxu0 0.0
    %1278 = vmatpush1.msra.mxu0 0.0
    %1279 = vmatprep.subr.mxu0 0.0
    %1280 = vmatpush1.msra.mxu0 0.0
    %1281 = vmatprep.subr.mxu0 0.0
    %1282 = vmatpush1.msra.mxu0 0.0
    %1283 = vmatprep.subr.mxu0 0.0
    %1284 = vmatpush1.msra.mxu0 0.0
    %1285 = vmatprep.subr.mxu0 0.0
    %1286 = vmatpush1.msra.mxu0 0.0
    %1287 = vmatprep.subr.mxu0 0.0
    %1288 = vmatpush1.msra.mxu0 0.0
    %1289 = vmatprep.subr.mxu0 0.0
    %1290 = vmatpush1.msra.mxu0 0.0
    %1291 = vmatprep.subr.mxu0 0.0
    %1292 = vmatpush1.msra.mxu0 0.0
    %1293 = vmatprep.subr.mxu0 0.0
    %1294 = vmatpush1.msra.mxu0 0.0
    %1295 = vmatprep.subr.mxu0 0.0
    %1296 = vmatpush1.msra.mxu0 0.0
    %1297 = vmatprep.subr.mxu0 0.0
    %1298 = vmatpush1.msra.mxu0 0.0
    %1299 = vmatprep.subr.mxu0 0.0
    %1300 = vmatpush1.msra.mxu0 0.0
    %1301 = vmatprep.subr.mxu0 0.0
    %1302 = vmatpush1.msra.mxu0 0.0
    %1303 = vmatprep.subr.mxu0 0.0
    %1304 = vmatpush1.msra.mxu0 0.0
    %1305 = vmatprep.subr.mxu0 0.0
    %1306 = vmatpush1.msra.mxu0 0.0
    %1307 = vmatprep.subr.mxu0 0.0
    %1308 = vmatpush1.msra.mxu0 0.0
    %1309 = vmatprep.subr.mxu0 0.0
    %1310 = vmatpush1.msra.mxu0 0.0
    %1311 = vmatprep.mubr.f32.mxu0 0.0
    %1312 = vmatmul.mubr.f32.gmra.mrb[0].mxu0 %v1105
    %v1313 = vpop.f32.mrb[0].mxu0
    %v1314 = vadd.f32 %v575, %v1313
    %v1315 = vpop.f32.mrb[0].mxu0
    %1316 = vdwg.mxu0
    %v1318 = vrot.slane %v1174, 6
    %v1320 = vadd.f32 %v1095, %v1318
    %v1321 = vxor.u32 %v1320, 2147483648
    %v1322 = vmul.f32 %v1321, 1.442695
    %v1323 = vpow.pop %v1322
    %v1324 = vadd.f32 %v1323, 1.0
    %v1325 = vrcp.pop %v1324
    %v1326 = vmul.f32 1.0, %v1325
    %v1328 = vrot.slane %v1244, 6
    %v1330 = vadd.f32 %v1099, %v1328
    %v1331 = vxor.u32 %v1330, 2147483648
    %v1332 = vmul.f32 %v1331, 1.442695
    %v1333 = vpow.pop %v1332
    %v1334 = vadd.f32 %v1333, 1.0
    %v1335 = vrcp.pop %v1334
    %v1336 = vmul.f32 1.0, %v1335
    %v1338 = vrot.slane %v1314, 6
    %v1340 = vmul.f32 %v1326, %v1338
    %v1341 = vadd.f32 %v1102, %v1340
    %v1342 = vtanh.pop %v1341
    %v1343 = vsub.f32 1.0, %v1336
    %v1344 = vmul.f32 %v1343, %v1342
    %v1345 = vrot.slane %v1092, 7
    %v1347 = vmul.f32 %v1336, %v1345
    %v1348 = vadd.f32 %v1344, %v1347
    %v1349 = vrot.slane %v545, 1
    %v1351 = vsel %vm474, %v545, %v1349
    %1352 = vrot.lane.b32.xlu0 %v1349, 64
    %v1353 = vpop.permute.xlu0 %1352
    %v1355 = vsel %vm474, %v593, %v1353
    %v1356 = vrot.slane %v547, 1
    %v1358 = vsel %vm474, %v547, %v1356
    %v1360 = vrot.slane %v1348, 2
    %v1361 = vsel %vm603, %v1360, 0
    %1363 = vmatprep.subr.mxu0 0.0
    %1364 = vmatpush1.msra.mxu0 %v549
    %1365 = vmatprep.subr.mxu0 0.0
    %1366 = vmatpush1.msra.mxu0 %v550
    %1367 = vmatprep.subr.mxu0 0.0
    %1368 = vmatpush1.msra.mxu0 %v551
    %1369 = vmatprep.subr.mxu0 0.0
    %1370 = vmatpush1.msra.mxu0 %v552
    %1371 = vmatprep.subr.mxu0 0.0
    %1372 = vmatpush1.msra.mxu0 %v553
    %1373 = vmatprep.subr.mxu0 0.0
    %1374 = vmatpush1.msra.mxu0 %v554
    %1375 = vmatprep.subr.mxu0 0.0
    %1376 = vmatpush1.msra.mxu0 %v555
    %1377 = vmatprep.subr.mxu0 0.0
    %1378 = vmatpush1.msra.mxu0 %v556
    %1379 = vmatprep.subr.mxu0 0.0
    %1380 = vmatpush1.msra.mxu0 0.0
    %1381 = vmatprep.subr.mxu0 0.0
    %1382 = vmatpush1.msra.mxu0 0.0
    %1383 = vmatprep.subr.mxu0 0.0
    %1384 = vmatpush1.msra.mxu0 0.0
    %1385 = vmatprep.subr.mxu0 0.0
    %1386 = vmatpush1.msra.mxu0 0.0
    %1387 = vmatprep.subr.mxu0 0.0
    %1388 = vmatpush1.msra.mxu0 0.0
    %1389 = vmatprep.subr.mxu0 0.0
    %1390 = vmatpush1.msra.mxu0 0.0
    %1391 = vmatprep.subr.mxu0 0.0
    %1392 = vmatpush1.msra.mxu0 0.0
    %1393 = vmatprep.subr.mxu0 0.0
    %1394 = vmatpush1.msra.mxu0 0.0
    %1395 = vmatprep.subr.mxu0 0.0
    %1396 = vmatpush1.msra.mxu0 0.0
    %1397 = vmatprep.subr.mxu0 0.0
    %1398 = vmatpush1.msra.mxu0 0.0
    %1399 = vmatprep.subr.mxu0 0.0
    %1400 = vmatpush1.msra.mxu0 0.0
    %1401 = vmatprep.subr.mxu0 0.0
    %1402 = vmatpush1.msra.mxu0 0.0
    %1403 = vmatprep.subr.mxu0 0.0
    %1404 = vmatpush1.msra.mxu0 0.0
    %1405 = vmatprep.subr.mxu0 0.0
    %1406 = vmatpush1.msra.mxu0 0.0
    %1407 = vmatprep.subr.mxu0 0.0
    %1408 = vmatpush1.msra.mxu0 0.0
    %1409 = vmatprep.subr.mxu0 0.0
    %1410 = vmatpush1.msra.mxu0 0.0
    %1411 = vmatprep.subr.mxu0 0.0
    %1412 = vmatpush1.msra.mxu0 0.0
    %1413 = vmatprep.subr.mxu0 0.0
    %1414 = vmatpush1.msra.mxu0 0.0
    %1415 = vmatprep.subr.mxu0 0.0
    %1416 = vmatpush1.msra.mxu0 0.0
    %1417 = vmatprep.subr.mxu0 0.0
    %1418 = vmatpush1.msra.mxu0 0.0
    %1419 = vmatprep.subr.mxu0 0.0
    %1420 = vmatpush1.msra.mxu0 0.0
    %1421 = vmatprep.subr.mxu0 0.0
    %1422 = vmatpush1.msra.mxu0 0.0
    %1423 = vmatprep.subr.mxu0 0.0
    %1424 = vmatpush1.msra.mxu0 0.0
    %1425 = vmatprep.subr.mxu0 0.0
    %1426 = vmatpush1.msra.mxu0 0.0
    %1427 = vmatprep.mubr.f32.mxu0 0.0
    %1428 = vmatmul.mubr.f32.gmra.mrb[0].mxu0 %v1361
    %v1429 = vpop.f32.mrb[0].mxu0
    %v1430 = vadd.f32 0.0, %v1429
    %v1431 = vpop.f32.mrb[0].mxu0
    %1432 = vdwg.mxu0
    %1433 = vmatprep.subr.mxu0 0.0
    %1434 = vmatpush1.msra.mxu0 %v558
    %1435 = vmatprep.subr.mxu0 0.0
    %1436 = vmatpush1.msra.mxu0 %v559
    %1437 = vmatprep.subr.mxu0 0.0
    %1438 = vmatpush1.msra.mxu0 %v560
    %1439 = vmatprep.subr.mxu0 0.0
    %1440 = vmatpush1.msra.mxu0 %v561
    %1441 = vmatprep.subr.mxu0 0.0
    %1442 = vmatpush1.msra.mxu0 %v562
    %1443 = vmatprep.subr.mxu0 0.0
    %1444 = vmatpush1.msra.mxu0 %v563
    %1445 = vmatprep.subr.mxu0 0.0
    %1446 = vmatpush1.msra.mxu0 %v564
    %1447 = vmatprep.subr.mxu0 0.0
    %1448 = vmatpush1.msra.mxu0 %v565
    %1449 = vmatprep.subr.mxu0 0.0
    %1450 = vmatpush1.msra.mxu0 0.0
    %1451 = vmatprep.subr.mxu0 0.0
    %1452 = vmatpush1.msra.mxu0 0.0
    %1453 = vmatprep.subr.mxu0 0.0
    %1454 = vmatpush1.msra.mxu0 0.0
    %1455 = vmatprep.subr.mxu0 0.0
    %1456 = vmatpush1.msra.mxu0 0.0
    %1457 = vmatprep.subr.mxu0 0.0
    %1458 = vmatpush1.msra.mxu0 0.0
    %1459 = vmatprep.subr.mxu0 0.0
    %1460 = vmatpush1.msra.mxu0 0.0
    %1461 = vmatprep.subr.mxu0 0.0
    %1462 = vmatpush1.msra.mxu0 0.0
    %1463 = vmatprep.subr.mxu0 0.0
    %1464 = vmatpush1.msra.mxu0 0.0
    %1465 = vmatprep.subr.mxu0 0.0
    %1466 = vmatpush1.msra.mxu0 0.0
    %1467 = vmatprep.subr.mxu0 0.0
    %1468 = vmatpush1.msra.mxu0 0.0
    %1469 = vmatprep.subr.mxu0 0.0
    %1470 = vmatpush1.msra.mxu0 0.0
    %1471 = vmatprep.subr.mxu0 0.0
    %1472 = vmatpush1.msra.mxu0 0.0
    %1473 = vmatprep.subr.mxu0 0.0
    %1474 = vmatpush1.msra.mxu0 0.0
    %1475 = vmatprep.subr.mxu0 0.0
    %1476 = vmatpush1.msra.mxu0 0.0
    %1477 = vmatprep.subr.mxu0 0.0
    %1478 = vmatpush1.msra.mxu0 0.0
    %1479 = vmatprep.subr.mxu0 0.0
    %1480 = vmatpush1.msra.mxu0 0.0
    %1481 = vmatprep.subr.mxu0 0.0
    %1482 = vmatpush1.msra.mxu0 0.0
    %1483 = vmatprep.subr.mxu0 0.0
    %1484 = vmatpush1.msra.mxu0 0.0
    %1485 = vmatprep.subr.mxu0 0.0
    %1486 = vmatpush1.msra.mxu0 0.0
    %1487 = vmatprep.subr.mxu0 0.0
    %1488 = vmatpush1.msra.mxu0 0.0
    %1489 = vmatprep.subr.mxu0 0.0
    %1490 = vmatpush1.msra.mxu0 0.0
    %1491 = vmatprep.subr.mxu0 0.0
    %1492 = vmatpush1.msra.mxu0 0.0
    %1493 = vmatprep.subr.mxu0 0.0
    %1494 = vmatpush1.msra.mxu0 0.0
    %1495 = vmatprep.subr.mxu0 0.0
    %1496 = vmatpush1.msra.mxu0 0.0
    %1497 = vmatprep.mubr.f32.mxu0 0.0
    %1498 = vmatmul.mubr.f32.gmra.mrb[0].mxu0 %v1361
    %v1499 = vpop.f32.mrb[0].mxu0
    %v1500 = vadd.f32 0.0, %v1499
    %v1501 = vpop.f32.mrb[0].mxu0
    %1502 = vdwg.mxu0
    %1503 = vmatprep.subr.mxu0 0.0
    %1504 = vmatpush1.msra.mxu0 %v567
    %1505 = vmatprep.subr.mxu0 0.0
    %1506 = vmatpush1.msra.mxu0 %v568
    %1507 = vmatprep.subr.mxu0 0.0
    %1508 = vmatpush1.msra.mxu0 %v569
    %1509 = vmatprep.subr.mxu0 0.0
    %1510 = vmatpush1.msra.mxu0 %v570
    %1511 = vmatprep.subr.mxu0 0.0
    %1512 = vmatpush1.msra.mxu0 %v571
    %1513 = vmatprep.subr.mxu0 0.0
    %1514 = vmatpush1.msra.mxu0 %v572
    %1515 = vmatprep.subr.mxu0 0.0
    %1516 = vmatpush1.msra.mxu0 %v573
    %1517 = vmatprep.subr.mxu0 0.0
    %1518 = vmatpush1.msra.mxu0 %v574
    %1519 = vmatprep.subr.mxu0 0.0
    %1520 = vmatpush1.msra.mxu0 0.0
    %1521 = vmatprep.subr.mxu0 0.0
    %1522 = vmatpush1.msra.mxu0 0.0
    %1523 = vmatprep.subr.mxu0 0.0
    %1524 = vmatpush1.msra.mxu0 0.0
    %1525 = vmatprep.subr.mxu0 0.0
    %1526 = vmatpush1.msra.mxu0 0.0
    %1527 = vmatprep.subr.mxu0 0.0
    %1528 = vmatpush1.msra.mxu0 0.0
    %1529 = vmatprep.subr.mxu0 0.0
    %1530 = vmatpush1.msra.mxu0 0.0
    %1531 = vmatprep.subr.mxu0 0.0
    %1532 = vmatpush1.msra.mxu0 0.0
    %1533 = vmatprep.subr.mxu0 0.0
    %1534 = vmatpush1.msra.mxu0 0.0
    %1535 = vmatprep.subr.mxu0 0.0
    %1536 = vmatpush1.msra.mxu0 0.0
    %1537 = vmatprep.subr.mxu0 0.0
    %1538 = vmatpush1.msra.mxu0 0.0
    %1539 = vmatprep.subr.mxu0 0.0
    %1540 = vmatpush1.msra.mxu0 0.0
    %1541 = vmatprep.subr.mxu0 0.0
    %1542 = vmatpush1.msra.mxu0 0.0
    %1543 = vmatprep.subr.mxu0 0.0
    %1544 = vmatpush1.msra.mxu0 0.0
    %1545 = vmatprep.subr.mxu0 0.0
    %1546 = vmatpush1.msra.mxu0 0.0
    %1547 = vmatprep.subr.mxu0 0.0
    %1548 = vmatpush1.msra.mxu0 0.0
    %1549 = vmatprep.subr.mxu0 0.0
    %1550 = vmatpush1.msra.mxu0 0.0
    %1551 = vmatprep.subr.mxu0 0.0
    %1552 = vmatpush1.msra.mxu0 0.0
    %1553 = vmatprep.subr.mxu0 0.0
    %1554 = vmatpush1.msra.mxu0 0.0
    %1555 = vmatprep.subr.mxu0 0.0
    %1556 = vmatpush1.msra.mxu0 0.0
    %1557 = vmatprep.subr.mxu0 0.0
    %1558 = vmatpush1.msra.mxu0 0.0
    %1559 = vmatprep.subr.mxu0 0.0
    %1560 = vmatpush1.msra.mxu0 0.0
    %1561 = vmatprep.subr.mxu0 0.0
    %1562 = vmatpush1.msra.mxu0 0.0
    %1563 = vmatprep.subr.mxu0 0.0
    %1564 = vmatpush1.msra.mxu0 0.0
    %1565 = vmatprep.subr.mxu0 0.0
    %1566 = vmatpush1.msra.mxu0 0.0
    %1567 = vmatprep.mubr.f32.mxu0 0.0
    %1568 = vmatmul.mubr.f32.gmra.mrb[0].mxu0 %v1361
    %v1569 = vpop.f32.mrb[0].mxu0
    %v1570 = vadd.f32 %v575, %v1569
    %v1571 = vpop.f32.mrb[0].mxu0
    %1572 = vdwg.mxu0
    %v1574 = vrot.slane %v1430, 5
    %v1576 = vadd.f32 %v1351, %v1574
    %v1577 = vxor.u32 %v1576, 2147483648
    %v1578 = vmul.f32 %v1577, 1.442695
    %v1579 = vpow.pop %v1578
    %v1580 = vadd.f32 %v1579, 1.0
    %v1581 = vrcp.pop %v1580
    %v1582 = vmul.f32 1.0, %v1581
    %v1584 = vrot.slane %v1500, 5
    %v1586 = vadd.f32 %v1355, %v1584
    %v1587 = vxor.u32 %v1586, 2147483648
    %v1588 = vmul.f32 %v1587, 1.442695
    %v1589 = vpow.pop %v1588
    %v1590 = vadd.f32 %v1589, 1.0
    %v1591 = vrcp.pop %v1590
    %v1592 = vmul.f32 1.0, %v1591
    %v1594 = vrot.slane %v1570, 5
    %v1596 = vmul.f32 %v1582, %v1594
    %v1597 = vadd.f32 %v1358, %v1596
    %v1598 = vtanh.pop %v1597
    %v1599 = vsub.f32 1.0, %v1592
    %v1600 = vmul.f32 %v1599, %v1598
    %v1601 = vrot.slane %v1348, 7
    %v1603 = vmul.f32 %v1592, %v1601
    %v1604 = vadd.f32 %v1600, %v1603
    %v1606 = vrot.slane %v1604, 3
    %v1607 = vsel %vm603, %v1606, 0
    %1609 = vmatprep.subr.mxu0 0.0
    %1610 = vmatpush1.msra.mxu0 %v549
    %1611 = vmatprep.subr.mxu0 0.0
    %1612 = vmatpush1.msra.mxu0 %v550
    %1613 = vmatprep.subr.mxu0 0.0
    %1614 = vmatpush1.msra.mxu0 %v551
    %1615 = vmatprep.subr.mxu0 0.0
    %1616 = vmatpush1.msra.mxu0 %v552
    %1617 = vmatprep.subr.mxu0 0.0
    %1618 = vmatpush1.msra.mxu0 %v553
    %1619 = vmatprep.subr.mxu0 0.0
    %1620 = vmatpush1.msra.mxu0 %v554
    %1621 = vmatprep.subr.mxu0 0.0
    %1622 = vmatpush1.msra.mxu0 %v555
    %1623 = vmatprep.subr.mxu0 0.0
    %1624 = vmatpush1.msra.mxu0 %v556
    %1625 = vmatprep.subr.mxu0 0.0
    %1626 = vmatpush1.msra.mxu0 0.0
    %1627 = vmatprep.subr.mxu0 0.0
    %1628 = vmatpush1.msra.mxu0 0.0
    %1629 = vmatprep.subr.mxu0 0.0
    %1630 = vmatpush1.msra.mxu0 0.0
    %1631 = vmatprep.subr.mxu0 0.0
    %1632 = vmatpush1.msra.mxu0 0.0
    %1633 = vmatprep.subr.mxu0 0.0
    %1634 = vmatpush1.msra.mxu0 0.0
    %1635 = vmatprep.subr.mxu0 0.0
    %1636 = vmatpush1.msra.mxu0 0.0
    %1637 = vmatprep.subr.mxu0 0.0
    %1638 = vmatpush1.msra.mxu0 0.0
    %1639 = vmatprep.subr.mxu0 0.0
    %1640 = vmatpush1.msra.mxu0 0.0
    %1641 = vmatprep.subr.mxu0 0.0
    %1642 = vmatpush1.msra.mxu0 0.0
    %1643 = vmatprep.subr.mxu0 0.0
    %1644 = vmatpush1.msra.mxu0 0.0
    %1645 = vmatprep.subr.mxu0 0.0
    %1646 = vmatpush1.msra.mxu0 0.0
    %1647 = vmatprep.subr.mxu0 0.0
    %1648 = vmatpush1.msra.mxu0 0.0
    %1649 = vmatprep.subr.mxu0 0.0
    %1650 = vmatpush1.msra.mxu0 0.0
    %1651 = vmatprep.subr.mxu0 0.0
    %1652 = vmatpush1.msra.mxu0 0.0
    %1653 = vmatprep.subr.mxu0 0.0
    %1654 = vmatpush1.msra.mxu0 0.0
    %1655 = vmatprep.subr.mxu0 0.0
    %1656 = vmatpush1.msra.mxu0 0.0
    %1657 = vmatprep.subr.mxu0 0.0
    %1658 = vmatpush1.msra.mxu0 0.0
    %1659 = vmatprep.subr.mxu0 0.0
    %1660 = vmatpush1.msra.mxu0 0.0
    %1661 = vmatprep.subr.mxu0 0.0
    %1662 = vmatpush1.msra.mxu0 0.0
    %1663 = vmatprep.subr.mxu0 0.0
    %1664 = vmatpush1.msra.mxu0 0.0
    %1665 = vmatprep.subr.mxu0 0.0
    %1666 = vmatpush1.msra.mxu0 0.0
    %1667 = vmatprep.subr.mxu0 0.0
    %1668 = vmatpush1.msra.mxu0 0.0
    %1669 = vmatprep.subr.mxu0 0.0
    %1670 = vmatpush1.msra.mxu0 0.0
    %1671 = vmatprep.subr.mxu0 0.0
    %1672 = vmatpush1.msra.mxu0 0.0
    %1673 = vmatprep.mubr.f32.mxu0 0.0
    %1674 = vmatmul.mubr.f32.gmra.mrb[0].mxu0 %v1607
    %v1675 = vpop.f32.mrb[0].mxu0
    %v1676 = vadd.f32 0.0, %v1675
    %v1677 = vpop.f32.mrb[0].mxu0
    %1678 = vdwg.mxu0
    %1679 = vmatprep.subr.mxu0 0.0
    %1680 = vmatpush1.msra.mxu0 %v558
    %1681 = vmatprep.subr.mxu0 0.0
    %1682 = vmatpush1.msra.mxu0 %v559
    %1683 = vmatprep.subr.mxu0 0.0
    %1684 = vmatpush1.msra.mxu0 %v560
    %1685 = vmatprep.subr.mxu0 0.0
    %1686 = vmatpush1.msra.mxu0 %v561
    %1687 = vmatprep.subr.mxu0 0.0
    %1688 = vmatpush1.msra.mxu0 %v562
    %1689 = vmatprep.subr.mxu0 0.0
    %1690 = vmatpush1.msra.mxu0 %v563
    %1691 = vmatprep.subr.mxu0 0.0
    %1692 = vmatpush1.msra.mxu0 %v564
    %1693 = vmatprep.subr.mxu0 0.0
    %1694 = vmatpush1.msra.mxu0 %v565
    %1695 = vmatprep.subr.mxu0 0.0
    %1696 = vmatpush1.msra.mxu0 0.0
    %1697 = vmatprep.subr.mxu0 0.0
    %1698 = vmatpush1.msra.mxu0 0.0
    %1699 = vmatprep.subr.mxu0 0.0
    %1700 = vmatpush1.msra.mxu0 0.0
    %1701 = vmatprep.subr.mxu0 0.0
    %1702 = vmatpush1.msra.mxu0 0.0
    %1703 = vmatprep.subr.mxu0 0.0
    %1704 = vmatpush1.msra.mxu0 0.0
    %1705 = vmatprep.subr.mxu0 0.0
    %1706 = vmatpush1.msra.mxu0 0.0
    %1707 = vmatprep.subr.mxu0 0.0
    %1708 = vmatpush1.msra.mxu0 0.0
    %1709 = vmatprep.subr.mxu0 0.0
    %1710 = vmatpush1.msra.mxu0 0.0
    %1711 = vmatprep.subr.mxu0 0.0
    %1712 = vmatpush1.msra.mxu0 0.0
    %1713 = vmatprep.subr.mxu0 0.0
    %1714 = vmatpush1.msra.mxu0 0.0
    %1715 = vmatprep.subr.mxu0 0.0
    %1716 = vmatpush1.msra.mxu0 0.0
    %1717 = vmatprep.subr.mxu0 0.0
    %1718 = vmatpush1.msra.mxu0 0.0
    %1719 = vmatprep.subr.mxu0 0.0
    %1720 = vmatpush1.msra.mxu0 0.0
    %1721 = vmatprep.subr.mxu0 0.0
    %1722 = vmatpush1.msra.mxu0 0.0
    %1723 = vmatprep.subr.mxu0 0.0
    %1724 = vmatpush1.msra.mxu0 0.0
    %1725 = vmatprep.subr.mxu0 0.0
    %1726 = vmatpush1.msra.mxu0 0.0
    %1727 = vmatprep.subr.mxu0 0.0
    %1728 = vmatpush1.msra.mxu0 0.0
    %1729 = vmatprep.subr.mxu0 0.0
    %1730 = vmatpush1.msra.mxu0 0.0
    %1731 = vmatprep.subr.mxu0 0.0
    %1732 = vmatpush1.msra.mxu0 0.0
    %1733 = vmatprep.subr.mxu0 0.0
    %1734 = vmatpush1.msra.mxu0 0.0
    %1735 = vmatprep.subr.mxu0 0.0
    %1736 = vmatpush1.msra.mxu0 0.0
    %1737 = vmatprep.subr.mxu0 0.0
    %1738 = vmatpush1.msra.mxu0 0.0
    %1739 = vmatprep.subr.mxu0 0.0
    %1740 = vmatpush1.msra.mxu0 0.0
    %1741 = vmatprep.subr.mxu0 0.0
    %1742 = vmatpush1.msra.mxu0 0.0
    %1743 = vmatprep.mubr.f32.mxu0 0.0
    %1744 = vmatmul.mubr.f32.gmra.mrb[0].mxu0 %v1607
    %v1745 = vpop.f32.mrb[0].mxu0
    %v1746 = vadd.f32 0.0, %v1745
    %v1747 = vpop.f32.mrb[0].mxu0
    %1748 = vdwg.mxu0
    %1749 = vmatprep.subr.mxu0 0.0
    %1750 = vmatpush1.msra.mxu0 %v567
    %1751 = vmatprep.subr.mxu0 0.0
    %1752 = vmatpush1.msra.mxu0 %v568
    %1753 = vmatprep.subr.mxu0 0.0
    %1754 = vmatpush1.msra.mxu0 %v569
    %1755 = vmatprep.subr.mxu0 0.0
    %1756 = vmatpush1.msra.mxu0 %v570
    %1757 = vmatprep.subr.mxu0 0.0
    %1758 = vmatpush1.msra.mxu0 %v571
    %1759 = vmatprep.subr.mxu0 0.0
    %1760 = vmatpush1.msra.mxu0 %v572
    %1761 = vmatprep.subr.mxu0 0.0
    %1762 = vmatpush1.msra.mxu0 %v573
    %1763 = vmatprep.subr.mxu0 0.0
    %1764 = vmatpush1.msra.mxu0 %v574
    %1765 = vmatprep.subr.mxu0 0.0
    %1766 = vmatpush1.msra.mxu0 0.0
    %1767 = vmatprep.subr.mxu0 0.0
    %1768 = vmatpush1.msra.mxu0 0.0
    %1769 = vmatprep.subr.mxu0 0.0
    %1770 = vmatpush1.msra.mxu0 0.0
    %1771 = vmatprep.subr.mxu0 0.0
    %1772 = vmatpush1.msra.mxu0 0.0
    %1773 = vmatprep.subr.mxu0 0.0
    %1774 = vmatpush1.msra.mxu0 0.0
    %1775 = vmatprep.subr.mxu0 0.0
    %1776 = vmatpush1.msra.mxu0 0.0
    %1777 = vmatprep.subr.mxu0 0.0
    %1778 = vmatpush1.msra.mxu0 0.0
    %1779 = vmatprep.subr.mxu0 0.0
    %1780 = vmatpush1.msra.mxu0 0.0
    %1781 = vmatprep.subr.mxu0 0.0
    %1782 = vmatpush1.msra.mxu0 0.0
    %1783 = vmatprep.subr.mxu0 0.0
    %1784 = vmatpush1.msra.mxu0 0.0
    %1785 = vmatprep.subr.mxu0 0.0
    %1786 = vmatpush1.msra.mxu0 0.0
    %1787 = vmatprep.subr.mxu0 0.0
    %1788 = vmatpush1.msra.mxu0 0.0
    %1789 = vmatprep.subr.mxu0 0.0
    %1790 = vmatpush1.msra.mxu0 0.0
    %1791 = vmatprep.subr.mxu0 0.0
    %1792 = vmatpush1.msra.mxu0 0.0
    %1793 = vmatprep.subr.mxu0 0.0
    %1794 = vmatpush1.msra.mxu0 0.0
    %1795 = vmatprep.subr.mxu0 0.0
    %1796 = vmatpush1.msra.mxu0 0.0
    %1797 = vmatprep.subr.mxu0 0.0
    %1798 = vmatpush1.msra.mxu0 0.0
    %1799 = vmatprep.subr.mxu0 0.0
    %1800 = vmatpush1.msra.mxu0 0.0
    %1801 = vmatprep.subr.mxu0 0.0
    %1802 = vmatpush1.msra.mxu0 0.0
    %1803 = vmatprep.subr.mxu0 0.0
    %1804 = vmatpush1.msra.mxu0 0.0
    %1805 = vmatprep.subr.mxu0 0.0
    %1806 = vmatpush1.msra.mxu0 0.0
    %1807 = vmatprep.subr.mxu0 0.0
    %1808 = vmatpush1.msra.mxu0 0.0
    %1809 = vmatprep.subr.mxu0 0.0
    %1810 = vmatpush1.msra.mxu0 0.0
    %1811 = vmatprep.subr.mxu0 0.0
    %1812 = vmatpush1.msra.mxu0 0.0
    %1813 = vmatprep.mubr.f32.mxu0 0.0
    %1814 = vmatmul.mubr.f32.gmra.mrb[0].mxu0 %v1607
    %v1815 = vpop.f32.mrb[0].mxu0
    %v1816 = vadd.f32 %v575, %v1815
    %v1817 = vpop.f32.mrb[0].mxu0
    %1818 = vdwg.mxu0
    %v1820 = vrot.slane %v1676, 4
    %v1822 = vadd.f32 %v591, %v1820
    %v1823 = vxor.u32 %v1822, 2147483648
    %v1824 = vmul.f32 %v1823, 1.442695
    %v1825 = vpow.pop %v1824
    %v1826 = vadd.f32 %v1825, 1.0
    %v1827 = vrcp.pop %v1826
    %v1828 = vmul.f32 1.0, %v1827
    %v1830 = vrot.slane %v1746, 4
    %v1832 = vadd.f32 %v598, %v1830
    %v1833 = vxor.u32 %v1832, 2147483648
    %v1834 = vmul.f32 %v1833, 1.442695
    %v1835 = vpow.pop %v1834
    %v1836 = vadd.f32 %v1835, 1.0
    %v1837 = vrcp.pop %v1836
    %v1838 = vmul.f32 1.0, %v1837
    %v1840 = vrot.slane %v1816, 4
    %v1842 = vmul.f32 %v1828, %v1840
    %v1843 = vadd.f32 %v602, %v1842
    %v1844 = vtanh.pop %v1843
    %v1845 = vsub.f32 1.0, %v1838
    %v1846 = vmul.f32 %v1845, %v1844
    %v1847 = vrot.slane %v1604, 7
    %v1849 = vmul.f32 %v1838, %v1847
    %v1850 = vadd.f32 %v1846, %v1849
    %v1852 = vrot.slane %v1850, 4
    %v1853 = vsel %vm603, %v1852, 0
    %1855 = vmatprep.subr.mxu0 0.0
    %1856 = vmatpush1.msra.mxu0 %v549
    %1857 = vmatprep.subr.mxu0 0.0
    %1858 = vmatpush1.msra.mxu0 %v550
    %1859 = vmatprep.subr.mxu0 0.0
    %1860 = vmatpush1.msra.mxu0 %v551
    %1861 = vmatprep.subr.mxu0 0.0
    %1862 = vmatpush1.msra.mxu0 %v552
    %1863 = vmatprep.subr.mxu0 0.0
    %1864 = vmatpush1.msra.mxu0 %v553
    %1865 = vmatprep.subr.mxu0 0.0
    %1866 = vmatpush1.msra.mxu0 %v554
    %1867 = vmatprep.subr.mxu0 0.0
    %1868 = vmatpush1.msra.mxu0 %v555
    %1869 = vmatprep.subr.mxu0 0.0
    %1870 = vmatpush1.msra.mxu0 %v556
    %1871 = vmatprep.subr.mxu0 0.0
    %1872 = vmatpush1.msra.mxu0 0.0
    %1873 = vmatprep.subr.mxu0 0.0
    %1874 = vmatpush1.msra.mxu0 0.0
    %1875 = vmatprep.subr.mxu0 0.0
    %1876 = vmatpush1.msra.mxu0 0.0
    %1877 = vmatprep.subr.mxu0 0.0
    %1878 = vmatpush1.msra.mxu0 0.0
    %1879 = vmatprep.subr.mxu0 0.0
    %1880 = vmatpush1.msra.mxu0 0.0
    %1881 = vmatprep.subr.mxu0 0.0
    %1882 = vmatpush1.msra.mxu0 0.0
    %1883 = vmatprep.subr.mxu0 0.0
    %1884 = vmatpush1.msra.mxu0 0.0
    %1885 = vmatprep.subr.mxu0 0.0
    %1886 = vmatpush1.msra.mxu0 0.0
    %1887 = vmatprep.subr.mxu0 0.0
    %1888 = vmatpush1.msra.mxu0 0.0
    %1889 = vmatprep.subr.mxu0 0.0
    %1890 = vmatpush1.msra.mxu0 0.0
    %1891 = vmatprep.subr.mxu0 0.0
    %1892 = vmatpush1.msra.mxu0 0.0
    %1893 = vmatprep.subr.mxu0 0.0
    %1894 = vmatpush1.msra.mxu0 0.0
    %1895 = vmatprep.subr.mxu0 0.0
    %1896 = vmatpush1.msra.mxu0 0.0
    %1897 = vmatprep.subr.mxu0 0.0
    %1898 = vmatpush1.msra.mxu0 0.0
    %1899 = vmatprep.subr.mxu0 0.0
    %1900 = vmatpush1.msra.mxu0 0.0
    %1901 = vmatprep.subr.mxu0 0.0
    %1902 = vmatpush1.msra.mxu0 0.0
    %1903 = vmatprep.subr.mxu0 0.0
    %1904 = vmatpush1.msra.mxu0 0.0
    %1905 = vmatprep.subr.mxu0 0.0
    %1906 = vmatpush1.msra.mxu0 0.0
    %1907 = vmatprep.subr.mxu0 0.0
    %1908 = vmatpush1.msra.mxu0 0.0
    %1909 = vmatprep.subr.mxu0 0.0
    %1910 = vmatpush1.msra.mxu0 0.0
    %1911 = vmatprep.subr.mxu0 0.0
    %1912 = vmatpush1.msra.mxu0 0.0
    %1913 = vmatprep.subr.mxu0 0.0
    %1914 = vmatpush1.msra.mxu0 0.0
    %1915 = vmatprep.subr.mxu0 0.0
    %1916 = vmatpush1.msra.mxu0 0.0
    %1917 = vmatprep.subr.mxu0 0.0
    %1918 = vmatpush1.msra.mxu0 0.0
    %1919 = vmatprep.mubr.f32.mxu0 0.0
    %1920 = vmatmul.mubr.f32.gmra.mrb[0].mxu0 %v1853
    %v1921 = vpop.f32.mrb[0].mxu0
    %v1922 = vadd.f32 0.0, %v1921
    %v1923 = vpop.f32.mrb[0].mxu0
    %1924 = vdwg.mxu0
    %1925 = vmatprep.subr.mxu0 0.0
    %1926 = vmatpush1.msra.mxu0 %v558
    %1927 = vmatprep.subr.mxu0 0.0
    %1928 = vmatpush1.msra.mxu0 %v559
    %1929 = vmatprep.subr.mxu0 0.0
    %1930 = vmatpush1.msra.mxu0 %v560
    %1931 = vmatprep.subr.mxu0 0.0
    %1932 = vmatpush1.msra.mxu0 %v561
    %1933 = vmatprep.subr.mxu0 0.0
    %1934 = vmatpush1.msra.mxu0 %v562
    %1935 = vmatprep.subr.mxu0 0.0
    %1936 = vmatpush1.msra.mxu0 %v563
    %1937 = vmatprep.subr.mxu0 0.0
    %1938 = vmatpush1.msra.mxu0 %v564
    %1939 = vmatprep.subr.mxu0 0.0
    %1940 = vmatpush1.msra.mxu0 %v565
    %1941 = vmatprep.subr.mxu0 0.0
    %1942 = vmatpush1.msra.mxu0 0.0
    %1943 = vmatprep.subr.mxu0 0.0
    %1944 = vmatpush1.msra.mxu0 0.0
    %1945 = vmatprep.subr.mxu0 0.0
    %1946 = vmatpush1.msra.mxu0 0.0
    %1947 = vmatprep.subr.mxu0 0.0
    %1948 = vmatpush1.msra.mxu0 0.0
    %1949 = vmatprep.subr.mxu0 0.0
    %1950 = vmatpush1.msra.mxu0 0.0
    %1951 = vmatprep.subr.mxu0 0.0
    %1952 = vmatpush1.msra.mxu0 0.0
    %1953 = vmatprep.subr.mxu0 0.0
    %1954 = vmatpush1.msra.mxu0 0.0
    %1955 = vmatprep.subr.mxu0 0.0
    %1956 = vmatpush1.msra.mxu0 0.0
    %1957 = vmatprep.subr.mxu0 0.0
    %1958 = vmatpush1.msra.mxu0 0.0
    %1959 = vmatprep.subr.mxu0 0.0
    %1960 = vmatpush1.msra.mxu0 0.0
    %1961 = vmatprep.subr.mxu0 0.0
    %1962 = vmatpush1.msra.mxu0 0.0
    %1963 = vmatprep.subr.mxu0 0.0
    %1964 = vmatpush1.msra.mxu0 0.0
    %1965 = vmatprep.subr.mxu0 0.0
    %1966 = vmatpush1.msra.mxu0 0.0
    %1967 = vmatprep.subr.mxu0 0.0
    %1968 = vmatpush1.msra.mxu0 0.0
    %1969 = vmatprep.subr.mxu0 0.0
    %1970 = vmatpush1.msra.mxu0 0.0
    %1971 = vmatprep.subr.mxu0 0.0
    %1972 = vmatpush1.msra.mxu0 0.0
    %1973 = vmatprep.subr.mxu0 0.0
    %1974 = vmatpush1.msra.mxu0 0.0
    %1975 = vmatprep.subr.mxu0 0.0
    %1976 = vmatpush1.msra.mxu0 0.0
    %1977 = vmatprep.subr.mxu0 0.0
    %1978 = vmatpush1.msra.mxu0 0.0
    %1979 = vmatprep.subr.mxu0 0.0
    %1980 = vmatpush1.msra.mxu0 0.0
    %1981 = vmatprep.subr.mxu0 0.0
    %1982 = vmatpush1.msra.mxu0 0.0
    %1983 = vmatprep.subr.mxu0 0.0
    %1984 = vmatpush1.msra.mxu0 0.0
    %1985 = vmatprep.subr.mxu0 0.0
    %1986 = vmatpush1.msra.mxu0 0.0
    %1987 = vmatprep.subr.mxu0 0.0
    %1988 = vmatpush1.msra.mxu0 0.0
    %1989 = vmatprep.mubr.f32.mxu0 0.0
    %1990 = vmatmul.mubr.f32.gmra.mrb[0].mxu0 %v1853
    %v1991 = vpop.f32.mrb[0].mxu0
    %v1992 = vadd.f32 0.0, %v1991
    %v1993 = vpop.f32.mrb[0].mxu0
    %1994 = vdwg.mxu0
    %1995 = vmatprep.subr.mxu0 0.0
    %1996 = vmatpush1.msra.mxu0 %v567
    %1997 = vmatprep.subr.mxu0 0.0
    %1998 = vmatpush1.msra.mxu0 %v568
    %1999 = vmatprep.subr.mxu0 0.0
    %2000 = vmatpush1.msra.mxu0 %v569
    %2001 = vmatprep.subr.mxu0 0.0
    %2002 = vmatpush1.msra.mxu0 %v570
    %2003 = vmatprep.subr.mxu0 0.0
    %2004 = vmatpush1.msra.mxu0 %v571
    %2005 = vmatprep.subr.mxu0 0.0
    %2006 = vmatpush1.msra.mxu0 %v572
    %2007 = vmatprep.subr.mxu0 0.0
    %2008 = vmatpush1.msra.mxu0 %v573
    %2009 = vmatprep.subr.mxu0 0.0
    %2010 = vmatpush1.msra.mxu0 %v574
    %2011 = vmatprep.subr.mxu0 0.0
    %2012 = vmatpush1.msra.mxu0 0.0
    %2013 = vmatprep.subr.mxu0 0.0
    %2014 = vmatpush1.msra.mxu0 0.0
    %2015 = vmatprep.subr.mxu0 0.0
    %2016 = vmatpush1.msra.mxu0 0.0
    %2017 = vmatprep.subr.mxu0 0.0
    %2018 = vmatpush1.msra.mxu0 0.0
    %2019 = vmatprep.subr.mxu0 0.0
    %2020 = vmatpush1.msra.mxu0 0.0
    %2021 = vmatprep.subr.mxu0 0.0
    %2022 = vmatpush1.msra.mxu0 0.0
    %2023 = vmatprep.subr.mxu0 0.0
    %2024 = vmatpush1.msra.mxu0 0.0
    %2025 = vmatprep.subr.mxu0 0.0
    %2026 = vmatpush1.msra.mxu0 0.0
    %2027 = vmatprep.subr.mxu0 0.0
    %2028 = vmatpush1.msra.mxu0 0.0
    %2029 = vmatprep.subr.mxu0 0.0
    %2030 = vmatpush1.msra.mxu0 0.0
    %2031 = vmatprep.subr.mxu0 0.0
    %2032 = vmatpush1.msra.mxu0 0.0
    %2033 = vmatprep.subr.mxu0 0.0
    %2034 = vmatpush1.msra.mxu0 0.0
    %2035 = vmatprep.subr.mxu0 0.0
    %2036 = vmatpush1.msra.mxu0 0.0
    %2037 = vmatprep.subr.mxu0 0.0
    %2038 = vmatpush1.msra.mxu0 0.0
    %2039 = vmatprep.subr.mxu0 0.0
    %2040 = vmatpush1.msra.mxu0 0.0
    %2041 = vmatprep.subr.mxu0 0.0
    %2042 = vmatpush1.msra.mxu0 0.0
    %2043 = vmatprep.subr.mxu0 0.0
    %2044 = vmatpush1.msra.mxu0 0.0
    %2045 = vmatprep.subr.mxu0 0.0
    %2046 = vmatpush1.msra.mxu0 0.0
    %2047 = vmatprep.subr.mxu0 0.0
    %2048 = vmatpush1.msra.mxu0 0.0
    %2049 = vmatprep.subr.mxu0 0.0
    %2050 = vmatpush1.msra.mxu0 0.0
    %2051 = vmatprep.subr.mxu0 0.0
    %2052 = vmatpush1.msra.mxu0 0.0
    %2053 = vmatprep.subr.mxu0 0.0
    %2054 = vmatpush1.msra.mxu0 0.0
    %2055 = vmatprep.subr.mxu0 0.0
    %2056 = vmatpush1.msra.mxu0 0.0
    %2057 = vmatprep.subr.mxu0 0.0
    %2058 = vmatpush1.msra.mxu0 0.0
    %2059 = vmatprep.mubr.f32.mxu0 0.0
    %2060 = vmatmul.mubr.f32.gmra.mrb[0].mxu0 %v1853
    %v2061 = vpop.f32.mrb[0].mxu0
    %v2062 = vadd.f32 %v575, %v2061
    %v2063 = vpop.f32.mrb[0].mxu0
    %2064 = vdwg.mxu0
    %v2066 = vrot.slane %v1922, 3
    %v2068 = vadd.f32 %v840, %v2066
    %v2069 = vxor.u32 %v2068, 2147483648
    %v2070 = vmul.f32 %v2069, 1.442695
    %v2071 = vpow.pop %v2070
    %v2072 = vadd.f32 %v2071, 1.0
    %v2073 = vrcp.pop %v2072
    %v2074 = vmul.f32 1.0, %v2073
    %v2076 = vrot.slane %v1992, 3
    %v2078 = vadd.f32 %v844, %v2076
    %v2079 = vxor.u32 %v2078, 2147483648
    %v2080 = vmul.f32 %v2079, 1.442695
    %v2081 = vpow.pop %v2080
    %v2082 = vadd.f32 %v2081, 1.0
    %v2083 = vrcp.pop %v2082
    %v2084 = vmul.f32 1.0, %v2083
    %v2086 = vrot.slane %v2062, 3
    %v2088 = vmul.f32 %v2074, %v2086
    %v2089 = vadd.f32 %v847, %v2088
    %v2090 = vtanh.pop %v2089
    %v2091 = vsub.f32 1.0, %v2084
    %v2092 = vmul.f32 %v2091, %v2090
    %v2093 = vrot.slane %v1850, 7
    %v2095 = vmul.f32 %v2084, %v2093
    %v2096 = vadd.f32 %v2092, %v2095
    %v2098 = vrot.slane %v2096, 5
    %v2099 = vsel %vm603, %v2098, 0
    %2101 = vmatprep.subr.mxu0 0.0
    %2102 = vmatpush1.msra.mxu0 %v549
    %2103 = vmatprep.subr.mxu0 0.0
    %2104 = vmatpush1.msra.mxu0 %v550
    %2105 = vmatprep.subr.mxu0 0.0
    %2106 = vmatpush1.msra.mxu0 %v551
    %2107 = vmatprep.subr.mxu0 0.0
    %2108 = vmatpush1.msra.mxu0 %v552
    %2109 = vmatprep.subr.mxu0 0.0
    %2110 = vmatpush1.msra.mxu0 %v553
    %2111 = vmatprep.subr.mxu0 0.0
    %2112 = vmatpush1.msra.mxu0 %v554
    %2113 = vmatprep.subr.mxu0 0.0
    %2114 = vmatpush1.msra.mxu0 %v555
    %2115 = vmatprep.subr.mxu0 0.0
    %2116 = vmatpush1.msra.mxu0 %v556
    %2117 = vmatprep.subr.mxu0 0.0
    %2118 = vmatpush1.msra.mxu0 0.0
    %2119 = vmatprep.subr.mxu0 0.0
    %2120 = vmatpush1.msra.mxu0 0.0
    %2121 = vmatprep.subr.mxu0 0.0
    %2122 = vmatpush1.msra.mxu0 0.0
    %2123 = vmatprep.subr.mxu0 0.0
    %2124 = vmatpush1.msra.mxu0 0.0
    %2125 = vmatprep.subr.mxu0 0.0
    %2126 = vmatpush1.msra.mxu0 0.0
    %2127 = vmatprep.subr.mxu0 0.0
    %2128 = vmatpush1.msra.mxu0 0.0
    %2129 = vmatprep.subr.mxu0 0.0
    %2130 = vmatpush1.msra.mxu0 0.0
    %2131 = vmatprep.subr.mxu0 0.0
    %2132 = vmatpush1.msra.mxu0 0.0
    %2133 = vmatprep.subr.mxu0 0.0
    %2134 = vmatpush1.msra.mxu0 0.0
    %2135 = vmatprep.subr.mxu0 0.0
    %2136 = vmatpush1.msra.mxu0 0.0
    %2137 = vmatprep.subr.mxu0 0.0
    %2138 = vmatpush1.msra.mxu0 0.0
    %2139 = vmatprep.subr.mxu0 0.0
    %2140 = vmatpush1.msra.mxu0 0.0
    %2141 = vmatprep.subr.mxu0 0.0
    %2142 = vmatpush1.msra.mxu0 0.0
    %2143 = vmatprep.subr.mxu0 0.0
    %2144 = vmatpush1.msra.mxu0 0.0
    %2145 = vmatprep.subr.mxu0 0.0
    %2146 = vmatpush1.msra.mxu0 0.0
    %2147 = vmatprep.subr.mxu0 0.0
    %2148 = vmatpush1.msra.mxu0 0.0
    %2149 = vmatprep.subr.mxu0 0.0
    %2150 = vmatpush1.msra.mxu0 0.0
    %2151 = vmatprep.subr.mxu0 0.0
    %2152 = vmatpush1.msra.mxu0 0.0
    %2153 = vmatprep.subr.mxu0 0.0
    %2154 = vmatpush1.msra.mxu0 0.0
    %2155 = vmatprep.subr.mxu0 0.0
    %2156 = vmatpush1.msra.mxu0 0.0
    %2157 = vmatprep.subr.mxu0 0.0
    %2158 = vmatpush1.msra.mxu0 0.0
    %2159 = vmatprep.subr.mxu0 0.0
    %2160 = vmatpush1.msra.mxu0 0.0
    %2161 = vmatprep.subr.mxu0 0.0
    %2162 = vmatpush1.msra.mxu0 0.0
    %2163 = vmatprep.subr.mxu0 0.0
    %2164 = vmatpush1.msra.mxu0 0.0
    %2165 = vmatprep.mubr.f32.mxu0 0.0
    %2166 = vmatmul.mubr.f32.gmra.mrb[0].mxu0 %v2099
    %v2167 = vpop.f32.mrb[0].mxu0
    %v2168 = vadd.f32 0.0, %v2167
    %v2169 = vpop.f32.mrb[0].mxu0
    %2170 = vdwg.mxu0
    %2171 = vmatprep.subr.mxu0 0.0
    %2172 = vmatpush1.msra.mxu0 %v558
    %2173 = vmatprep.subr.mxu0 0.0
    %2174 = vmatpush1.msra.mxu0 %v559
    %2175 = vmatprep.subr.mxu0 0.0
    %2176 = vmatpush1.msra.mxu0 %v560
    %2177 = vmatprep.subr.mxu0 0.0
    %2178 = vmatpush1.msra.mxu0 %v561
    %2179 = vmatprep.subr.mxu0 0.0
    %2180 = vmatpush1.msra.mxu0 %v562
    %2181 = vmatprep.subr.mxu0 0.0
    %2182 = vmatpush1.msra.mxu0 %v563
    %2183 = vmatprep.subr.mxu0 0.0
    %2184 = vmatpush1.msra.mxu0 %v564
    %2185 = vmatprep.subr.mxu0 0.0
    %2186 = vmatpush1.msra.mxu0 %v565
    %2187 = vmatprep.subr.mxu0 0.0
    %2188 = vmatpush1.msra.mxu0 0.0
    %2189 = vmatprep.subr.mxu0 0.0
    %2190 = vmatpush1.msra.mxu0 0.0
    %2191 = vmatprep.subr.mxu0 0.0
    %2192 = vmatpush1.msra.mxu0 0.0
    %2193 = vmatprep.subr.mxu0 0.0
    %2194 = vmatpush1.msra.mxu0 0.0
    %2195 = vmatprep.subr.mxu0 0.0
    %2196 = vmatpush1.msra.mxu0 0.0
    %2197 = vmatprep.subr.mxu0 0.0
    %2198 = vmatpush1.msra.mxu0 0.0
    %2199 = vmatprep.subr.mxu0 0.0
    %2200 = vmatpush1.msra.mxu0 0.0
    %2201 = vmatprep.subr.mxu0 0.0
    %2202 = vmatpush1.msra.mxu0 0.0
    %2203 = vmatprep.subr.mxu0 0.0
    %2204 = vmatpush1.msra.mxu0 0.0
    %2205 = vmatprep.subr.mxu0 0.0
    %2206 = vmatpush1.msra.mxu0 0.0
    %2207 = vmatprep.subr.mxu0 0.0
    %2208 = vmatpush1.msra.mxu0 0.0
    %2209 = vmatprep.subr.mxu0 0.0
    %2210 = vmatpush1.msra.mxu0 0.0
    %2211 = vmatprep.subr.mxu0 0.0
    %2212 = vmatpush1.msra.mxu0 0.0
    %2213 = vmatprep.subr.mxu0 0.0
    %2214 = vmatpush1.msra.mxu0 0.0
    %2215 = vmatprep.subr.mxu0 0.0
    %2216 = vmatpush1.msra.mxu0 0.0
    %2217 = vmatprep.subr.mxu0 0.0
    %2218 = vmatpush1.msra.mxu0 0.0
    %2219 = vmatprep.subr.mxu0 0.0
    %2220 = vmatpush1.msra.mxu0 0.0
    %2221 = vmatprep.subr.mxu0 0.0
    %2222 = vmatpush1.msra.mxu0 0.0
    %2223 = vmatprep.subr.mxu0 0.0
    %2224 = vmatpush1.msra.mxu0 0.0
    %2225 = vmatprep.subr.mxu0 0.0
    %2226 = vmatpush1.msra.mxu0 0.0
    %2227 = vmatprep.subr.mxu0 0.0
    %2228 = vmatpush1.msra.mxu0 0.0
    %2229 = vmatprep.subr.mxu0 0.0
    %2230 = vmatpush1.msra.mxu0 0.0
    %2231 = vmatprep.subr.mxu0 0.0
    %2232 = vmatpush1.msra.mxu0 0.0
    %2233 = vmatprep.subr.mxu0 0.0
    %2234 = vmatpush1.msra.mxu0 0.0
    %2235 = vmatprep.mubr.f32.mxu0 0.0
    %2236 = vmatmul.mubr.f32.gmra.mrb[0].mxu0 %v2099
    %v2237 = vpop.f32.mrb[0].mxu0
    %v2238 = vadd.f32 0.0, %v2237
    %v2239 = vpop.f32.mrb[0].mxu0
    %2240 = vdwg.mxu0
    %2241 = vmatprep.subr.mxu0 0.0
    %2242 = vmatpush1.msra.mxu0 %v567
    %2243 = vmatprep.subr.mxu0 0.0
    %2244 = vmatpush1.msra.mxu0 %v568
    %2245 = vmatprep.subr.mxu0 0.0
    %2246 = vmatpush1.msra.mxu0 %v569
    %2247 = vmatprep.subr.mxu0 0.0
    %2248 = vmatpush1.msra.mxu0 %v570
    %2249 = vmatprep.subr.mxu0 0.0
    %2250 = vmatpush1.msra.mxu0 %v571
    %2251 = vmatprep.subr.mxu0 0.0
    %2252 = vmatpush1.msra.mxu0 %v572
    %2253 = vmatprep.subr.mxu0 0.0
    %2254 = vmatpush1.msra.mxu0 %v573
    %2255 = vmatprep.subr.mxu0 0.0
    %2256 = vmatpush1.msra.mxu0 %v574
    %2257 = vmatprep.subr.mxu0 0.0
    %2258 = vmatpush1.msra.mxu0 0.0
    %2259 = vmatprep.subr.mxu0 0.0
    %2260 = vmatpush1.msra.mxu0 0.0
    %2261 = vmatprep.subr.mxu0 0.0
    %2262 = vmatpush1.msra.mxu0 0.0
    %2263 = vmatprep.subr.mxu0 0.0
    %2264 = vmatpush1.msra.mxu0 0.0
    %2265 = vmatprep.subr.mxu0 0.0
    %2266 = vmatpush1.msra.mxu0 0.0
    %2267 = vmatprep.subr.mxu0 0.0
    %2268 = vmatpush1.msra.mxu0 0.0
    %2269 = vmatprep.subr.mxu0 0.0
    %2270 = vmatpush1.msra.mxu0 0.0
    %2271 = vmatprep.subr.mxu0 0.0
    %2272 = vmatpush1.msra.mxu0 0.0
    %2273 = vmatprep.subr.mxu0 0.0
    %2274 = vmatpush1.msra.mxu0 0.0
    %2275 = vmatprep.subr.mxu0 0.0
    %2276 = vmatpush1.msra.mxu0 0.0
    %2277 = vmatprep.subr.mxu0 0.0
    %2278 = vmatpush1.msra.mxu0 0.0
    %2279 = vmatprep.subr.mxu0 0.0
    %2280 = vmatpush1.msra.mxu0 0.0
    %2281 = vmatprep.subr.mxu0 0.0
    %2282 = vmatpush1.msra.mxu0 0.0
    %2283 = vmatprep.subr.mxu0 0.0
    %2284 = vmatpush1.msra.mxu0 0.0
    %2285 = vmatprep.subr.mxu0 0.0
    %2286 = vmatpush1.msra.mxu0 0.0
    %2287 = vmatprep.subr.mxu0 0.0
    %2288 = vmatpush1.msra.mxu0 0.0
    %2289 = vmatprep.subr.mxu0 0.0
    %2290 = vmatpush1.msra.mxu0 0.0
    %2291 = vmatprep.subr.mxu0 0.0
    %2292 = vmatpush1.msra.mxu0 0.0
    %2293 = vmatprep.subr.mxu0 0.0
    %2294 = vmatpush1.msra.mxu0 0.0
    %2295 = vmatprep.subr.mxu0 0.0
    %2296 = vmatpush1.msra.mxu0 0.0
    %2297 = vmatprep.subr.mxu0 0.0
    %2298 = vmatpush1.msra.mxu0 0.0
    %2299 = vmatprep.subr.mxu0 0.0
    %2300 = vmatpush1.msra.mxu0 0.0
    %2301 = vmatprep.subr.mxu0 0.0
    %2302 = vmatpush1.msra.mxu0 0.0
    %2303 = vmatprep.subr.mxu0 0.0
    %2304 = vmatpush1.msra.mxu0 0.0
    %2305 = vmatprep.mubr.f32.mxu0 0.0
    %2306 = vmatmul.mubr.f32.gmra.mrb[0].mxu0 %v2099
    %v2307 = vpop.f32.mrb[0].mxu0
    %v2308 = vadd.f32 %v575, %v2307
    %v2309 = vpop.f32.mrb[0].mxu0
    %2310 = vdwg.mxu0
    %v2312 = vrot.slane %v2168, 2
    %v2314 = vadd.f32 %v1095, %v2312
    %v2315 = vxor.u32 %v2314, 2147483648
    %v2316 = vmul.f32 %v2315, 1.442695
    %v2317 = vpow.pop %v2316
    %v2318 = vadd.f32 %v2317, 1.0
    %v2319 = vrcp.pop %v2318
    %v2320 = vmul.f32 1.0, %v2319
    %v2322 = vrot.slane %v2238, 2
    %v2324 = vadd.f32 %v1099, %v2322
    %v2325 = vxor.u32 %v2324, 2147483648
    %v2326 = vmul.f32 %v2325, 1.442695
    %v2327 = vpow.pop %v2326
    %v2328 = vadd.f32 %v2327, 1.0
    %v2329 = vrcp.pop %v2328
    %v2330 = vmul.f32 1.0, %v2329
    %v2332 = vrot.slane %v2308, 2
    %v2334 = vmul.f32 %v2320, %v2332
    %v2335 = vadd.f32 %v1102, %v2334
    %v2336 = vtanh.pop %v2335
    %v2337 = vsub.f32 1.0, %v2330
    %v2338 = vmul.f32 %v2337, %v2336
    %v2339 = vrot.slane %v2096, 7
    %v2341 = vmul.f32 %v2330, %v2339
    %v2342 = vadd.f32 %v2338, %v2341
    %v2344 = vrot.slane %v2342, 6
    %v2345 = vsel %vm603, %v2344, 0
    %2347 = vmatprep.subr.mxu0 0.0
    %2348 = vmatpush1.msra.mxu0 %v549
    %2349 = vmatprep.subr.mxu0 0.0
    %2350 = vmatpush1.msra.mxu0 %v550
    %2351 = vmatprep.subr.mxu0 0.0
    %2352 = vmatpush1.msra.mxu0 %v551
    %2353 = vmatprep.subr.mxu0 0.0
    %2354 = vmatpush1.msra.mxu0 %v552
    %2355 = vmatprep.subr.mxu0 0.0
    %2356 = vmatpush1.msra.mxu0 %v553
    %2357 = vmatprep.subr.mxu0 0.0
    %2358 = vmatpush1.msra.mxu0 %v554
    %2359 = vmatprep.subr.mxu0 0.0
    %2360 = vmatpush1.msra.mxu0 %v555
    %2361 = vmatprep.subr.mxu0 0.0
    %2362 = vmatpush1.msra.mxu0 %v556
    %2363 = vmatprep.subr.mxu0 0.0
    %2364 = vmatpush1.msra.mxu0 0.0
    %2365 = vmatprep.subr.mxu0 0.0
    %2366 = vmatpush1.msra.mxu0 0.0
    %2367 = vmatprep.subr.mxu0 0.0
    %2368 = vmatpush1.msra.mxu0 0.0
    %2369 = vmatprep.subr.mxu0 0.0
    %2370 = vmatpush1.msra.mxu0 0.0
    %2371 = vmatprep.subr.mxu0 0.0
    %2372 = vmatpush1.msra.mxu0 0.0
    %2373 = vmatprep.subr.mxu0 0.0
    %2374 = vmatpush1.msra.mxu0 0.0
    %2375 = vmatprep.subr.mxu0 0.0
    %2376 = vmatpush1.msra.mxu0 0.0
    %2377 = vmatprep.subr.mxu0 0.0
    %2378 = vmatpush1.msra.mxu0 0.0
    %2379 = vmatprep.subr.mxu0 0.0
    %2380 = vmatpush1.msra.mxu0 0.0
    %2381 = vmatprep.subr.mxu0 0.0
    %2382 = vmatpush1.msra.mxu0 0.0
    %2383 = vmatprep.subr.mxu0 0.0
    %2384 = vmatpush1.msra.mxu0 0.0
    %2385 = vmatprep.subr.mxu0 0.0
    %2386 = vmatpush1.msra.mxu0 0.0
    %2387 = vmatprep.subr.mxu0 0.0
    %2388 = vmatpush1.msra.mxu0 0.0
    %2389 = vmatprep.subr.mxu0 0.0
    %2390 = vmatpush1.msra.mxu0 0.0
    %2391 = vmatprep.subr.mxu0 0.0
    %2392 = vmatpush1.msra.mxu0 0.0
    %2393 = vmatprep.subr.mxu0 0.0
    %2394 = vmatpush1.msra.mxu0 0.0
    %2395 = vmatprep.subr.mxu0 0.0
    %2396 = vmatpush1.msra.mxu0 0.0
    %2397 = vmatprep.subr.mxu0 0.0
    %2398 = vmatpush1.msra.mxu0 0.0
    %2399 = vmatprep.subr.mxu0 0.0
    %2400 = vmatpush1.msra.mxu0 0.0
    %2401 = vmatprep.subr.mxu0 0.0
    %2402 = vmatpush1.msra.mxu0 0.0
    %2403 = vmatprep.subr.mxu0 0.0
    %2404 = vmatpush1.msra.mxu0 0.0
    %2405 = vmatprep.subr.mxu0 0.0
    %2406 = vmatpush1.msra.mxu0 0.0
    %2407 = vmatprep.subr.mxu0 0.0
    %2408 = vmatpush1.msra.mxu0 0.0
    %2409 = vmatprep.subr.mxu0 0.0
    %2410 = vmatpush1.msra.mxu0 0.0
    %2411 = vmatprep.mubr.f32.mxu0 0.0
    %2412 = vmatmul.mubr.f32.gmra.mrb[0].mxu0 %v2345
    %v2413 = vpop.f32.mrb[0].mxu0
    %v2414 = vadd.f32 0.0, %v2413
    %v2415 = vpop.f32.mrb[0].mxu0
    %2416 = vdwg.mxu0
    %2417 = vmatprep.subr.mxu0 0.0
    %2418 = vmatpush1.msra.mxu0 %v558
    %2419 = vmatprep.subr.mxu0 0.0
    %2420 = vmatpush1.msra.mxu0 %v559
    %2421 = vmatprep.subr.mxu0 0.0
    %2422 = vmatpush1.msra.mxu0 %v560
    %2423 = vmatprep.subr.mxu0 0.0
    %2424 = vmatpush1.msra.mxu0 %v561
    %2425 = vmatprep.subr.mxu0 0.0
    %2426 = vmatpush1.msra.mxu0 %v562
    %2427 = vmatprep.subr.mxu0 0.0
    %2428 = vmatpush1.msra.mxu0 %v563
    %2429 = vmatprep.subr.mxu0 0.0
    %2430 = vmatpush1.msra.mxu0 %v564
    %2431 = vmatprep.subr.mxu0 0.0
    %2432 = vmatpush1.msra.mxu0 %v565
    %2433 = vmatprep.subr.mxu0 0.0
    %2434 = vmatpush1.msra.mxu0 0.0
    %2435 = vmatprep.subr.mxu0 0.0
    %2436 = vmatpush1.msra.mxu0 0.0
    %2437 = vmatprep.subr.mxu0 0.0
    %2438 = vmatpush1.msra.mxu0 0.0
    %2439 = vmatprep.subr.mxu0 0.0
    %2440 = vmatpush1.msra.mxu0 0.0
    %2441 = vmatprep.subr.mxu0 0.0
    %2442 = vmatpush1.msra.mxu0 0.0
    %2443 = vmatprep.subr.mxu0 0.0
    %2444 = vmatpush1.msra.mxu0 0.0
    %2445 = vmatprep.subr.mxu0 0.0
    %2446 = vmatpush1.msra.mxu0 0.0
    %2447 = vmatprep.subr.mxu0 0.0
    %2448 = vmatpush1.msra.mxu0 0.0
    %2449 = vmatprep.subr.mxu0 0.0
    %2450 = vmatpush1.msra.mxu0 0.0
    %2451 = vmatprep.subr.mxu0 0.0
    %2452 = vmatpush1.msra.mxu0 0.0
    %2453 = vmatprep.subr.mxu0 0.0
    %2454 = vmatpush1.msra.mxu0 0.0
    %2455 = vmatprep.subr.mxu0 0.0
    %2456 = vmatpush1.msra.mxu0 0.0
    %2457 = vmatprep.subr.mxu0 0.0
    %2458 = vmatpush1.msra.mxu0 0.0
    %2459 = vmatprep.subr.mxu0 0.0
    %2460 = vmatpush1.msra.mxu0 0.0
    %2461 = vmatprep.subr.mxu0 0.0
    %2462 = vmatpush1.msra.mxu0 0.0
    %2463 = vmatprep.subr.mxu0 0.0
    %2464 = vmatpush1.msra.mxu0 0.0
    %2465 = vmatprep.subr.mxu0 0.0
    %2466 = vmatpush1.msra.mxu0 0.0
    %2467 = vmatprep.subr.mxu0 0.0
    %2468 = vmatpush1.msra.mxu0 0.0
    %2469 = vmatprep.subr.mxu0 0.0
    %2470 = vmatpush1.msra.mxu0 0.0
    %2471 = vmatprep.subr.mxu0 0.0
    %2472 = vmatpush1.msra.mxu0 0.0
    %2473 = vmatprep.subr.mxu0 0.0
    %2474 = vmatpush1.msra.mxu0 0.0
    %2475 = vmatprep.subr.mxu0 0.0
    %2476 = vmatpush1.msra.mxu0 0.0
    %2477 = vmatprep.subr.mxu0 0.0
    %2478 = vmatpush1.msra.mxu0 0.0
    %2479 = vmatprep.subr.mxu0 0.0
    %2480 = vmatpush1.msra.mxu0 0.0
    %2481 = vmatprep.mubr.f32.mxu0 0.0
    %2482 = vmatmul.mubr.f32.gmra.mrb[0].mxu0 %v2345
    %v2483 = vpop.f32.mrb[0].mxu0
    %v2484 = vadd.f32 0.0, %v2483
    %v2485 = vpop.f32.mrb[0].mxu0
    %2486 = vdwg.mxu0
    %2487 = vmatprep.subr.mxu0 0.0
    %2488 = vmatpush1.msra.mxu0 %v567
    %2489 = vmatprep.subr.mxu0 0.0
    %2490 = vmatpush1.msra.mxu0 %v568
    %2491 = vmatprep.subr.mxu0 0.0
    %2492 = vmatpush1.msra.mxu0 %v569
    %2493 = vmatprep.subr.mxu0 0.0
    %2494 = vmatpush1.msra.mxu0 %v570
    %2495 = vmatprep.subr.mxu0 0.0
    %2496 = vmatpush1.msra.mxu0 %v571
    %2497 = vmatprep.subr.mxu0 0.0
    %2498 = vmatpush1.msra.mxu0 %v572
    %2499 = vmatprep.subr.mxu0 0.0
    %2500 = vmatpush1.msra.mxu0 %v573
    %2501 = vmatprep.subr.mxu0 0.0
    %2502 = vmatpush1.msra.mxu0 %v574
    %2503 = vmatprep.subr.mxu0 0.0
    %2504 = vmatpush1.msra.mxu0 0.0
    %2505 = vmatprep.subr.mxu0 0.0
    %2506 = vmatpush1.msra.mxu0 0.0
    %2507 = vmatprep.subr.mxu0 0.0
    %2508 = vmatpush1.msra.mxu0 0.0
    %2509 = vmatprep.subr.mxu0 0.0
    %2510 = vmatpush1.msra.mxu0 0.0
    %2511 = vmatprep.subr.mxu0 0.0
    %2512 = vmatpush1.msra.mxu0 0.0
    %2513 = vmatprep.subr.mxu0 0.0
    %2514 = vmatpush1.msra.mxu0 0.0
    %2515 = vmatprep.subr.mxu0 0.0
    %2516 = vmatpush1.msra.mxu0 0.0
    %2517 = vmatprep.subr.mxu0 0.0
    %2518 = vmatpush1.msra.mxu0 0.0
    %2519 = vmatprep.subr.mxu0 0.0
    %2520 = vmatpush1.msra.mxu0 0.0
    %2521 = vmatprep.subr.mxu0 0.0
    %2522 = vmatpush1.msra.mxu0 0.0
    %2523 = vmatprep.subr.mxu0 0.0
    %2524 = vmatpush1.msra.mxu0 0.0
    %2525 = vmatprep.subr.mxu0 0.0
    %2526 = vmatpush1.msra.mxu0 0.0
    %2527 = vmatprep.subr.mxu0 0.0
    %2528 = vmatpush1.msra.mxu0 0.0
    %2529 = vmatprep.subr.mxu0 0.0
    %2530 = vmatpush1.msra.mxu0 0.0
    %2531 = vmatprep.subr.mxu0 0.0
    %2532 = vmatpush1.msra.mxu0 0.0
    %2533 = vmatprep.subr.mxu0 0.0
    %2534 = vmatpush1.msra.mxu0 0.0
    %2535 = vmatprep.subr.mxu0 0.0
    %2536 = vmatpush1.msra.mxu0 0.0
    %2537 = vmatprep.subr.mxu0 0.0
    %2538 = vmatpush1.msra.mxu0 0.0
    %2539 = vmatprep.subr.mxu0 0.0
    %2540 = vmatpush1.msra.mxu0 0.0
    %2541 = vmatprep.subr.mxu0 0.0
    %2542 = vmatpush1.msra.mxu0 0.0
    %2543 = vmatprep.subr.mxu0 0.0
    %2544 = vmatpush1.msra.mxu0 0.0
    %2545 = vmatprep.subr.mxu0 0.0
    %2546 = vmatpush1.msra.mxu0 0.0
    %2547 = vmatprep.subr.mxu0 0.0
    %2548 = vmatpush1.msra.mxu0 0.0
    %2549 = vmatprep.subr.mxu0 0.0
    %2550 = vmatpush1.msra.mxu0 0.0
    %2551 = vmatprep.mubr.f32.mxu0 0.0
    %2552 = vmatmul.mubr.f32.gmra.mrb[0].mxu0 %v2345
    %v2553 = vpop.f32.mrb[0].mxu0
    %v2554 = vadd.f32 %v575, %v2553
    %v2555 = vpop.f32.mrb[0].mxu0
    %2556 = vdwg.mxu0
    %v2558 = vrot.slane %v2414, 1
    %v2560 = vadd.f32 %v1351, %v2558
    %v2561 = vxor.u32 %v2560, 2147483648
    %v2562 = vmul.f32 %v2561, 1.442695
    %v2563 = vpow.pop %v2562
    %v2564 = vadd.f32 %v2563, 1.0
    %v2565 = vrcp.pop %v2564
    %v2566 = vmul.f32 1.0, %v2565
    %v2568 = vrot.slane %v2484, 1
    %v2570 = vadd.f32 %v1355, %v2568
    %v2571 = vxor.u32 %v2570, 2147483648
    %v2572 = vmul.f32 %v2571, 1.442695
    %v2573 = vpow.pop %v2572
    %v2574 = vadd.f32 %v2573, 1.0
    %v2575 = vrcp.pop %v2574
    %v2576 = vmul.f32 1.0, %v2575
    %v2578 = vrot.slane %v2554, 1
    %v2580 = vmul.f32 %v2566, %v2578
    %v2581 = vadd.f32 %v1358, %v2580
    %v2582 = vtanh.pop %v2581
    %v2583 = vsub.f32 1.0, %v2576
    %v2584 = vmul.f32 %v2583, %v2582
    %v2585 = vrot.slane %v2342, 7
    %v2587 = vmul.f32 %v2576, %v2585
    %v2588 = vadd.f32 %v2584, %v2587
    %v2590 = vrot.slane %v2588, 7
    %v2592 = vsel %vm474, %v837, %v2590
    %v2593 = vrot.slane %v2342, 5
    %v2595 = vsel %vm474, %v1092, %v2593
    %v2596 = vrot.slane %v2096, 3
    %v2598 = vsel %vm474, %v1348, %v2596
    %v2599 = vrot.slane %v1850, 1
    %v2601 = vsel %vm474, %v1604, %v2599
    %v2602 = vsel %vm474, %v1850, %v1847
    %v2603 = vrot.slane %v1348, 5
    %v2605 = vsel %vm474, %v2096, %v2603
    %v2606 = vrot.slane %v1092, 3
    %v2608 = vsel %vm474, %v2342, %v2606
    %v2609 = vrot.slane %v837, 1
    %v2611 = vsel %vm474, %v2588, %v2609
    %vm2612 = vcmask 1040384
    %v2613 = vsel %vm2612, %v2592, %v2595
    %vm2614 = vcmask 1041408
    %v2615 = vsel %vm2614, %v2613, %v2598
    %vm2616 = vcmask 1042432
    %v2617 = vsel %vm2616, %v2615, %v2601
    %vm2618 = vcmask 1043456
    %v2619 = vsel %vm2618, %v2617, %v2602
    %vm2620 = vcmask 1044480
    %v2621 = vsel %vm2620, %v2619, %v2605
    %vm2622 = vcmask 1045504
    %v2623 = vsel %vm2622, %v2621, %v2608
    %vm2624 = vcmask 1046528
    %v2625 = vsel %vm2624, %v2623, %v2611
    %2626 = vst.msk [vmem:[#allocation9] sm:$0xff] %vm603, %v2625
    %vm2627 = vcmask 261127
    %2628 = vst.msk [vmem:[#allocation10 - $0x7] sm:$0x80] %vm2627, %v2588
    %2629 = vrot.lane.b32.xlu0 %v2588, 96
    %v2630 = vpop.permute.xlu0 %2629
    %s2632 = scalar_lea.vmem [#allocation10], 1
    %2633 = vst.msk [vmem:[%s2632 - $0x7] sm:$0x80] %vm2627, %v2630
    // Predicated region
    $region266: #{encoder_forward.1} parent=1 // pred_check
      _
    $region267: #{encoder_forward.1} parent=1 // pred_check_branch
      %2635 = sbr.rel (0) target = $region269
    $region268: #{encoder_forward.1} parent=1 // pred_region
      %s2637 = ssub.s32 128, 128
      %2638 = vsyncadd [#allocation8], %s2637
      %s2640 = sshll.u32 [#allocation9], 4
      %s2641 = int_to_ptr.vmem [resolvable:$true] %s2640
      %2643 = dma.vmem_to_hbm [thread:$0]  %s2641, 128, %s7, [#allocation8]
    $region269: #{encoder_forward.1} parent=1 // pred_fallthru
      _
    // Predicated region
    $region270: #{encoder_forward.1} parent=1 // pred_check
      _
    $region271: #{encoder_forward.1} parent=1 // pred_check_branch
      %2645 = sbr.rel (0) target = $region273
    $region272: #{encoder_forward.1} parent=1 // pred_region
      %s2647 = ssub.s32 32, 32
      %2648 = vsyncadd [#allocation11], %s2647
      %s2649 = sshll.u32 [#allocation10], 4
      %s2650 = int_to_ptr.vmem [resolvable:$true] %s2649
      %2655 = dma.vmem_to_hbm [thread:$0]  %s2650, 32, %s8, [#allocation11], 16, 16, 1
    $region273: #{encoder_forward.1} parent=1 // pred_fallthru
      _
    // Predicated region
    $region274: #{encoder_forward.1} parent=1 // pred_check
      _
    $region275: #{encoder_forward.1} parent=1 // pred_check_branch
      %2657 = sbr.rel (0) target = $region277
    $region276: #{encoder_forward.1} parent=1 // pred_region
      %2658 = dma.done [#allocation8], 128
    $region277: #{encoder_forward.1} parent=1 // pred_fallthru
      _
    // Predicated region
    $region278: #{encoder_forward.1} parent=1 // pred_check
      _
    $region279: #{encoder_forward.1} parent=1 // pred_check_branch
      %2660 = sbr.rel (0) target = $region281
    $region280: #{encoder_forward.1} parent=1 // pred_region
      %2661 = dma.done [#allocation11], 32
    $region281: #{encoder_forward.1} parent=1 // pred_fallthru
      _
    %2662 = vsyncpa [#allocation7], 1
    %2663 = vsyncpa [#allocation8], 1
    %2664 = vsyncpa [#allocation11], 1
  %2665 = vsyncmov [#allocation3]
  %s2666 = vpop.sfrf %2665
  %p2667 = scmp.eq.s32.totalorder %s2666, 0
  %p2668 = pneg %p2667
  %2670 = shalt.err (%p2668)
  %s2671 = scalar_lea.sflag [#allocation3], 1
  %2672 = vsyncmov %s2671
  %s2673 = vpop.sfrf %2672
  %p2674 = scmp.eq.s32.totalorder %s2673, 0
  %p2675 = pneg %p2674
  %2677 = shalt.err (%p2675)
  %s2678 = scalar_lea.sflag [#allocation3], 2
  %2679 = vsyncmov %s2678
  %s2680 = vpop.sfrf %2679
  %p2681 = scmp.eq.s32.totalorder %s2680, 0
  %p2682 = pneg %p2681
  %2684 = shalt.err (%p2682)
  %s2685 = scalar_lea.sflag [#allocation3], 3
  %2686 = vsyncmov %s2685
  %s2687 = vpop.sfrf %2686
  %p2688 = scmp.eq.s32.totalorder %s2687, 0
  %p2689 = pneg %p2688
  %2691 = shalt.err (%p2689)
  %s2692 = scalar_lea.sflag [#allocation3], 4
  %2693 = vsyncmov %s2692
  %s2694 = vpop.sfrf %2693
  %p2695 = scmp.eq.s32.totalorder %s2694, 0
  %p2696 = pneg %p2695
  %2698 = shalt.err (%p2696)
  %s2699 = scalar_lea.sflag [#allocation3], 5
  %2700 = vsyncmov %s2699
  %s2701 = vpop.sfrf %2700
  %p2702 = scmp.eq.s32.totalorder %s2701, 0
  %p2703 = pneg %p2702
  %2705 = shalt.err (%p2703)
  %s2706 = scalar_lea.sflag [#allocation3], 6
  %2707 = vsyncmov %s2706
  %s2708 = vpop.sfrf %2707
  %p2709 = scmp.eq.s32.totalorder %s2708, 0
  %p2710 = pneg %p2709
  %2712 = shalt.err (%p2710)
  %s2713 = scalar_lea.sflag [#allocation3], 7
  %2714 = vsyncmov %s2713
  %s2715 = vpop.sfrf %2714
  %p2716 = scmp.eq.s32.totalorder %s2715, 0
  %p2717 = pneg %p2716
  %2719 = shalt.err (%p2717)

</llo_original>
